<compile_context>
chip_gen: v5e
topology: v5e:2x2
jax: 0.10.0
libtpu: 0.0.40
codegen_flags: <defaults>
</compile_context>

<pallas_src>
import functools

import numpy as np
import jax
import jax.numpy as jnp
from jax import lax
from jax.experimental import pallas as pl
from jax.experimental.pallas import tpu as pltpu

LEAKY_SLOPE = 0.01   # nn.LeakyReLU() default negative_slope
BN_EPS = 1e-5        # nn.BatchNorm2d default eps

# Input spatial size implied by the module: 3 MaxPool(2) stages + final 8x4 map.
H0, W0 = 64, 32


# ----------------------------- the fused kernel ------------------------------

def _pitch_kernel(x_ref,
                  sb1, cb1, sb2, cb2, sb3, cb3, sb4, cb4,
                  s1, s2, s3, sel4,
                  w1, fb1, w2, fb2, w3, fb3, w4, fb4,
                  o_ref,
                  *, batch, heights, chans):
    N = batch
    H1, H2, H3, H4 = heights            # 64, 32, 16, 8 (per-sample heights)
    C1, C2, C3, _C4 = chans             # conv output channels

    def leaky(v):
        return jnp.where(v >= 0.0, v, LEAKY_SLOPE * v)

    def conv_block(p, sb_ref, b_ref, H):
        """3x3 'same' conv + folded BN + LeakyReLU on the row-flattened layout.

        p: (R, K) f32 value (rows = (sample, y), lanes = (x, cin)).
        sb_ref[t] is the banded bf16 weight matrix for kernel row t (dy = t-1);
        the x-taps, BN scale and (layers 2-4) the previous pool's x-compaction
        are folded in at trace time, so the conv is just 3 MXU matmuls.
        Row shifts use cyclic sublane rolls; the wrap rows are zeroed by the
        per-sample boundary mask (H is a power of two)."""
        R, K = p.shape
        row = lax.broadcasted_iota(jnp.int32, (R, K), 0)
        y_in = jnp.bitwise_and(row, H - 1)                 # y inside each sample
        up = jnp.where(y_in >= 1, pltpu.roll(p, 1, axis=0), 0.0)        # row y-1
        dn = jnp.where(y_in <= H - 2, pltpu.roll(p, R - 1, axis=0), 0.0)  # row y+1
        acc = jnp.dot(up.astype(jnp.bfloat16), sb_ref[0],
                      preferred_element_type=jnp.float32)
        acc = acc + jnp.dot(p.astype(jnp.bfloat16), sb_ref[1],
                            preferred_element_type=jnp.float32)
        acc = acc + jnp.dot(dn.astype(jnp.bfloat16), sb_ref[2],
                            preferred_element_type=jnp.float32)
        return leaky(acc + b_ref[...])

    def pool(a, s_ref, C):
        """Fused MaxPool2d(2,2).  x-max: lane roll by C (valid at even x-chunks,
        which are the only ones the next conv's banded weights read).  y-max:
        sublane roll by 1 (valid at even rows).  y-compaction (keep even rows):
        exact 0/1 selection matmul on the MXU — no strided reads anywhere."""
        R, L = a.shape
        xmax = jnp.maximum(a, pltpu.roll(a, L - C, axis=1))
        ymax = jnp.maximum(xmax, pltpu.roll(xmax, R - 1, axis=0))
        return jnp.dot(s_ref[...], ymax.astype(jnp.bfloat16),
                       preferred_element_type=jnp.float32)

    # conv1 + pool1
    a1 = conv_block(x_ref[...], sb1, cb1, H1)
    p2 = pool(a1, s1, C1)
    # conv2 + pool2
    a2 = conv_block(p2, sb2, cb2, H2)
    p3 = pool(a2, s2, C2)
    # conv3 + pool3
    a3 = conv_block(p3, sb3, cb3, H3)
    p4 = pool(a3, s3, C3)
    # conv4 (no pool)
    a4 = conv_block(p4, sb4, cb4, H4)                       # (N*8, 4*C4)

    # fc1: PyTorch's NCHW flatten order is absorbed into the per-row-group fc1
    # weights (built at trace time).  Rows for each y are extracted with exact
    # 0/1 selection matmuls (f32, exact) and summed over the H4 row groups.
    F1 = fb1.shape[1]
    h = jnp.zeros((N, F1), jnp.float32)
    for yy in range(H4):
        rows = jnp.dot(sel4[yy], a4, preferred_element_type=jnp.float32)  # (N, W4*C4)
        h = h + jnp.dot(rows, w1[yy], preferred_element_type=jnp.float32)
    h = leaky(h + fb1[...])
    # TODO(synk): Dropout(p=0.5) has no inference-time effect; implemented as identity.
    h = leaky(jnp.dot(h, w2[...], preferred_element_type=jnp.float32) + fb2[...])
    h = leaky(jnp.dot(h, w3[...], preferred_element_type=jnp.float32) + fb3[...])
    o_ref[...] = jnp.dot(h, w4[...], preferred_element_type=jnp.float32) + fb4[...]


# ----------------------------- trace-time weight prep ------------------------

def _banded_conv_weights(conv_w, scale, W, pool_folded):
    """Build (3, K, P) bf16 banded matrices mapping row-flattened input lanes
    (x, cin) to output lanes (x, cout) for each kernel row dy.  BN scale is
    folded into the columns; if pool_folded, the row index uses the pre-x-pool
    lane layout (2W chunks; only even chunks carry weight, so the un-compacted
    odd-chunk lanes of the pooled input are ignored)."""
    Cout, Cin, KH, KW = conv_w.shape
    w = jnp.transpose(conv_w, (2, 3, 1, 0)) * scale.reshape(1, 1, 1, Cout)  # (ky,kx,ci,co)
    step = 2 if pool_folded else 1
    Win = step * W
    place = np.zeros((KW, Win, W), np.float32)
    for kx in range(KW):
        for xo in range(W):
            xi = xo + kx - 1
            if 0 <= xi < W:
                place[kx, step * xi, xo] = 1.0
    place = jnp.asarray(place)
    mats = []
    for ky in range(KH):
        b = jnp.einsum("kio,kcd->icod", place, w[ky])        # (Win, Cin, W, Cout)
        mats.append(b.reshape(Win * Cin, W * Cout))
    return jnp.stack(mats).astype(jnp.bfloat16)


def prepare_params(params):
    """One-time preprocessing: fold BN into banded conv weights, fold the pool
    x-compaction and the NCHW flatten order into the weight matrices, and
    pre-transpose the fc weights."""
    nf = params["num_filters"]
    H = [H0, H0 // 2, H0 // 4, H0 // 8]
    W = [W0, W0 // 2, W0 // 4, W0 // 8]
    prep = {}
    for i in range(4):
        s = params[f"bn{i+1}_gamma"] / jnp.sqrt(params[f"bn{i+1}_var"] + BN_EPS)
        b_eff = params[f"bn{i+1}_beta"] + (params[f"conv{i+1}_b"] - params[f"bn{i+1}_mean"]) * s
        prep[f"sb{i+1}"] = _banded_conv_weights(params[f"conv{i+1}_w"], s, W[i],
                                                pool_folded=(i > 0))
        prep[f"cb{i+1}"] = jnp.tile(b_eff, W[i]).reshape(1, W[i] * nf[i]).astype(jnp.float32)
    C4, H4, W4 = nf[3], H[3], W[3]
    w1 = params["fc1_w"]                      # (512, C4*H4*W4), cols = c*H4*W4 + y*W4 + x
    F1 = w1.shape[0]
    prep["w1"] = jnp.transpose(w1.reshape(F1, C4, H4, W4),
                               (2, 3, 1, 0)).reshape(H4, W4 * C4, F1).astype(jnp.float32)
    prep["fb1"] = params["fc1_b"].reshape(1, -1).astype(jnp.float32)
    prep["w2"] = jnp.transpose(params["fc2_w"]).astype(jnp.float32)
    prep["fb2"] = params["fc2_b"].reshape(1, -1).astype(jnp.float32)
    prep["w3"] = jnp.transpose(params["fc3_w"]).astype(jnp.float32)
    prep["fb3"] = params["fc3_b"].reshape(1, -1).astype(jnp.float32)
    prep["w4"] = jnp.transpose(params["fc4_w"]).astype(jnp.float32)      # (128, 1)
    prep["fb4"] = params["fc4_b"].reshape(1, 1).astype(jnp.float32)
    return prep


# ----------------------------- forward wrapper --------------------------------

@jax.jit
def pitch_classifier_forward(x_nchw, prep):
    """Pallas implementation of PitchClassifier.forward (inference mode)."""
    N, _, Himg, Wimg = x_nchw.shape
    H = [Himg, Himg // 2, Himg // 4, Himg // 8]
    W = [Wimg, Wimg // 2, Wimg // 4, Wimg // 8]
    assert all(h > 0 and (h & (h - 1)) == 0 for h in H), "heights must be powers of two"
    C = [prep[f"cb{i+1}"].shape[1] // W[i] for i in range(4)]
    R = [N * h for h in H]
    H4 = H[3]

    # NCHW (Cin=1) -> row-flattened (N*H, W) layout.
    x2d = x_nchw.reshape(N * Himg, Wimg)

    # Exact 0/1 selection matrices (trace-time constants).
    def sel_even_rows(Rfull):
        S = np.zeros((Rfull // 2, Rfull), np.float32)
        S[np.arange(Rfull // 2), 2 * np.arange(Rfull // 2)] = 1.0
        return jnp.asarray(S, jnp.bfloat16)

    s1, s2, s3 = sel_even_rows(R[0]), sel_even_rows(R[1]), sel_even_rows(R[2])
    sel4_np = np.zeros((H4, N, R[3]), np.float32)
    for y in range(H4):
        sel4_np[y, np.arange(N), np.arange(N) * H4 + y] = 1.0
    sel4 = jnp.asarray(sel4_np)

    kernel = functools.partial(_pitch_kernel, batch=N, heights=tuple(H), chans=tuple(C))
    vmem = pltpu.MemorySpace.VMEM
    n_in = 21
    return pl.pallas_call(
        kernel,
        out_shape=jax.ShapeDtypeStruct((N, 1), jnp.float32),
        in_specs=[pl.BlockSpec(memory_space=vmem)] * n_in,
        out_specs=pl.BlockSpec(memory_space=vmem),
    )(x2d,
      prep["sb1"], prep["cb1"], prep["sb2"], prep["cb2"],
      prep["sb3"], prep["cb3"], prep["sb4"], prep["cb4"],
      s1, s2, s3, sel4,
      prep["w1"], prep["fb1"], prep["w2"], prep["fb2"],
      prep["w3"], prep["fb3"], prep["w4"], prep["fb4"])


# ----------------------------- reference (plain JAX) -------------------------

def reference_forward(x_nchw, params):
    x = jnp.transpose(x_nchw, (0, 2, 3, 1))
    for i in range(4):
        w_hwio = jnp.transpose(params[f"conv{i+1}_w"], (2, 3, 1, 0))
        y = lax.conv_general_dilated(x, w_hwio, (1, 1), "SAME",
                                     dimension_numbers=("NHWC", "HWIO", "NHWC"),
                                     precision=lax.Precision.HIGHEST)
        y = y + params[f"conv{i+1}_b"]
        g, bt = params[f"bn{i+1}_gamma"], params[f"bn{i+1}_beta"]
        mu, var = params[f"bn{i+1}_mean"], params[f"bn{i+1}_var"]
        y = (y - mu) / jnp.sqrt(var + BN_EPS) * g + bt
        y = jnp.where(y >= 0.0, y, LEAKY_SLOPE * y)
        if i < 3:
            y = lax.reduce_window(y, -jnp.inf, lax.max,
                                  (1, 2, 2, 1), (1, 2, 2, 1), "VALID")
        x = y
    N = x.shape[0]
    nf3 = params["num_filters"][3]
    h = jnp.transpose(x, (0, 3, 1, 2)).reshape(N, nf3 * 8 * 4)
    for i, act in ((1, True), (2, True), (3, True), (4, False)):
        h = jnp.dot(h, params[f"fc{i}_w"].T,
                    precision=lax.Precision.HIGHEST) + params[f"fc{i}_b"]
        if act:
            h = jnp.where(h >= 0.0, h, LEAKY_SLOPE * h)
    return h


# ----------------------------- params -----------------------------------------

def init_params(key, num_filters):
    nf = list(num_filters)
    params = {"num_filters": nf}
    cins = [1, nf[0], nf[1], nf[2]]
    keys = iter(jax.random.split(key, 32))
    for i in range(4):
        cin, cout = cins[i], nf[i]
        params[f"conv{i+1}_w"] = 0.2 * jax.random.normal(next(keys), (cout, cin, 3, 3), jnp.float32)
        params[f"conv{i+1}_b"] = 0.1 * jax.random.normal(next(keys), (cout,), jnp.float32)
        params[f"bn{i+1}_gamma"] = 1.0 + 0.1 * jax.random.normal(next(keys), (cout,), jnp.float32)
        params[f"bn{i+1}_beta"] = 0.1 * jax.random.normal(next(keys), (cout,), jnp.float32)
        params[f"bn{i+1}_mean"] = 0.1 * jax.random.normal(next(keys), (cout,), jnp.float32)
        params[f"bn{i+1}_var"] = jax.random.uniform(next(keys), (cout,), jnp.float32, 0.5, 1.5)
    fc_dims = [(nf[3] * 8 * 4, 512), (512, 256), (256, 128), (128, 1)]
    for i, (din, dout) in enumerate(fc_dims):
        params[f"fc{i+1}_w"] = (0.5 / np.sqrt(din)) * jax.random.normal(next(keys), (dout, din), jnp.float32)
        params[f"fc{i+1}_b"] = 0.05 * jax.random.normal(next(keys), (dout,), jnp.float32)
    return params


# ----------------------------- main -------------------------------------------

if __name__ == "__main__":
    num_filters = [8, 16, 16, 32]
    key = jax.random.PRNGKey(0)
    kx, kp = jax.random.split(key)
    x = jax.random.normal(kx, (2, 1, H0, W0), jnp.float32)   # NCHW like PyTorch
    params = init_params(kp, num_filters)
    prep = prepare_params(params)

    out = jax.block_until_ready(pitch_classifier_forward(x, prep))
    ref = jax.block_until_ready(reference_forward(x, params))

    assert out.shape == (2, 1), out.shape
    np.testing.assert_allclose(np.asarray(out), np.asarray(ref), rtol=2e-2, atol=2e-2)
    print("KERNEL_OK")
</pallas_src>

<mosaic_0001>
module attributes {stable_mosaic.version = 11 : i64} {
  func.func @_pitch_kernel(%arg0: memref<128x32xf32, #tpu.memory_space<vmem>>, %arg1: memref<3x32x256xbf16, #tpu.memory_space<vmem>>, %arg2: memref<1x256xf32, #tpu.memory_space<vmem>>, %arg3: memref<3x256x256xbf16, #tpu.memory_space<vmem>>, %arg4: memref<1x256xf32, #tpu.memory_space<vmem>>, %arg5: memref<3x256x128xbf16, #tpu.memory_space<vmem>>, %arg6: memref<1x128xf32, #tpu.memory_space<vmem>>, %arg7: memref<3x128x128xbf16, #tpu.memory_space<vmem>>, %arg8: memref<1x128xf32, #tpu.memory_space<vmem>>, %arg9: memref<64x128xbf16, #tpu.memory_space<vmem>>, %arg10: memref<32x64xbf16, #tpu.memory_space<vmem>>, %arg11: memref<16x32xbf16, #tpu.memory_space<vmem>>, %arg12: memref<8x2x16xf32, #tpu.memory_space<vmem>>, %arg13: memref<8x128x512xf32, #tpu.memory_space<vmem>>, %arg14: memref<1x512xf32, #tpu.memory_space<vmem>>, %arg15: memref<512x256xf32, #tpu.memory_space<vmem>>, %arg16: memref<1x256xf32, #tpu.memory_space<vmem>>, %arg17: memref<256x128xf32, #tpu.memory_space<vmem>>, %arg18: memref<1x128xf32, #tpu.memory_space<vmem>>, %arg19: memref<128x1xf32, #tpu.memory_space<vmem>>, %arg20: memref<1x1xf32, #tpu.memory_space<vmem>>, %arg21: memref<2x1xf32, #tpu.memory_space<vmem>>) attributes {dimension_semantics = [], scalar_prefetch = 0 : i64, scratch_operands = 0 : i64, tpu.core_type = #tpu.core_type<tc>} {
    %c0 = arith.constant 0 : index
    %c0_0 = arith.constant 0 : index
    %0 = vector.load %arg0[%c0, %c0_0] : memref<128x32xf32, #tpu.memory_space<vmem>>, vector<128x32xf32>
    %1 = tpu.iota {dimensions = array<i32: 0>} : vector<128x32xi32>
    %c63_i32 = arith.constant 63 : i32
    %2 = vector.broadcast %c63_i32 : i32 to vector<128x32xi32>
    %3 = arith.andi %1, %2 : vector<128x32xi32>
    %c1_i32 = arith.constant 1 : i32
    %4 = vector.broadcast %c1_i32 : i32 to vector<128x32xi32>
    %5 = arith.cmpi sge, %3, %4 : vector<128x32xi32>
    %c1_i32_1 = arith.constant 1 : i32
    %6 = tpu.dynamic_rotate %0 by %c1_i32_1 dim 0 : vector<128x32xf32>, i32 -> vector<128x32xf32>
    %cst = arith.constant 0.000000e+00 : f32
    %7 = vector.broadcast %cst : f32 to vector<128x32xf32>
    %8 = arith.select %5, %6, %7 : vector<128x32xi1>, vector<128x32xf32>
    %c62_i32 = arith.constant 62 : i32
    %9 = vector.broadcast %c62_i32 : i32 to vector<128x32xi32>
    %10 = arith.cmpi sle, %3, %9 : vector<128x32xi32>
    %c127_i32 = arith.constant 127 : i32
    %11 = tpu.dynamic_rotate %0 by %c127_i32 dim 0 : vector<128x32xf32>, i32 -> vector<128x32xf32>
    %cst_2 = arith.constant 0.000000e+00 : f32
    %12 = vector.broadcast %cst_2 : f32 to vector<128x32xf32>
    %13 = arith.select %10, %11, %12 : vector<128x32xi1>, vector<128x32xf32>
    %14 = arith.truncf %8 : vector<128x32xf32> to vector<128x32xbf16>
    %c0_3 = arith.constant 0 : index
    %c0_4 = arith.constant 0 : index
    %c0_5 = arith.constant 0 : index
    %15 = vector.load %arg1[%c0_3, %c0_4, %c0_5] : memref<3x32x256xbf16, #tpu.memory_space<vmem>>, vector<1x32x256xbf16>
    %16 = vector.shape_cast %15 : vector<1x32x256xbf16> to vector<32x256xbf16>
    %cst_6 = arith.constant dense<0.000000e+00> : vector<128x256xf32>
    %17 = tpu.matmul %14, %16, %cst_6 {dimension_numbers = #tpu.dot_dimension_numbers<[1], [0], [0], [1], [0, 0, 1, 1], [], []>} : vector<128x32xbf16>, vector<32x256xbf16>, vector<128x256xf32> -> vector<128x256xf32>
    %18 = arith.truncf %0 : vector<128x32xf32> to vector<128x32xbf16>
    %c1 = arith.constant 1 : index
    %c0_7 = arith.constant 0 : index
    %c0_8 = arith.constant 0 : index
    %19 = vector.load %arg1[%c1, %c0_7, %c0_8] : memref<3x32x256xbf16, #tpu.memory_space<vmem>>, vector<1x32x256xbf16>
    %20 = vector.shape_cast %19 : vector<1x32x256xbf16> to vector<32x256xbf16>
    %cst_9 = arith.constant dense<0.000000e+00> : vector<128x256xf32>
    %21 = tpu.matmul %18, %20, %cst_9 {dimension_numbers = #tpu.dot_dimension_numbers<[1], [0], [0], [1], [0, 0, 1, 1], [], []>} : vector<128x32xbf16>, vector<32x256xbf16>, vector<128x256xf32> -> vector<128x256xf32>
    %22 = arith.addf %17, %21 : vector<128x256xf32>
    %23 = arith.truncf %13 : vector<128x32xf32> to vector<128x32xbf16>
    %c2 = arith.constant 2 : index
    %c0_10 = arith.constant 0 : index
    %c0_11 = arith.constant 0 : index
    %24 = vector.load %arg1[%c2, %c0_10, %c0_11] : memref<3x32x256xbf16, #tpu.memory_space<vmem>>, vector<1x32x256xbf16>
    %25 = vector.shape_cast %24 : vector<1x32x256xbf16> to vector<32x256xbf16>
    %cst_12 = arith.constant dense<0.000000e+00> : vector<128x256xf32>
    %26 = tpu.matmul %23, %25, %cst_12 {dimension_numbers = #tpu.dot_dimension_numbers<[1], [0], [0], [1], [0, 0, 1, 1], [], []>} : vector<128x32xbf16>, vector<32x256xbf16>, vector<128x256xf32> -> vector<128x256xf32>
    %27 = arith.addf %22, %26 : vector<128x256xf32>
    %c0_13 = arith.constant 0 : index
    %c0_14 = arith.constant 0 : index
    %28 = vector.load %arg2[%c0_13, %c0_14] : memref<1x256xf32, #tpu.memory_space<vmem>>, vector<1x256xf32>
    %29 = vector.broadcast %28 : vector<1x256xf32> to vector<128x256xf32>
    %30 = arith.addf %27, %29 : vector<128x256xf32>
    %cst_15 = arith.constant 0.000000e+00 : f32
    %31 = vector.broadcast %cst_15 : f32 to vector<128x256xf32>
    %32 = arith.cmpf oge, %30, %31 : vector<128x256xf32>
    %cst_16 = arith.constant 0.00999999977 : f32
    %33 = vector.broadcast %cst_16 : f32 to vector<128x256xf32>
    %34 = arith.mulf %33, %30 : vector<128x256xf32>
    %35 = arith.select %32, %30, %34 : vector<128x256xi1>, vector<128x256xf32>
    %c248_i32 = arith.constant 248 : i32
    %36 = tpu.dynamic_rotate %35 by %c248_i32 dim 1 : vector<128x256xf32>, i32 -> vector<128x256xf32>
    %37 = arith.maximumf %35, %36 : vector<128x256xf32>
    %c127_i32_17 = arith.constant 127 : i32
    %38 = tpu.dynamic_rotate %37 by %c127_i32_17 dim 0 : vector<128x256xf32>, i32 -> vector<128x256xf32>
    %39 = arith.maximumf %37, %38 : vector<128x256xf32>
    %c0_18 = arith.constant 0 : index
    %c0_19 = arith.constant 0 : index
    %40 = vector.load %arg9[%c0_18, %c0_19] : memref<64x128xbf16, #tpu.memory_space<vmem>>, vector<64x128xbf16>
    %41 = arith.truncf %39 : vector<128x256xf32> to vector<128x256xbf16>
    %cst_20 = arith.constant dense<0.000000e+00> : vector<64x256xf32>
    %42 = tpu.matmul %40, %41, %cst_20 {dimension_numbers = #tpu.dot_dimension_numbers<[1], [0], [0], [1], [0, 0, 1, 1], [], []>} : vector<64x128xbf16>, vector<128x256xbf16>, vector<64x256xf32> -> vector<64x256xf32>
    %43 = tpu.iota {dimensions = array<i32: 0>} : vector<64x256xi32>
    %c31_i32 = arith.constant 31 : i32
    %44 = vector.broadcast %c31_i32 : i32 to vector<64x256xi32>
    %45 = arith.andi %43, %44 : vector<64x256xi32>
    %c1_i32_21 = arith.constant 1 : i32
    %46 = vector.broadcast %c1_i32_21 : i32 to vector<64x256xi32>
    %47 = arith.cmpi sge, %45, %46 : vector<64x256xi32>
    %c1_i32_22 = arith.constant 1 : i32
    %48 = tpu.dynamic_rotate %42 by %c1_i32_22 dim 0 : vector<64x256xf32>, i32 -> vector<64x256xf32>
    %cst_23 = arith.constant 0.000000e+00 : f32
    %49 = vector.broadcast %cst_23 : f32 to vector<64x256xf32>
    %50 = arith.select %47, %48, %49 : vector<64x256xi1>, vector<64x256xf32>
    %c30_i32 = arith.constant 30 : i32
    %51 = vector.broadcast %c30_i32 : i32 to vector<64x256xi32>
    %52 = arith.cmpi sle, %45, %51 : vector<64x256xi32>
    %c63_i32_24 = arith.constant 63 : i32
    %53 = tpu.dynamic_rotate %42 by %c63_i32_24 dim 0 : vector<64x256xf32>, i32 -> vector<64x256xf32>
    %cst_25 = arith.constant 0.000000e+00 : f32
    %54 = vector.broadcast %cst_25 : f32 to vector<64x256xf32>
    %55 = arith.select %52, %53, %54 : vector<64x256xi1>, vector<64x256xf32>
    %56 = arith.truncf %50 : vector<64x256xf32> to vector<64x256xbf16>
    %c0_26 = arith.constant 0 : index
    %c0_27 = arith.constant 0 : index
    %c0_28 = arith.constant 0 : index
    %57 = vector.load %arg3[%c0_26, %c0_27, %c0_28] : memref<3x256x256xbf16, #tpu.memory_space<vmem>>, vector<1x256x256xbf16>
    %58 = vector.shape_cast %57 : vector<1x256x256xbf16> to vector<256x256xbf16>
    %cst_29 = arith.constant dense<0.000000e+00> : vector<64x256xf32>
    %59 = tpu.matmul %56, %58, %cst_29 {dimension_numbers = #tpu.dot_dimension_numbers<[1], [0], [0], [1], [0, 0, 1, 1], [], []>} : vector<64x256xbf16>, vector<256x256xbf16>, vector<64x256xf32> -> vector<64x256xf32>
    %60 = arith.truncf %42 : vector<64x256xf32> to vector<64x256xbf16>
    %c1_30 = arith.constant 1 : index
    %c0_31 = arith.constant 0 : index
    %c0_32 = arith.constant 0 : index
    %61 = vector.load %arg3[%c1_30, %c0_31, %c0_32] : memref<3x256x256xbf16, #tpu.memory_space<vmem>>, vector<1x256x256xbf16>
    %62 = vector.shape_cast %61 : vector<1x256x256xbf16> to vector<256x256xbf16>
    %cst_33 = arith.constant dense<0.000000e+00> : vector<64x256xf32>
    %63 = tpu.matmul %60, %62, %cst_33 {dimension_numbers = #tpu.dot_dimension_numbers<[1], [0], [0], [1], [0, 0, 1, 1], [], []>} : vector<64x256xbf16>, vector<256x256xbf16>, vector<64x256xf32> -> vector<64x256xf32>
    %64 = arith.addf %59, %63 : vector<64x256xf32>
    %65 = arith.truncf %55 : vector<64x256xf32> to vector<64x256xbf16>
    %c2_34 = arith.constant 2 : index
    %c0_35 = arith.constant 0 : index
    %c0_36 = arith.constant 0 : index
    %66 = vector.load %arg3[%c2_34, %c0_35, %c0_36] : memref<3x256x256xbf16, #tpu.memory_space<vmem>>, vector<1x256x256xbf16>
    %67 = vector.shape_cast %66 : vector<1x256x256xbf16> to vector<256x256xbf16>
    %cst_37 = arith.constant dense<0.000000e+00> : vector<64x256xf32>
    %68 = tpu.matmul %65, %67, %cst_37 {dimension_numbers = #tpu.dot_dimension_numbers<[1], [0], [0], [1], [0, 0, 1, 1], [], []>} : vector<64x256xbf16>, vector<256x256xbf16>, vector<64x256xf32> -> vector<64x256xf32>
    %69 = arith.addf %64, %68 : vector<64x256xf32>
    %c0_38 = arith.constant 0 : index
    %c0_39 = arith.constant 0 : index
    %70 = vector.load %arg4[%c0_38, %c0_39] : memref<1x256xf32, #tpu.memory_space<vmem>>, vector<1x256xf32>
    %71 = vector.broadcast %70 : vector<1x256xf32> to vector<64x256xf32>
    %72 = arith.addf %69, %71 : vector<64x256xf32>
    %cst_40 = arith.constant 0.000000e+00 : f32
    %73 = vector.broadcast %cst_40 : f32 to vector<64x256xf32>
    %74 = arith.cmpf oge, %72, %73 : vector<64x256xf32>
    %cst_41 = arith.constant 0.00999999977 : f32
    %75 = vector.broadcast %cst_41 : f32 to vector<64x256xf32>
    %76 = arith.mulf %75, %72 : vector<64x256xf32>
    %77 = arith.select %74, %72, %76 : vector<64x256xi1>, vector<64x256xf32>
    %c240_i32 = arith.constant 240 : i32
    %78 = tpu.dynamic_rotate %77 by %c240_i32 dim 1 : vector<64x256xf32>, i32 -> vector<64x256xf32>
    %79 = arith.maximumf %77, %78 : vector<64x256xf32>
    %c63_i32_42 = arith.constant 63 : i32
    %80 = tpu.dynamic_rotate %79 by %c63_i32_42 dim 0 : vector<64x256xf32>, i32 -> vector<64x256xf32>
    %81 = arith.maximumf %79, %80 : vector<64x256xf32>
    %c0_43 = arith.constant 0 : index
    %c0_44 = arith.constant 0 : index
    %82 = vector.load %arg10[%c0_43, %c0_44] : memref<32x64xbf16, #tpu.memory_space<vmem>>, vector<32x64xbf16>
    %83 = arith.truncf %81 : vector<64x256xf32> to vector<64x256xbf16>
    %cst_45 = arith.constant dense<0.000000e+00> : vector<32x256xf32>
    %84 = tpu.matmul %82, %83, %cst_45 {dimension_numbers = #tpu.dot_dimension_numbers<[1], [0], [0], [1], [0, 0, 1, 1], [], []>} : vector<32x64xbf16>, vector<64x256xbf16>, vector<32x256xf32> -> vector<32x256xf32>
    %85 = tpu.iota {dimensions = array<i32: 0>} : vector<32x256xi32>
    %c15_i32 = arith.constant 15 : i32
    %86 = vector.broadcast %c15_i32 : i32 to vector<32x256xi32>
    %87 = arith.andi %85, %86 : vector<32x256xi32>
    %c1_i32_46 = arith.constant 1 : i32
    %88 = vector.broadcast %c1_i32_46 : i32 to vector<32x256xi32>
    %89 = arith.cmpi sge, %87, %88 : vector<32x256xi32>
    %c1_i32_47 = arith.constant 1 : i32
    %90 = tpu.dynamic_rotate %84 by %c1_i32_47 dim 0 : vector<32x256xf32>, i32 -> vector<32x256xf32>
    %cst_48 = arith.constant 0.000000e+00 : f32
    %91 = vector.broadcast %cst_48 : f32 to vector<32x256xf32>
    %92 = arith.select %89, %90, %91 : vector<32x256xi1>, vector<32x256xf32>
    %c14_i32 = arith.constant 14 : i32
    %93 = vector.broadcast %c14_i32 : i32 to vector<32x256xi32>
    %94 = arith.cmpi sle, %87, %93 : vector<32x256xi32>
    %c31_i32_49 = arith.constant 31 : i32
    %95 = tpu.dynamic_rotate %84 by %c31_i32_49 dim 0 : vector<32x256xf32>, i32 -> vector<32x256xf32>
    %cst_50 = arith.constant 0.000000e+00 : f32
    %96 = vector.broadcast %cst_50 : f32 to vector<32x256xf32>
    %97 = arith.select %94, %95, %96 : vector<32x256xi1>, vector<32x256xf32>
    %98 = arith.truncf %92 : vector<32x256xf32> to vector<32x256xbf16>
    %c0_51 = arith.constant 0 : index
    %c0_52 = arith.constant 0 : index
    %c0_53 = arith.constant 0 : index
    %99 = vector.load %arg5[%c0_51, %c0_52, %c0_53] : memref<3x256x128xbf16, #tpu.memory_space<vmem>>, vector<1x256x128xbf16>
    %100 = vector.shape_cast %99 : vector<1x256x128xbf16> to vector<256x128xbf16>
    %cst_54 = arith.constant dense<0.000000e+00> : vector<32x128xf32>
    %101 = tpu.matmul %98, %100, %cst_54 {dimension_numbers = #tpu.dot_dimension_numbers<[1], [0], [0], [1], [0, 0, 1, 1], [], []>} : vector<32x256xbf16>, vector<256x128xbf16>, vector<32x128xf32> -> vector<32x128xf32>
    %102 = arith.truncf %84 : vector<32x256xf32> to vector<32x256xbf16>
    %c1_55 = arith.constant 1 : index
    %c0_56 = arith.constant 0 : index
    %c0_57 = arith.constant 0 : index
    %103 = vector.load %arg5[%c1_55, %c0_56, %c0_57] : memref<3x256x128xbf16, #tpu.memory_space<vmem>>, vector<1x256x128xbf16>
    %104 = vector.shape_cast %103 : vector<1x256x128xbf16> to vector<256x128xbf16>
    %cst_58 = arith.constant dense<0.000000e+00> : vector<32x128xf32>
    %105 = tpu.matmul %102, %104, %cst_58 {dimension_numbers = #tpu.dot_dimension_numbers<[1], [0], [0], [1], [0, 0, 1, 1], [], []>} : vector<32x256xbf16>, vector<256x128xbf16>, vector<32x128xf32> -> vector<32x128xf32>
    %106 = arith.addf %101, %105 : vector<32x128xf32>
    %107 = arith.truncf %97 : vector<32x256xf32> to vector<32x256xbf16>
    %c2_59 = arith.constant 2 : index
    %c0_60 = arith.constant 0 : index
    %c0_61 = arith.constant 0 : index
    %108 = vector.load %arg5[%c2_59, %c0_60, %c0_61] : memref<3x256x128xbf16, #tpu.memory_space<vmem>>, vector<1x256x128xbf16>
    %109 = vector.shape_cast %108 : vector<1x256x128xbf16> to vector<256x128xbf16>
    %cst_62 = arith.constant dense<0.000000e+00> : vector<32x128xf32>
    %110 = tpu.matmul %107, %109, %cst_62 {dimension_numbers = #tpu.dot_dimension_numbers<[1], [0], [0], [1], [0, 0, 1, 1], [], []>} : vector<32x256xbf16>, vector<256x128xbf16>, vector<32x128xf32> -> vector<32x128xf32>
    %111 = arith.addf %106, %110 : vector<32x128xf32>
    %c0_63 = arith.constant 0 : index
    %c0_64 = arith.constant 0 : index
    %112 = vector.load %arg6[%c0_63, %c0_64] : memref<1x128xf32, #tpu.memory_space<vmem>>, vector<1x128xf32>
    %113 = vector.broadcast %112 : vector<1x128xf32> to vector<32x128xf32>
    %114 = arith.addf %111, %113 : vector<32x128xf32>
    %cst_65 = arith.constant 0.000000e+00 : f32
    %115 = vector.broadcast %cst_65 : f32 to vector<32x128xf32>
    %116 = arith.cmpf oge, %114, %115 : vector<32x128xf32>
    %cst_66 = arith.constant 0.00999999977 : f32
    %117 = vector.broadcast %cst_66 : f32 to vector<32x128xf32>
    %118 = arith.mulf %117, %114 : vector<32x128xf32>
    %119 = arith.select %116, %114, %118 : vector<32x128xi1>, vector<32x128xf32>
    %c112_i32 = arith.constant 112 : i32
    %120 = tpu.dynamic_rotate %119 by %c112_i32 dim 1 : vector<32x128xf32>, i32 -> vector<32x128xf32>
    %121 = arith.maximumf %119, %120 : vector<32x128xf32>
    %c31_i32_67 = arith.constant 31 : i32
    %122 = tpu.dynamic_rotate %121 by %c31_i32_67 dim 0 : vector<32x128xf32>, i32 -> vector<32x128xf32>
    %123 = arith.maximumf %121, %122 : vector<32x128xf32>
    %c0_68 = arith.constant 0 : index
    %c0_69 = arith.constant 0 : index
    %124 = vector.load %arg11[%c0_68, %c0_69] : memref<16x32xbf16, #tpu.memory_space<vmem>>, vector<16x32xbf16>
    %125 = arith.truncf %123 : vector<32x128xf32> to vector<32x128xbf16>
    %cst_70 = arith.constant dense<0.000000e+00> : vector<16x128xf32>
    %126 = tpu.matmul %124, %125, %cst_70 {dimension_numbers = #tpu.dot_dimension_numbers<[1], [0], [0], [1], [0, 0, 1, 1], [], []>} : vector<16x32xbf16>, vector<32x128xbf16>, vector<16x128xf32> -> vector<16x128xf32>
    %127 = tpu.iota {dimensions = array<i32: 0>} : vector<16x128xi32>
    %c7_i32 = arith.constant 7 : i32
    %128 = vector.broadcast %c7_i32 : i32 to vector<16x128xi32>
    %129 = arith.andi %127, %128 : vector<16x128xi32>
    %c1_i32_71 = arith.constant 1 : i32
    %130 = vector.broadcast %c1_i32_71 : i32 to vector<16x128xi32>
    %131 = arith.cmpi sge, %129, %130 : vector<16x128xi32>
    %c1_i32_72 = arith.constant 1 : i32
    %132 = tpu.dynamic_rotate %126 by %c1_i32_72 dim 0 : vector<16x128xf32>, i32 -> vector<16x128xf32>
    %cst_73 = arith.constant 0.000000e+00 : f32
    %133 = vector.broadcast %cst_73 : f32 to vector<16x128xf32>
    %134 = arith.select %131, %132, %133 : vector<16x128xi1>, vector<16x128xf32>
    %c6_i32 = arith.constant 6 : i32
    %135 = vector.broadcast %c6_i32 : i32 to vector<16x128xi32>
    %136 = arith.cmpi sle, %129, %135 : vector<16x128xi32>
    %c15_i32_74 = arith.constant 15 : i32
    %137 = tpu.dynamic_rotate %126 by %c15_i32_74 dim 0 : vector<16x128xf32>, i32 -> vector<16x128xf32>
    %cst_75 = arith.constant 0.000000e+00 : f32
    %138 = vector.broadcast %cst_75 : f32 to vector<16x128xf32>
    %139 = arith.select %136, %137, %138 : vector<16x128xi1>, vector<16x128xf32>
    %140 = arith.truncf %134 : vector<16x128xf32> to vector<16x128xbf16>
    %c0_76 = arith.constant 0 : index
    %c0_77 = arith.constant 0 : index
    %c0_78 = arith.constant 0 : index
    %141 = vector.load %arg7[%c0_76, %c0_77, %c0_78] : memref<3x128x128xbf16, #tpu.memory_space<vmem>>, vector<1x128x128xbf16>
    %142 = vector.shape_cast %141 : vector<1x128x128xbf16> to vector<128x128xbf16>
    %cst_79 = arith.constant dense<0.000000e+00> : vector<16x128xf32>
    %143 = tpu.matmul %140, %142, %cst_79 {dimension_numbers = #tpu.dot_dimension_numbers<[1], [0], [0], [1], [0, 0, 1, 1], [], []>} : vector<16x128xbf16>, vector<128x128xbf16>, vector<16x128xf32> -> vector<16x128xf32>
    %144 = arith.truncf %126 : vector<16x128xf32> to vector<16x128xbf16>
    %c1_80 = arith.constant 1 : index
    %c0_81 = arith.constant 0 : index
    %c0_82 = arith.constant 0 : index
    %145 = vector.load %arg7[%c1_80, %c0_81, %c0_82] : memref<3x128x128xbf16, #tpu.memory_space<vmem>>, vector<1x128x128xbf16>
    %146 = vector.shape_cast %145 : vector<1x128x128xbf16> to vector<128x128xbf16>
    %cst_83 = arith.constant dense<0.000000e+00> : vector<16x128xf32>
    %147 = tpu.matmul %144, %146, %cst_83 {dimension_numbers = #tpu.dot_dimension_numbers<[1], [0], [0], [1], [0, 0, 1, 1], [], []>} : vector<16x128xbf16>, vector<128x128xbf16>, vector<16x128xf32> -> vector<16x128xf32>
    %148 = arith.addf %143, %147 : vector<16x128xf32>
    %149 = arith.truncf %139 : vector<16x128xf32> to vector<16x128xbf16>
    %c2_84 = arith.constant 2 : index
    %c0_85 = arith.constant 0 : index
    %c0_86 = arith.constant 0 : index
    %150 = vector.load %arg7[%c2_84, %c0_85, %c0_86] : memref<3x128x128xbf16, #tpu.memory_space<vmem>>, vector<1x128x128xbf16>
    %151 = vector.shape_cast %150 : vector<1x128x128xbf16> to vector<128x128xbf16>
    %cst_87 = arith.constant dense<0.000000e+00> : vector<16x128xf32>
    %152 = tpu.matmul %149, %151, %cst_87 {dimension_numbers = #tpu.dot_dimension_numbers<[1], [0], [0], [1], [0, 0, 1, 1], [], []>} : vector<16x128xbf16>, vector<128x128xbf16>, vector<16x128xf32> -> vector<16x128xf32>
    %153 = arith.addf %148, %152 : vector<16x128xf32>
    %c0_88 = arith.constant 0 : index
    %c0_89 = arith.constant 0 : index
    %154 = vector.load %arg8[%c0_88, %c0_89] : memref<1x128xf32, #tpu.memory_space<vmem>>, vector<1x128xf32>
    %155 = vector.broadcast %154 : vector<1x128xf32> to vector<16x128xf32>
    %156 = arith.addf %153, %155 : vector<16x128xf32>
    %cst_90 = arith.constant 0.000000e+00 : f32
    %157 = vector.broadcast %cst_90 : f32 to vector<16x128xf32>
    %158 = arith.cmpf oge, %156, %157 : vector<16x128xf32>
    %cst_91 = arith.constant 0.00999999977 : f32
    %159 = vector.broadcast %cst_91 : f32 to vector<16x128xf32>
    %160 = arith.mulf %159, %156 : vector<16x128xf32>
    %161 = arith.select %158, %156, %160 : vector<16x128xi1>, vector<16x128xf32>
    %cst_92 = arith.constant 0.000000e+00 : f32
    %162 = vector.broadcast %cst_92 : f32 to vector<2x512xf32>
    %c0_93 = arith.constant 0 : index
    %c0_94 = arith.constant 0 : index
    %c0_95 = arith.constant 0 : index
    %163 = vector.load %arg12[%c0_93, %c0_94, %c0_95] : memref<8x2x16xf32, #tpu.memory_space<vmem>>, vector<1x2x16xf32>
    %164 = vector.shape_cast %163 : vector<1x2x16xf32> to vector<2x16xf32>
    %cst_96 = arith.constant dense<0.000000e+00> : vector<2x128xf32>
    %165 = tpu.matmul %164, %161, %cst_96 {dimension_numbers = #tpu.dot_dimension_numbers<[1], [0], [0], [1], [0, 0, 1, 1], [], []>} : vector<2x16xf32>, vector<16x128xf32>, vector<2x128xf32> -> vector<2x128xf32>
    %c0_97 = arith.constant 0 : index
    %c0_98 = arith.constant 0 : index
    %c0_99 = arith.constant 0 : index
    %166 = vector.load %arg13[%c0_97, %c0_98, %c0_99] : memref<8x128x512xf32, #tpu.memory_space<vmem>>, vector<1x128x512xf32>
    %167 = vector.shape_cast %166 : vector<1x128x512xf32> to vector<128x512xf32>
    %cst_100 = arith.constant dense<0.000000e+00> : vector<2x512xf32>
    %168 = tpu.matmul %165, %167, %cst_100 {dimension_numbers = #tpu.dot_dimension_numbers<[1], [0], [0], [1], [0, 0, 1, 1], [], []>} : vector<2x128xf32>, vector<128x512xf32>, vector<2x512xf32> -> vector<2x512xf32>
    %169 = arith.addf %162, %168 : vector<2x512xf32>
    %c1_101 = arith.constant 1 : index
    %c0_102 = arith.constant 0 : index
    %c0_103 = arith.constant 0 : index
    %170 = vector.load %arg12[%c1_101, %c0_102, %c0_103] : memref<8x2x16xf32, #tpu.memory_space<vmem>>, vector<1x2x16xf32>
    %171 = vector.shape_cast %170 : vector<1x2x16xf32> to vector<2x16xf32>
    %cst_104 = arith.constant dense<0.000000e+00> : vector<2x128xf32>
    %172 = tpu.matmul %171, %161, %cst_104 {dimension_numbers = #tpu.dot_dimension_numbers<[1], [0], [0], [1], [0, 0, 1, 1], [], []>} : vector<2x16xf32>, vector<16x128xf32>, vector<2x128xf32> -> vector<2x128xf32>
    %c1_105 = arith.constant 1 : index
    %c0_106 = arith.constant 0 : index
    %c0_107 = arith.constant 0 : index
    %173 = vector.load %arg13[%c1_105, %c0_106, %c0_107] : memref<8x128x512xf32, #tpu.memory_space<vmem>>, vector<1x128x512xf32>
    %174 = vector.shape_cast %173 : vector<1x128x512xf32> to vector<128x512xf32>
    %cst_108 = arith.constant dense<0.000000e+00> : vector<2x512xf32>
    %175 = tpu.matmul %172, %174, %cst_108 {dimension_numbers = #tpu.dot_dimension_numbers<[1], [0], [0], [1], [0, 0, 1, 1], [], []>} : vector<2x128xf32>, vector<128x512xf32>, vector<2x512xf32> -> vector<2x512xf32>
    %176 = arith.addf %169, %175 : vector<2x512xf32>
    %c2_109 = arith.constant 2 : index
    %c0_110 = arith.constant 0 : index
    %c0_111 = arith.constant 0 : index
    %177 = vector.load %arg12[%c2_109, %c0_110, %c0_111] : memref<8x2x16xf32, #tpu.memory_space<vmem>>, vector<1x2x16xf32>
    %178 = vector.shape_cast %177 : vector<1x2x16xf32> to vector<2x16xf32>
    %cst_112 = arith.constant dense<0.000000e+00> : vector<2x128xf32>
    %179 = tpu.matmul %178, %161, %cst_112 {dimension_numbers = #tpu.dot_dimension_numbers<[1], [0], [0], [1], [0, 0, 1, 1], [], []>} : vector<2x16xf32>, vector<16x128xf32>, vector<2x128xf32> -> vector<2x128xf32>
    %c2_113 = arith.constant 2 : index
    %c0_114 = arith.constant 0 : index
    %c0_115 = arith.constant 0 : index
    %180 = vector.load %arg13[%c2_113, %c0_114, %c0_115] : memref<8x128x512xf32, #tpu.memory_space<vmem>>, vector<1x128x512xf32>
    %181 = vector.shape_cast %180 : vector<1x128x512xf32> to vector<128x512xf32>
    %cst_116 = arith.constant dense<0.000000e+00> : vector<2x512xf32>
    %182 = tpu.matmul %179, %181, %cst_116 {dimension_numbers = #tpu.dot_dimension_numbers<[1], [0], [0], [1], [0, 0, 1, 1], [], []>} : vector<2x128xf32>, vector<128x512xf32>, vector<2x512xf32> -> vector<2x512xf32>
    %183 = arith.addf %176, %182 : vector<2x512xf32>
    %c3 = arith.constant 3 : index
    %c0_117 = arith.constant 0 : index
    %c0_118 = arith.constant 0 : index
    %184 = vector.load %arg12[%c3, %c0_117, %c0_118] : memref<8x2x16xf32, #tpu.memory_space<vmem>>, vector<1x2x16xf32>
    %185 = vector.shape_cast %184 : vector<1x2x16xf32> to vector<2x16xf32>
    %cst_119 = arith.constant dense<0.000000e+00> : vector<2x128xf32>
    %186 = tpu.matmul %185, %161, %cst_119 {dimension_numbers = #tpu.dot_dimension_numbers<[1], [0], [0], [1], [0, 0, 1, 1], [], []>} : vector<2x16xf32>, vector<16x128xf32>, vector<2x128xf32> -> vector<2x128xf32>
    %c3_120 = arith.constant 3 : index
    %c0_121 = arith.constant 0 : index
    %c0_122 = arith.constant 0 : index
    %187 = vector.load %arg13[%c3_120, %c0_121, %c0_122] : memref<8x128x512xf32, #tpu.memory_space<vmem>>, vector<1x128x512xf32>
    %188 = vector.shape_cast %187 : vector<1x128x512xf32> to vector<128x512xf32>
    %cst_123 = arith.constant dense<0.000000e+00> : vector<2x512xf32>
    %189 = tpu.matmul %186, %188, %cst_123 {dimension_numbers = #tpu.dot_dimension_numbers<[1], [0], [0], [1], [0, 0, 1, 1], [], []>} : vector<2x128xf32>, vector<128x512xf32>, vector<2x512xf32> -> vector<2x512xf32>
    %190 = arith.addf %183, %189 : vector<2x512xf32>
    %c4 = arith.constant 4 : index
    %c0_124 = arith.constant 0 : index
    %c0_125 = arith.constant 0 : index
    %191 = vector.load %arg12[%c4, %c0_124, %c0_125] : memref<8x2x16xf32, #tpu.memory_space<vmem>>, vector<1x2x16xf32>
    %192 = vector.shape_cast %191 : vector<1x2x16xf32> to vector<2x16xf32>
    %cst_126 = arith.constant dense<0.000000e+00> : vector<2x128xf32>
    %193 = tpu.matmul %192, %161, %cst_126 {dimension_numbers = #tpu.dot_dimension_numbers<[1], [0], [0], [1], [0, 0, 1, 1], [], []>} : vector<2x16xf32>, vector<16x128xf32>, vector<2x128xf32> -> vector<2x128xf32>
    %c4_127 = arith.constant 4 : index
    %c0_128 = arith.constant 0 : index
    %c0_129 = arith.constant 0 : index
    %194 = vector.load %arg13[%c4_127, %c0_128, %c0_129] : memref<8x128x512xf32, #tpu.memory_space<vmem>>, vector<1x128x512xf32>
    %195 = vector.shape_cast %194 : vector<1x128x512xf32> to vector<128x512xf32>
    %cst_130 = arith.constant dense<0.000000e+00> : vector<2x512xf32>
    %196 = tpu.matmul %193, %195, %cst_130 {dimension_numbers = #tpu.dot_dimension_numbers<[1], [0], [0], [1], [0, 0, 1, 1], [], []>} : vector<2x128xf32>, vector<128x512xf32>, vector<2x512xf32> -> vector<2x512xf32>
    %197 = arith.addf %190, %196 : vector<2x512xf32>
    %c5 = arith.constant 5 : index
    %c0_131 = arith.constant 0 : index
    %c0_132 = arith.constant 0 : index
    %198 = vector.load %arg12[%c5, %c0_131, %c0_132] : memref<8x2x16xf32, #tpu.memory_space<vmem>>, vector<1x2x16xf32>
    %199 = vector.shape_cast %198 : vector<1x2x16xf32> to vector<2x16xf32>
    %cst_133 = arith.constant dense<0.000000e+00> : vector<2x128xf32>
    %200 = tpu.matmul %199, %161, %cst_133 {dimension_numbers = #tpu.dot_dimension_numbers<[1], [0], [0], [1], [0, 0, 1, 1], [], []>} : vector<2x16xf32>, vector<16x128xf32>, vector<2x128xf32> -> vector<2x128xf32>
    %c5_134 = arith.constant 5 : index
    %c0_135 = arith.constant 0 : index
    %c0_136 = arith.constant 0 : index
    %201 = vector.load %arg13[%c5_134, %c0_135, %c0_136] : memref<8x128x512xf32, #tpu.memory_space<vmem>>, vector<1x128x512xf32>
    %202 = vector.shape_cast %201 : vector<1x128x512xf32> to vector<128x512xf32>
    %cst_137 = arith.constant dense<0.000000e+00> : vector<2x512xf32>
    %203 = tpu.matmul %200, %202, %cst_137 {dimension_numbers = #tpu.dot_dimension_numbers<[1], [0], [0], [1], [0, 0, 1, 1], [], []>} : vector<2x128xf32>, vector<128x512xf32>, vector<2x512xf32> -> vector<2x512xf32>
    %204 = arith.addf %197, %203 : vector<2x512xf32>
    %c6 = arith.constant 6 : index
    %c0_138 = arith.constant 0 : index
    %c0_139 = arith.constant 0 : index
    %205 = vector.load %arg12[%c6, %c0_138, %c0_139] : memref<8x2x16xf32, #tpu.memory_space<vmem>>, vector<1x2x16xf32>
    %206 = vector.shape_cast %205 : vector<1x2x16xf32> to vector<2x16xf32>
    %cst_140 = arith.constant dense<0.000000e+00> : vector<2x128xf32>
    %207 = tpu.matmul %206, %161, %cst_140 {dimension_numbers = #tpu.dot_dimension_numbers<[1], [0], [0], [1], [0, 0, 1, 1], [], []>} : vector<2x16xf32>, vector<16x128xf32>, vector<2x128xf32> -> vector<2x128xf32>
    %c6_141 = arith.constant 6 : index
    %c0_142 = arith.constant 0 : index
    %c0_143 = arith.constant 0 : index
    %208 = vector.load %arg13[%c6_141, %c0_142, %c0_143] : memref<8x128x512xf32, #tpu.memory_space<vmem>>, vector<1x128x512xf32>
    %209 = vector.shape_cast %208 : vector<1x128x512xf32> to vector<128x512xf32>
    %cst_144 = arith.constant dense<0.000000e+00> : vector<2x512xf32>
    %210 = tpu.matmul %207, %209, %cst_144 {dimension_numbers = #tpu.dot_dimension_numbers<[1], [0], [0], [1], [0, 0, 1, 1], [], []>} : vector<2x128xf32>, vector<128x512xf32>, vector<2x512xf32> -> vector<2x512xf32>
    %211 = arith.addf %204, %210 : vector<2x512xf32>
    %c7 = arith.constant 7 : index
    %c0_145 = arith.constant 0 : index
    %c0_146 = arith.constant 0 : index
    %212 = vector.load %arg12[%c7, %c0_145, %c0_146] : memref<8x2x16xf32, #tpu.memory_space<vmem>>, vector<1x2x16xf32>
    %213 = vector.shape_cast %212 : vector<1x2x16xf32> to vector<2x16xf32>
    %cst_147 = arith.constant dense<0.000000e+00> : vector<2x128xf32>
    %214 = tpu.matmul %213, %161, %cst_147 {dimension_numbers = #tpu.dot_dimension_numbers<[1], [0], [0], [1], [0, 0, 1, 1], [], []>} : vector<2x16xf32>, vector<16x128xf32>, vector<2x128xf32> -> vector<2x128xf32>
    %c7_148 = arith.constant 7 : index
    %c0_149 = arith.constant 0 : index
    %c0_150 = arith.constant 0 : index
    %215 = vector.load %arg13[%c7_148, %c0_149, %c0_150] : memref<8x128x512xf32, #tpu.memory_space<vmem>>, vector<1x128x512xf32>
    %216 = vector.shape_cast %215 : vector<1x128x512xf32> to vector<128x512xf32>
    %cst_151 = arith.constant dense<0.000000e+00> : vector<2x512xf32>
    %217 = tpu.matmul %214, %216, %cst_151 {dimension_numbers = #tpu.dot_dimension_numbers<[1], [0], [0], [1], [0, 0, 1, 1], [], []>} : vector<2x128xf32>, vector<128x512xf32>, vector<2x512xf32> -> vector<2x512xf32>
    %218 = arith.addf %211, %217 : vector<2x512xf32>
    %c0_152 = arith.constant 0 : index
    %c0_153 = arith.constant 0 : index
    %219 = vector.load %arg14[%c0_152, %c0_153] : memref<1x512xf32, #tpu.memory_space<vmem>>, vector<1x512xf32>
    %220 = vector.broadcast %219 : vector<1x512xf32> to vector<2x512xf32>
    %221 = arith.addf %218, %220 : vector<2x512xf32>
    %cst_154 = arith.constant 0.000000e+00 : f32
    %222 = vector.broadcast %cst_154 : f32 to vector<2x512xf32>
    %223 = arith.cmpf oge, %221, %222 : vector<2x512xf32>
    %cst_155 = arith.constant 0.00999999977 : f32
    %224 = vector.broadcast %cst_155 : f32 to vector<2x512xf32>
    %225 = arith.mulf %224, %221 : vector<2x512xf32>
    %226 = arith.select %223, %221, %225 : vector<2x512xi1>, vector<2x512xf32>
    %c0_156 = arith.constant 0 : index
    %c0_157 = arith.constant 0 : index
    %227 = vector.load %arg15[%c0_156, %c0_157] : memref<512x256xf32, #tpu.memory_space<vmem>>, vector<512x256xf32>
    %cst_158 = arith.constant dense<0.000000e+00> : vector<2x256xf32>
    %228 = tpu.matmul %226, %227, %cst_158 {dimension_numbers = #tpu.dot_dimension_numbers<[1], [0], [0], [1], [0, 0, 1, 1], [], []>} : vector<2x512xf32>, vector<512x256xf32>, vector<2x256xf32> -> vector<2x256xf32>
    %c0_159 = arith.constant 0 : index
    %c0_160 = arith.constant 0 : index
    %229 = vector.load %arg16[%c0_159, %c0_160] : memref<1x256xf32, #tpu.memory_space<vmem>>, vector<1x256xf32>
    %230 = vector.broadcast %229 : vector<1x256xf32> to vector<2x256xf32>
    %231 = arith.addf %228, %230 : vector<2x256xf32>
    %cst_161 = arith.constant 0.000000e+00 : f32
    %232 = vector.broadcast %cst_161 : f32 to vector<2x256xf32>
    %233 = arith.cmpf oge, %231, %232 : vector<2x256xf32>
    %cst_162 = arith.constant 0.00999999977 : f32
    %234 = vector.broadcast %cst_162 : f32 to vector<2x256xf32>
    %235 = arith.mulf %234, %231 : vector<2x256xf32>
    %236 = arith.select %233, %231, %235 : vector<2x256xi1>, vector<2x256xf32>
    %c0_163 = arith.constant 0 : index
    %c0_164 = arith.constant 0 : index
    %237 = vector.load %arg17[%c0_163, %c0_164] : memref<256x128xf32, #tpu.memory_space<vmem>>, vector<256x128xf32>
    %cst_165 = arith.constant dense<0.000000e+00> : vector<2x128xf32>
    %238 = tpu.matmul %236, %237, %cst_165 {dimension_numbers = #tpu.dot_dimension_numbers<[1], [0], [0], [1], [0, 0, 1, 1], [], []>} : vector<2x256xf32>, vector<256x128xf32>, vector<2x128xf32> -> vector<2x128xf32>
    %c0_166 = arith.constant 0 : index
    %c0_167 = arith.constant 0 : index
    %239 = vector.load %arg18[%c0_166, %c0_167] : memref<1x128xf32, #tpu.memory_space<vmem>>, vector<1x128xf32>
    %240 = vector.broadcast %239 : vector<1x128xf32> to vector<2x128xf32>
    %241 = arith.addf %238, %240 : vector<2x128xf32>
    %cst_168 = arith.constant 0.000000e+00 : f32
    %242 = vector.broadcast %cst_168 : f32 to vector<2x128xf32>
    %243 = arith.cmpf oge, %241, %242 : vector<2x128xf32>
    %cst_169 = arith.constant 0.00999999977 : f32
    %244 = vector.broadcast %cst_169 : f32 to vector<2x128xf32>
    %245 = arith.mulf %244, %241 : vector<2x128xf32>
    %246 = arith.select %243, %241, %245 : vector<2x128xi1>, vector<2x128xf32>
    %c0_170 = arith.constant 0 : index
    %c0_171 = arith.constant 0 : index
    %247 = vector.load %arg19[%c0_170, %c0_171] : memref<128x1xf32, #tpu.memory_space<vmem>>, vector<128x1xf32>
    %cst_172 = arith.constant dense<0.000000e+00> : vector<2x1xf32>
    %248 = tpu.matmul %246, %247, %cst_172 {dimension_numbers = #tpu.dot_dimension_numbers<[1], [0], [0], [1], [0, 0, 1, 1], [], []>} : vector<2x128xf32>, vector<128x1xf32>, vector<2x1xf32> -> vector<2x1xf32>
    %c0_173 = arith.constant 0 : index
    %c0_174 = arith.constant 0 : index
    %249 = vector.load %arg20[%c0_173, %c0_174] : memref<1x1xf32, #tpu.memory_space<vmem>>, vector<1x1xf32>
    %250 = vector.broadcast %249 : vector<1x1xf32> to vector<2x1xf32>
    %251 = arith.addf %248, %250 : vector<2x1xf32>
    %c0_175 = arith.constant 0 : index
    %c0_176 = arith.constant 0 : index
    %252 = vector.load %arg21[%c0_175, %c0_176] : memref<2x1xf32, #tpu.memory_space<vmem>>, vector<2x1xf32>
    tpu.vector_store %arg21[%c0_175, %c0_176], %251 {strides = array<i32>} : memref<2x1xf32, #tpu.memory_space<vmem>>, vector<2x1xf32>,
    return
  }
}

</mosaic_0001>

<llo_original>
// kernel: pitch_classifier_forward.1
$region0: #{pitch_classifier_forward.1}
  #allocation0 [shape = 'u32[]', space=smem, size = 0x4, offset = 0x4, fixed_abs, tag = 'smem constant byte address 0x4 - core index']
  #allocation1 [shape = 'u32[72,128]{1,0:T(1,128)}', space=vmem, size = 0x9000, scoped, tag = 'internal scratch']
  #allocation2 [shape = 'f32[1,1]{1,0:T(1,128)S(1)}', space=vmem, size = 0x200, scoped, tag = 'scoped memory for pitch_classifier_forward.1']
  %s0 = inlined_call_operand.vmem [shape: f32[128,32], index: 0, kind: input, shape index: {}]
  %s1 = inlined_call_operand.hbm [shape: bf16[3,32,256], index: 1, kind: input, shape index: {}]
  %s2 = inlined_call_operand.hbm [shape: f32[1,256], index: 2, kind: input, shape index: {}]
  %s3 = inlined_call_operand.hbm [shape: bf16[3,256,256], index: 3, kind: input, shape index: {}]
  %s4 = inlined_call_operand.hbm [shape: f32[1,256], index: 4, kind: input, shape index: {}]
  %s5 = inlined_call_operand.hbm [shape: bf16[3,256,128], index: 5, kind: input, shape index: {}]
  %s6 = inlined_call_operand.hbm [shape: f32[1,128], index: 6, kind: input, shape index: {}]
  %s7 = inlined_call_operand.hbm [shape: bf16[3,128,128], index: 7, kind: input, shape index: {}]
  %s8 = inlined_call_operand.hbm [shape: f32[1,128], index: 8, kind: input, shape index: {}]
  %s9 = inlined_call_operand.hbm [shape: bf16[64,128], index: 9, kind: input, shape index: {}]
  %s10 = inlined_call_operand.hbm [shape: bf16[32,64], index: 10, kind: input, shape index: {}]
  %s11 = inlined_call_operand.hbm [shape: bf16[16,32], index: 11, kind: input, shape index: {}]
  %s12 = inlined_call_operand.hbm [shape: f32[8,2,16], index: 12, kind: input, shape index: {}]
  %s13 = inlined_call_operand.hbm [shape: f32[8,128,512], index: 13, kind: input, shape index: {}]
  %s14 = inlined_call_operand.hbm [shape: f32[1,512], index: 14, kind: input, shape index: {}]
  %s15 = inlined_call_operand.hbm [shape: f32[512,256], index: 15, kind: input, shape index: {}]
  %s16 = inlined_call_operand.hbm [shape: f32[1,256], index: 16, kind: input, shape index: {}]
  %s17 = inlined_call_operand.hbm [shape: f32[256,128], index: 17, kind: input, shape index: {}]
  %s18 = inlined_call_operand.hbm [shape: f32[1,128], index: 18, kind: input, shape index: {}]
  %s19 = inlined_call_operand.vmem [shape: f32[128,1], index: 19, kind: input, shape index: {}]
  %s20 = inlined_call_operand.<no memory space> [shape: f32[1,1], index: 20, kind: input, shape index: {}]
  %s21 = inlined_call_operand.vmem [shape: f32[2,1], index: 21, kind: output, shape index: {}]
  %s22 = sld [smem:[#allocation0]]
  $region166: #{pitch_classifier_forward.1} parent=0
    _
  %s24 = ssub.s32 1, %s22
  %s25 = scalar_select 0, %s24, %s22
  %v26 = vstv %s20
  %27 = vst [vmem:[#allocation2] sm:$0x1] %v26
  $region1: #{pitch_classifier_forward.1} parent=0
    #allocation3 [shape = 'u8[49152]{0}', space=vmem, size = 0xc000, scoped, tag = 'input window, operand 1, single buffered']
    #allocation4 [shape = 's32[1]{0}', space=sflag, size = 0x4, scoped, tag = 'scoped memory for pitch_classifier_forward.1']
    #allocation5 [shape = 'u8[1024]{0}', space=vmem, size = 0x400, scoped, tag = 'input window, operand 2, single buffered']
    #allocation6 [shape = 's32[1]{0}', space=sflag, size = 0x4, scoped, tag = 'scoped memory for pitch_classifier_forward.1']
    #allocation7 [shape = 'u8[393216]{0}', space=vmem, size = 0x60000, scoped, tag = 'input window, operand 3, single buffered']
    #allocation8 [shape = 'u8[1024]{0}', space=vmem, size = 0x400, scoped, tag = 'input window, operand 4, single buffered']
    #allocation9 [shape = 's32[1]{0}', space=sflag, size = 0x4, scoped, tag = 'scoped memory for pitch_classifier_forward.1']
    #allocation10 [shape = 'u8[196608]{0}', space=vmem, size = 0x30000, scoped, tag = 'input window, operand 5, single buffered']
    #allocation11 [shape = 'u8[512]{0}', space=vmem, size = 0x400, scoped, tag = 'input window, operand 6, single buffered']
    #allocation12 [shape = 's32[1]{0}', space=sflag, size = 0x4, scoped, tag = 'scoped memory for pitch_classifier_forward.1']
    #allocation13 [shape = 'u8[98304]{0}', space=vmem, size = 0x18000, scoped, tag = 'input window, operand 7, single buffered']
    #allocation14 [shape = 'u8[512]{0}', space=vmem, size = 0x400, scoped, tag = 'input window, operand 8, single buffered']
    #allocation15 [shape = 's32[1]{0}', space=sflag, size = 0x4, scoped, tag = 'scoped memory for pitch_classifier_forward.1']
    #allocation16 [shape = 'u8[16384]{0}', space=vmem, size = 0x4000, scoped, tag = 'input window, operand 9, single buffered']
    #allocation17 [shape = 'u8[8192]{0}', space=vmem, size = 0x2000, scoped, tag = 'input window, operand 10, single buffered']
    #allocation18 [shape = 's32[1]{0}', space=sflag, size = 0x4, scoped, tag = 'scoped memory for pitch_classifier_forward.1']
    #allocation19 [shape = 'u8[4096]{0}', space=vmem, size = 0x1000, scoped, tag = 'input window, operand 11, single buffered']
    #allocation20 [shape = 'u8[8192]{0}', space=vmem, size = 0x2000, scoped, tag = 'input window, operand 12, single buffered']
    #allocation21 [shape = 's32[1]{0}', space=sflag, size = 0x4, scoped, tag = 'scoped memory for pitch_classifier_forward.1']
    #allocation22 [shape = 'u8[2097152]{0}', space=vmem, size = 0x200000, scoped, tag = 'input window, operand 13, single buffered']
    #allocation23 [shape = 'u8[2048]{0}', space=vmem, size = 0x800, scoped, tag = 'input window, operand 14, single buffered']
    #allocation24 [shape = 's32[1]{0}', space=sflag, size = 0x4, scoped, tag = 'scoped memory for pitch_classifier_forward.1']
    #allocation25 [shape = 'u8[524288]{0}', space=vmem, size = 0x80000, scoped, tag = 'input window, operand 15, single buffered']
    #allocation26 [shape = 'u8[1024]{0}', space=vmem, size = 0x400, scoped, tag = 'input window, operand 16, single buffered']
    #allocation27 [shape = 's32[1]{0}', space=sflag, size = 0x4, scoped, tag = 'scoped memory for pitch_classifier_forward.1']
    #allocation28 [shape = 'u8[131072]{0}', space=vmem, size = 0x20000, scoped, tag = 'input window, operand 17, single buffered']
    #allocation29 [shape = 'u8[512]{0}', space=vmem, size = 0x400, scoped, tag = 'input window, operand 18, single buffered']
    #allocation30 [shape = 's32[1]{0}', space=sflag, size = 0x4, scoped, tag = 'scoped memory for pitch_classifier_forward.1']
    %28 = vsyncpa [#allocation4], 0
    %29 = vsyncpa [#allocation6], 0
    %30 = vsyncpa [#allocation9], 0
    %31 = vsyncpa [#allocation12], 0
    %32 = vsyncpa [#allocation15], 0
    %33 = vsyncpa [#allocation18], 0
    %34 = vsyncpa [#allocation21], 0
    %35 = vsyncpa [#allocation24], 0
    %36 = vsyncpa [#allocation27], 0
    %37 = vsyncpa [#allocation30], 0
    // Predicated region
    $region2: #{pitch_classifier_forward.1} parent=1 // pred_check
      _
    $region3: #{pitch_classifier_forward.1} parent=1 // pred_check_branch
      %39 = sbr.rel (0) target = $region5
    $region4: #{pitch_classifier_forward.1} parent=1 // pred_region
      _
    $region5: #{pitch_classifier_forward.1} parent=1 // pred_fallthru
      _
    // Predicated region
    $region6: #{pitch_classifier_forward.1} parent=1 // pred_check
      _
    $region7: #{pitch_classifier_forward.1} parent=1 // pred_check_branch
      %41 = sbr.rel (0) target = $region9
    $region8: #{pitch_classifier_forward.1} parent=1 // pred_region
      %43 = vsyncadd [#allocation4], 0
      %s44 = sshll.u32 %s1, 4
      %s45 = int_to_ptr.hbm [resolvable:$true] %s44
      %s46 = sshll.u32 [#allocation3], 4
      %s47 = int_to_ptr.vmem [resolvable:$true] %s46
      %52 = dma.hbm_to_vmem [thread:$0]  %s45, 1536, %s47, [#allocation4], 128, 128, 8
    $region9: #{pitch_classifier_forward.1} parent=1 // pred_fallthru
      _
    // Predicated region
    $region10: #{pitch_classifier_forward.1} parent=1 // pred_check
      _
    $region11: #{pitch_classifier_forward.1} parent=1 // pred_check_branch
      %54 = sbr.rel (0) target = $region13
    $region12: #{pitch_classifier_forward.1} parent=1 // pred_region
      %56 = vsyncadd [#allocation6], 0
      %s58 = sshll.u32 %s2, 4
      %s59 = int_to_ptr.hbm [resolvable:$true] %s58
      %s60 = sshll.u32 [#allocation5], 4
      %s61 = int_to_ptr.vmem [resolvable:$true] %s60
      %63 = dma.hbm_to_vmem [thread:$0]  %s59, 32, %s61, [#allocation6]
    $region13: #{pitch_classifier_forward.1} parent=1 // pred_fallthru
      _
    // Predicated region
    $region14: #{pitch_classifier_forward.1} parent=1 // pred_check
      _
    $region15: #{pitch_classifier_forward.1} parent=1 // pred_check_branch
      %65 = sbr.rel (0) target = $region17
    $region16: #{pitch_classifier_forward.1} parent=1 // pred_region
      %67 = vsyncadd [#allocation6], 0
      %s68 = sshll.u32 %s3, 4
      %s69 = int_to_ptr.hbm [resolvable:$true] %s68
      %s70 = sshll.u32 [#allocation7], 4
      %s71 = int_to_ptr.vmem [resolvable:$true] %s70
      %76 = dma.hbm_to_vmem [thread:$0]  %s69, 12288, %s71, [#allocation6], 128, 128, 8
    $region17: #{pitch_classifier_forward.1} parent=1 // pred_fallthru
      _
    // Predicated region
    $region18: #{pitch_classifier_forward.1} parent=1 // pred_check
      _
    $region19: #{pitch_classifier_forward.1} parent=1 // pred_check_branch
      %78 = sbr.rel (0) target = $region21
    $region20: #{pitch_classifier_forward.1} parent=1 // pred_region
      %80 = vsyncadd [#allocation9], 0
      %s82 = sshll.u32 %s4, 4
      %s83 = int_to_ptr.hbm [resolvable:$true] %s82
      %s84 = sshll.u32 [#allocation8], 4
      %s85 = int_to_ptr.vmem [resolvable:$true] %s84
      %87 = dma.hbm_to_vmem [thread:$0]  %s83, 32, %s85, [#allocation9]
    $region21: #{pitch_classifier_forward.1} parent=1 // pred_fallthru
      _
    // Predicated region
    $region22: #{pitch_classifier_forward.1} parent=1 // pred_check
      _
    $region23: #{pitch_classifier_forward.1} parent=1 // pred_check_branch
      %89 = sbr.rel (0) target = $region25
    $region24: #{pitch_classifier_forward.1} parent=1 // pred_region
      %91 = vsyncadd [#allocation9], 0
      %s92 = sshll.u32 %s5, 4
      %s93 = int_to_ptr.hbm [resolvable:$true] %s92
      %s94 = sshll.u32 [#allocation10], 4
      %s95 = int_to_ptr.vmem [resolvable:$true] %s94
      %100 = dma.hbm_to_vmem [thread:$0]  %s93, 6144, %s95, [#allocation9], 64, 64, 4
    $region25: #{pitch_classifier_forward.1} parent=1 // pred_fallthru
      _
    // Predicated region
    $region26: #{pitch_classifier_forward.1} parent=1 // pred_check
      _
    $region27: #{pitch_classifier_forward.1} parent=1 // pred_check_branch
      %102 = sbr.rel (0) target = $region29
    $region28: #{pitch_classifier_forward.1} parent=1 // pred_region
      %104 = vsyncadd [#allocation12], 0
      %s106 = sshll.u32 %s6, 4
      %s107 = int_to_ptr.hbm [resolvable:$true] %s106
      %s108 = sshll.u32 [#allocation11], 4
      %s109 = int_to_ptr.vmem [resolvable:$true] %s108
      %111 = dma.hbm_to_vmem [thread:$0]  %s107, 16, %s109, [#allocation12]
    $region29: #{pitch_classifier_forward.1} parent=1 // pred_fallthru
      _
    // Predicated region
    $region30: #{pitch_classifier_forward.1} parent=1 // pred_check
      _
    $region31: #{pitch_classifier_forward.1} parent=1 // pred_check_branch
      %113 = sbr.rel (0) target = $region33
    $region32: #{pitch_classifier_forward.1} parent=1 // pred_region
      %115 = vsyncadd [#allocation12], 0
      %s116 = sshll.u32 %s7, 4
      %s117 = int_to_ptr.hbm [resolvable:$true] %s116
      %s118 = sshll.u32 [#allocation13], 4
      %s119 = int_to_ptr.vmem [resolvable:$true] %s118
      %124 = dma.hbm_to_vmem [thread:$0]  %s117, 3072, %s119, [#allocation12], 64, 64, 4
    $region33: #{pitch_classifier_forward.1} parent=1 // pred_fallthru
      _
    // Predicated region
    $region34: #{pitch_classifier_forward.1} parent=1 // pred_check
      _
    $region35: #{pitch_classifier_forward.1} parent=1 // pred_check_branch
      %126 = sbr.rel (0) target = $region37
    $region36: #{pitch_classifier_forward.1} parent=1 // pred_region
      %128 = vsyncadd [#allocation15], 0
      %s130 = sshll.u32 %s8, 4
      %s131 = int_to_ptr.hbm [resolvable:$true] %s130
      %s132 = sshll.u32 [#allocation14], 4
      %s133 = int_to_ptr.vmem [resolvable:$true] %s132
      %135 = dma.hbm_to_vmem [thread:$0]  %s131, 16, %s133, [#allocation15]
    $region37: #{pitch_classifier_forward.1} parent=1 // pred_fallthru
      _
    // Predicated region
    $region38: #{pitch_classifier_forward.1} parent=1 // pred_check
      _
    $region39: #{pitch_classifier_forward.1} parent=1 // pred_check_branch
      %137 = sbr.rel (0) target = $region41
    $region40: #{pitch_classifier_forward.1} parent=1 // pred_region
      %139 = vsyncadd [#allocation15], 0
      %s140 = sshll.u32 %s9, 4
      %s141 = int_to_ptr.hbm [resolvable:$true] %s140
      %s142 = sshll.u32 [#allocation16], 4
      %s143 = int_to_ptr.vmem [resolvable:$true] %s142
      %148 = dma.hbm_to_vmem [thread:$0]  %s141, 512, %s143, [#allocation15], 64, 64, 4
    $region41: #{pitch_classifier_forward.1} parent=1 // pred_fallthru
      _
    // Predicated region
    $region42: #{pitch_classifier_forward.1} parent=1 // pred_check
      _
    $region43: #{pitch_classifier_forward.1} parent=1 // pred_check_branch
      %150 = sbr.rel (0) target = $region45
    $region44: #{pitch_classifier_forward.1} parent=1 // pred_region
      %152 = vsyncadd [#allocation18], 0
      %s153 = sshll.u32 %s10, 4
      %s154 = int_to_ptr.hbm [resolvable:$true] %s153
      %s155 = sshll.u32 [#allocation17], 4
      %s156 = int_to_ptr.vmem [resolvable:$true] %s155
      %161 = dma.hbm_to_vmem [thread:$0]  %s154, 256, %s156, [#allocation18], 64, 64, 4
    $region45: #{pitch_classifier_forward.1} parent=1 // pred_fallthru
      _
    // Predicated region
    $region46: #{pitch_classifier_forward.1} parent=1 // pred_check
      _
    $region47: #{pitch_classifier_forward.1} parent=1 // pred_check_branch
      %163 = sbr.rel (0) target = $region49
    $region48: #{pitch_classifier_forward.1} parent=1 // pred_region
      %165 = vsyncadd [#allocation18], 0
      %s166 = sshll.u32 %s11, 4
      %s167 = int_to_ptr.hbm [resolvable:$true] %s166
      %s168 = sshll.u32 [#allocation19], 4
      %s169 = int_to_ptr.vmem [resolvable:$true] %s168
      %174 = dma.hbm_to_vmem [thread:$0]  %s167, 128, %s169, [#allocation18], 64, 64, 4
    $region49: #{pitch_classifier_forward.1} parent=1 // pred_fallthru
      _
    // Predicated region
    $region50: #{pitch_classifier_forward.1} parent=1 // pred_check
      _
    $region51: #{pitch_classifier_forward.1} parent=1 // pred_check_branch
      %176 = sbr.rel (0) target = $region53
    $region52: #{pitch_classifier_forward.1} parent=1 // pred_region
      %178 = vsyncadd [#allocation21], 0
      %s179 = sshll.u32 %s12, 4
      %s180 = int_to_ptr.hbm [resolvable:$true] %s179
      %s181 = sshll.u32 [#allocation20], 4
      %s182 = int_to_ptr.vmem [resolvable:$true] %s181
      %187 = dma.hbm_to_vmem [thread:$0]  %s180, 256, %s182, [#allocation21], 32, 32, 2
    $region53: #{pitch_classifier_forward.1} parent=1 // pred_fallthru
      _
    // Predicated region
    $region54: #{pitch_classifier_forward.1} parent=1 // pred_check
      _
    $region55: #{pitch_classifier_forward.1} parent=1 // pred_check_branch
      %189 = sbr.rel (0) target = $region57
    $region56: #{pitch_classifier_forward.1} parent=1 // pred_region
      %191 = vsyncadd [#allocation21], 0
      %s192 = sshll.u32 %s13, 4
      %s193 = int_to_ptr.hbm [resolvable:$true] %s192
      %s194 = sshll.u32 [#allocation22], 4
      %s195 = int_to_ptr.vmem [resolvable:$true] %s194
      %200 = dma.hbm_to_vmem [thread:$0]  %s193, 65536, %s195, [#allocation21], 512, 512, 32
    $region57: #{pitch_classifier_forward.1} parent=1 // pred_fallthru
      _
    // Predicated region
    $region58: #{pitch_classifier_forward.1} parent=1 // pred_check
      _
    $region59: #{pitch_classifier_forward.1} parent=1 // pred_check_branch
      %202 = sbr.rel (0) target = $region61
    $region60: #{pitch_classifier_forward.1} parent=1 // pred_region
      %204 = vsyncadd [#allocation24], 0
      %s206 = sshll.u32 %s14, 4
      %s207 = int_to_ptr.hbm [resolvable:$true] %s206
      %s208 = sshll.u32 [#allocation23], 4
      %s209 = int_to_ptr.vmem [resolvable:$true] %s208
      %211 = dma.hbm_to_vmem [thread:$0]  %s207, 64, %s209, [#allocation24]
    $region61: #{pitch_classifier_forward.1} parent=1 // pred_fallthru
      _
    // Predicated region
    $region62: #{pitch_classifier_forward.1} parent=1 // pred_check
      _
    $region63: #{pitch_classifier_forward.1} parent=1 // pred_check_branch
      %213 = sbr.rel (0) target = $region65
    $region64: #{pitch_classifier_forward.1} parent=1 // pred_region
      %215 = vsyncadd [#allocation24], 0
      %s216 = sshll.u32 %s15, 4
      %s217 = int_to_ptr.hbm [resolvable:$true] %s216
      %s218 = sshll.u32 [#allocation25], 4
      %s219 = int_to_ptr.vmem [resolvable:$true] %s218
      %224 = dma.hbm_to_vmem [thread:$0]  %s217, 16384, %s219, [#allocation24], 256, 256, 16
    $region65: #{pitch_classifier_forward.1} parent=1 // pred_fallthru
      _
    // Predicated region
    $region66: #{pitch_classifier_forward.1} parent=1 // pred_check
      _
    $region67: #{pitch_classifier_forward.1} parent=1 // pred_check_branch
      %226 = sbr.rel (0) target = $region69
    $region68: #{pitch_classifier_forward.1} parent=1 // pred_region
      %228 = vsyncadd [#allocation27], 0
      %s230 = sshll.u32 %s16, 4
      %s231 = int_to_ptr.hbm [resolvable:$true] %s230
      %s232 = sshll.u32 [#allocation26], 4
      %s233 = int_to_ptr.vmem [resolvable:$true] %s232
      %235 = dma.hbm_to_vmem [thread:$0]  %s231, 32, %s233, [#allocation27]
    $region69: #{pitch_classifier_forward.1} parent=1 // pred_fallthru
      _
    // Predicated region
    $region70: #{pitch_classifier_forward.1} parent=1 // pred_check
      _
    $region71: #{pitch_classifier_forward.1} parent=1 // pred_check_branch
      %237 = sbr.rel (0) target = $region73
    $region72: #{pitch_classifier_forward.1} parent=1 // pred_region
      %239 = vsyncadd [#allocation27], 0
      %s240 = sshll.u32 %s17, 4
      %s241 = int_to_ptr.hbm [resolvable:$true] %s240
      %s242 = sshll.u32 [#allocation28], 4
      %s243 = int_to_ptr.vmem [resolvable:$true] %s242
      %248 = dma.hbm_to_vmem [thread:$0]  %s241, 4096, %s243, [#allocation27], 128, 128, 8
    $region73: #{pitch_classifier_forward.1} parent=1 // pred_fallthru
      _
    // Predicated region
    $region74: #{pitch_classifier_forward.1} parent=1 // pred_check
      _
    $region75: #{pitch_classifier_forward.1} parent=1 // pred_check_branch
      %250 = sbr.rel (0) target = $region77
    $region76: #{pitch_classifier_forward.1} parent=1 // pred_region
      %252 = vsyncadd [#allocation30], 0
      %s254 = sshll.u32 %s18, 4
      %s255 = int_to_ptr.hbm [resolvable:$true] %s254
      %s256 = sshll.u32 [#allocation29], 4
      %s257 = int_to_ptr.vmem [resolvable:$true] %s256
      %259 = dma.hbm_to_vmem [thread:$0]  %s255, 16, %s257, [#allocation30]
    $region77: #{pitch_classifier_forward.1} parent=1 // pred_fallthru
      _
    // Predicated region
    $region78: #{pitch_classifier_forward.1} parent=1 // pred_check
      _
    $region79: #{pitch_classifier_forward.1} parent=1 // pred_check_branch
      %261 = sbr.rel (0) target = $region81
    $region80: #{pitch_classifier_forward.1} parent=1 // pred_region
      _
    $region81: #{pitch_classifier_forward.1} parent=1 // pred_fallthru
      _
    // Predicated region
    $region82: #{pitch_classifier_forward.1} parent=1 // pred_check
      _
    $region83: #{pitch_classifier_forward.1} parent=1 // pred_check_branch
      %263 = sbr.rel (0) target = $region85
    $region84: #{pitch_classifier_forward.1} parent=1 // pred_region
      _
    $region85: #{pitch_classifier_forward.1} parent=1 // pred_fallthru
      _
    // Predicated region
    $region86: #{pitch_classifier_forward.1} parent=1 // pred_check
      _
    $region87: #{pitch_classifier_forward.1} parent=1 // pred_check_branch
      %265 = sbr.rel (0) target = $region89
    $region88: #{pitch_classifier_forward.1} parent=1 // pred_region
      %267 = dma.done [#allocation4], 1536
    $region89: #{pitch_classifier_forward.1} parent=1 // pred_fallthru
      _
    // Predicated region
    $region90: #{pitch_classifier_forward.1} parent=1 // pred_check
      _
    $region91: #{pitch_classifier_forward.1} parent=1 // pred_check_branch
      %269 = sbr.rel (0) target = $region93
    $region92: #{pitch_classifier_forward.1} parent=1 // pred_region
      %271 = dma.done [#allocation6], 32
    $region93: #{pitch_classifier_forward.1} parent=1 // pred_fallthru
      _
    // Predicated region
    $region94: #{pitch_classifier_forward.1} parent=1 // pred_check
      _
    $region95: #{pitch_classifier_forward.1} parent=1 // pred_check_branch
      %273 = sbr.rel (0) target = $region97
    $region96: #{pitch_classifier_forward.1} parent=1 // pred_region
      %275 = dma.done [#allocation6], 12288
    $region97: #{pitch_classifier_forward.1} parent=1 // pred_fallthru
      _
    // Predicated region
    $region98: #{pitch_classifier_forward.1} parent=1 // pred_check
      _
    $region99: #{pitch_classifier_forward.1} parent=1 // pred_check_branch
      %277 = sbr.rel (0) target = $region101
    $region100: #{pitch_classifier_forward.1} parent=1 // pred_region
      %279 = dma.done [#allocation9], 32
    $region101: #{pitch_classifier_forward.1} parent=1 // pred_fallthru
      _
    // Predicated region
    $region102: #{pitch_classifier_forward.1} parent=1 // pred_check
      _
    $region103: #{pitch_classifier_forward.1} parent=1 // pred_check_branch
      %281 = sbr.rel (0) target = $region105
    $region104: #{pitch_classifier_forward.1} parent=1 // pred_region
      %283 = dma.done [#allocation9], 6144
    $region105: #{pitch_classifier_forward.1} parent=1 // pred_fallthru
      _
    // Predicated region
    $region106: #{pitch_classifier_forward.1} parent=1 // pred_check
      _
    $region107: #{pitch_classifier_forward.1} parent=1 // pred_check_branch
      %285 = sbr.rel (0) target = $region109
    $region108: #{pitch_classifier_forward.1} parent=1 // pred_region
      %287 = dma.done [#allocation12], 16
    $region109: #{pitch_classifier_forward.1} parent=1 // pred_fallthru
      _
    // Predicated region
    $region110: #{pitch_classifier_forward.1} parent=1 // pred_check
      _
    $region111: #{pitch_classifier_forward.1} parent=1 // pred_check_branch
      %289 = sbr.rel (0) target = $region113
    $region112: #{pitch_classifier_forward.1} parent=1 // pred_region
      %291 = dma.done [#allocation12], 3072
    $region113: #{pitch_classifier_forward.1} parent=1 // pred_fallthru
      _
    // Predicated region
    $region114: #{pitch_classifier_forward.1} parent=1 // pred_check
      _
    $region115: #{pitch_classifier_forward.1} parent=1 // pred_check_branch
      %293 = sbr.rel (0) target = $region117
    $region116: #{pitch_classifier_forward.1} parent=1 // pred_region
      %295 = dma.done [#allocation15], 16
    $region117: #{pitch_classifier_forward.1} parent=1 // pred_fallthru
      _
    // Predicated region
    $region118: #{pitch_classifier_forward.1} parent=1 // pred_check
      _
    $region119: #{pitch_classifier_forward.1} parent=1 // pred_check_branch
      %297 = sbr.rel (0) target = $region121
    $region120: #{pitch_classifier_forward.1} parent=1 // pred_region
      %299 = dma.done [#allocation15], 512
    $region121: #{pitch_classifier_forward.1} parent=1 // pred_fallthru
      _
    // Predicated region
    $region122: #{pitch_classifier_forward.1} parent=1 // pred_check
      _
    $region123: #{pitch_classifier_forward.1} parent=1 // pred_check_branch
      %301 = sbr.rel (0) target = $region125
    $region124: #{pitch_classifier_forward.1} parent=1 // pred_region
      %303 = dma.done [#allocation18], 256
    $region125: #{pitch_classifier_forward.1} parent=1 // pred_fallthru
      _
    // Predicated region
    $region126: #{pitch_classifier_forward.1} parent=1 // pred_check
      _
    $region127: #{pitch_classifier_forward.1} parent=1 // pred_check_branch
      %305 = sbr.rel (0) target = $region129
    $region128: #{pitch_classifier_forward.1} parent=1 // pred_region
      %307 = dma.done [#allocation18], 128
    $region129: #{pitch_classifier_forward.1} parent=1 // pred_fallthru
      _
    // Predicated region
    $region130: #{pitch_classifier_forward.1} parent=1 // pred_check
      _
    $region131: #{pitch_classifier_forward.1} parent=1 // pred_check_branch
      %309 = sbr.rel (0) target = $region133
    $region132: #{pitch_classifier_forward.1} parent=1 // pred_region
      %311 = dma.done [#allocation21], 256
    $region133: #{pitch_classifier_forward.1} parent=1 // pred_fallthru
      _
    // Predicated region
    $region134: #{pitch_classifier_forward.1} parent=1 // pred_check
      _
    $region135: #{pitch_classifier_forward.1} parent=1 // pred_check_branch
      %313 = sbr.rel (0) target = $region137
    $region136: #{pitch_classifier_forward.1} parent=1 // pred_region
      %315 = dma.done [#allocation21], 65536
    $region137: #{pitch_classifier_forward.1} parent=1 // pred_fallthru
      _
    // Predicated region
    $region138: #{pitch_classifier_forward.1} parent=1 // pred_check
      _
    $region139: #{pitch_classifier_forward.1} parent=1 // pred_check_branch
      %317 = sbr.rel (0) target = $region141
    $region140: #{pitch_classifier_forward.1} parent=1 // pred_region
      %319 = dma.done [#allocation24], 64
    $region141: #{pitch_classifier_forward.1} parent=1 // pred_fallthru
      _
    // Predicated region
    $region142: #{pitch_classifier_forward.1} parent=1 // pred_check
      _
    $region143: #{pitch_classifier_forward.1} parent=1 // pred_check_branch
      %321 = sbr.rel (0) target = $region145
    $region144: #{pitch_classifier_forward.1} parent=1 // pred_region
      %323 = dma.done [#allocation24], 16384
    $region145: #{pitch_classifier_forward.1} parent=1 // pred_fallthru
      _
    // Predicated region
    $region146: #{pitch_classifier_forward.1} parent=1 // pred_check
      _
    $region147: #{pitch_classifier_forward.1} parent=1 // pred_check_branch
      %325 = sbr.rel (0) target = $region149
    $region148: #{pitch_classifier_forward.1} parent=1 // pred_region
      %327 = dma.done [#allocation27], 32
    $region149: #{pitch_classifier_forward.1} parent=1 // pred_fallthru
      _
    // Predicated region
    $region150: #{pitch_classifier_forward.1} parent=1 // pred_check
      _
    $region151: #{pitch_classifier_forward.1} parent=1 // pred_check_branch
      %329 = sbr.rel (0) target = $region153
    $region152: #{pitch_classifier_forward.1} parent=1 // pred_region
      %331 = dma.done [#allocation27], 4096
    $region153: #{pitch_classifier_forward.1} parent=1 // pred_fallthru
      _
    // Predicated region
    $region154: #{pitch_classifier_forward.1} parent=1 // pred_check
      _
    $region155: #{pitch_classifier_forward.1} parent=1 // pred_check_branch
      %333 = sbr.rel (0) target = $region157
    $region156: #{pitch_classifier_forward.1} parent=1 // pred_region
      %335 = dma.done [#allocation30], 16
    $region157: #{pitch_classifier_forward.1} parent=1 // pred_fallthru
      _
    %v337 = vld [vmem:[%s0] sm:$0xff]
    %v338 = vld [vmem:[%s0 + $0x8] sm:$0xff]
    %v339 = vld [vmem:[%s0 + $0x10] sm:$0xff]
    %v340 = vld [vmem:[%s0 + $0x18] sm:$0xff]
    %v341 = vld [vmem:[%s0 + $0x20] sm:$0xff]
    %v342 = vld [vmem:[%s0 + $0x28] sm:$0xff]
    %v343 = vld [vmem:[%s0 + $0x30] sm:$0xff]
    %v344 = vld [vmem:[%s0 + $0x38] sm:$0xff]
    %v345 = vld [vmem:[%s0 + $0x40] sm:$0xff]
    %v346 = vld [vmem:[%s0 + $0x48] sm:$0xff]
    %v347 = vld [vmem:[%s0 + $0x50] sm:$0xff]
    %v348 = vld [vmem:[%s0 + $0x58] sm:$0xff]
    %v349 = vld [vmem:[%s0 + $0x60] sm:$0xff]
    %v350 = vld [vmem:[%s0 + $0x68] sm:$0xff]
    %v351 = vld [vmem:[%s0 + $0x70] sm:$0xff]
    %v352 = vld [vmem:[%s0 + $0x78] sm:$0xff]
    %v353 = vlaneseq
    %v354 = vshrl.u32 %v353, 7
    %v355 = vadd.s32 %v354, 8
    %v356 = vadd.s32 %v354, 16
    %v357 = vadd.s32 %v354, 24
    %v358 = vadd.s32 %v354, 32
    %v359 = vadd.s32 %v354, 40
    %v360 = vadd.s32 %v354, 48
    %v361 = vadd.s32 %v354, 56
    %v362 = vadd.s32 %v354, 64
    %v363 = vadd.s32 %v354, 72
    %v364 = vadd.s32 %v354, 80
    %v365 = vadd.s32 %v354, 88
    %v366 = vadd.s32 %v354, 96
    %v367 = vadd.s32 %v354, 104
    %v368 = vadd.s32 %v354, 112
    %v369 = vadd.s32 %v354, 120
    %v370 = vand.u32 %v354, 63
    %v371 = vand.u32 %v355, 63
    %v372 = vand.u32 %v356, 63
    %v373 = vand.u32 %v357, 63
    %v374 = vand.u32 %v358, 63
    %v375 = vand.u32 %v359, 63
    %v376 = vand.u32 %v360, 63
    %v377 = vand.u32 %v361, 63
    %v378 = vand.u32 %v362, 63
    %v379 = vand.u32 %v363, 63
    %v380 = vand.u32 %v364, 63
    %v381 = vand.u32 %v365, 63
    %v382 = vand.u32 %v366, 63
    %v383 = vand.u32 %v367, 63
    %v384 = vand.u32 %v368, 63
    %v385 = vand.u32 %v369, 63
    %vm386 = vcmp.ge.s32.totalorder %v370, 1
    %vm387 = vcmp.ge.s32.totalorder %v371, 1
    %vm388 = vcmp.ge.s32.totalorder %v372, 1
    %vm389 = vcmp.ge.s32.totalorder %v373, 1
    %vm390 = vcmp.ge.s32.totalorder %v374, 1
    %vm391 = vcmp.ge.s32.totalorder %v375, 1
    %vm392 = vcmp.ge.s32.totalorder %v376, 1
    %vm393 = vcmp.ge.s32.totalorder %v377, 1
    %vm394 = vcmp.ge.s32.totalorder %v378, 1
    %vm395 = vcmp.ge.s32.totalorder %v379, 1
    %vm396 = vcmp.ge.s32.totalorder %v380, 1
    %vm397 = vcmp.ge.s32.totalorder %v381, 1
    %vm398 = vcmp.ge.s32.totalorder %v382, 1
    %vm399 = vcmp.ge.s32.totalorder %v383, 1
    %vm400 = vcmp.ge.s32.totalorder %v384, 1
    %vm401 = vcmp.ge.s32.totalorder %v385, 1
    %v402 = vrot.slane %v337, 7
    %v403 = vrot.slane %v338, 7
    %v404 = vrot.slane %v339, 7
    %v405 = vrot.slane %v340, 7
    %v406 = vrot.slane %v341, 7
    %v407 = vrot.slane %v342, 7
    %v408 = vrot.slane %v343, 7
    %v409 = vrot.slane %v344, 7
    %v410 = vrot.slane %v345, 7
    %v411 = vrot.slane %v346, 7
    %v412 = vrot.slane %v347, 7
    %v413 = vrot.slane %v348, 7
    %v414 = vrot.slane %v349, 7
    %v415 = vrot.slane %v350, 7
    %v416 = vrot.slane %v351, 7
    %v417 = vrot.slane %v352, 7
    %vm418 = vcmp.lt.s32.totalorder %v354, 1
    %v419 = vsel %vm418, %v416, %v417
    %v420 = vsel %vm418, %v415, %v416
    %v421 = vsel %vm418, %v414, %v415
    %v422 = vsel %vm418, %v413, %v414
    %v423 = vsel %vm418, %v412, %v413
    %v424 = vsel %vm418, %v411, %v412
    %v425 = vsel %vm418, %v410, %v411
    %v426 = vsel %vm418, %v409, %v410
    %v427 = vsel %vm418, %v408, %v409
    %v428 = vsel %vm418, %v407, %v408
    %v429 = vsel %vm418, %v406, %v407
    %v430 = vsel %vm418, %v405, %v406
    %v431 = vsel %vm418, %v404, %v405
    %v432 = vsel %vm418, %v403, %v404
    %v433 = vsel %vm418, %v402, %v403
    %v434 = vsel %vm418, %v417, %v402
    %v435 = vsel %vm386, %v434, 0.0
    %v436 = vsel %vm387, %v433, 0.0
    %v437 = vsel %vm388, %v432, 0.0
    %v438 = vsel %vm389, %v431, 0.0
    %v439 = vsel %vm390, %v430, 0.0
    %v440 = vsel %vm391, %v429, 0.0
    %v441 = vsel %vm392, %v428, 0.0
    %v442 = vsel %vm393, %v427, 0.0
    %v443 = vsel %vm394, %v426, 0.0
    %v444 = vsel %vm395, %v425, 0.0
    %v445 = vsel %vm396, %v424, 0.0
    %v446 = vsel %vm397, %v423, 0.0
    %v447 = vsel %vm398, %v422, 0.0
    %v448 = vsel %vm399, %v421, 0.0
    %v449 = vsel %vm400, %v420, 0.0
    %v450 = vsel %vm401, %v419, 0.0
    %vm451 = vcmp.le.s32.totalorder %v370, 62
    %vm452 = vcmp.le.s32.totalorder %v371, 62
    %vm453 = vcmp.le.s32.totalorder %v372, 62
    %vm454 = vcmp.le.s32.totalorder %v373, 62
    %vm455 = vcmp.le.s32.totalorder %v374, 62
    %vm456 = vcmp.le.s32.totalorder %v375, 62
    %vm457 = vcmp.le.s32.totalorder %v376, 62
    %vm458 = vcmp.le.s32.totalorder %v377, 62
    %vm459 = vcmp.le.s32.totalorder %v378, 62
    %vm460 = vcmp.le.s32.totalorder %v379, 62
    %vm461 = vcmp.le.s32.totalorder %v380, 62
    %vm462 = vcmp.le.s32.totalorder %v381, 62
    %vm463 = vcmp.le.s32.totalorder %v382, 62
    %vm464 = vcmp.le.s32.totalorder %v383, 62
    %vm465 = vcmp.le.s32.totalorder %v384, 62
    %vm466 = vcmp.le.s32.totalorder %v385, 62
    %v467 = vrot.slane %v337, 1
    %v468 = vrot.slane %v338, 1
    %v469 = vrot.slane %v339, 1
    %v470 = vrot.slane %v340, 1
    %v471 = vrot.slane %v341, 1
    %v472 = vrot.slane %v342, 1
    %v473 = vrot.slane %v343, 1
    %v474 = vrot.slane %v344, 1
    %v475 = vrot.slane %v345, 1
    %v476 = vrot.slane %v346, 1
    %v477 = vrot.slane %v347, 1
    %v478 = vrot.slane %v348, 1
    %v479 = vrot.slane %v349, 1
    %v480 = vrot.slane %v350, 1
    %v481 = vrot.slane %v351, 1
    %v482 = vrot.slane %v352, 1
    %vm483 = vcmp.lt.s32.totalorder %v354, 7
    %v484 = vsel %vm483, %v481, %v482
    %v485 = vsel %vm483, %v480, %v481
    %v486 = vsel %vm483, %v479, %v480
    %v487 = vsel %vm483, %v478, %v479
    %v488 = vsel %vm483, %v477, %v478
    %v489 = vsel %vm483, %v476, %v477
    %v490 = vsel %vm483, %v475, %v476
    %v491 = vsel %vm483, %v474, %v475
    %v492 = vsel %vm483, %v473, %v474
    %v493 = vsel %vm483, %v472, %v473
    %v494 = vsel %vm483, %v471, %v472
    %v495 = vsel %vm483, %v470, %v471
    %v496 = vsel %vm483, %v469, %v470
    %v497 = vsel %vm483, %v468, %v469
    %v498 = vsel %vm483, %v467, %v468
    %v499 = vsel %vm483, %v482, %v467
    %v500 = vsel %vm451, %v498, 0.0
    %v501 = vsel %vm452, %v497, 0.0
    %v502 = vsel %vm453, %v496, 0.0
    %v503 = vsel %vm454, %v495, 0.0
    %v504 = vsel %vm455, %v494, 0.0
    %v505 = vsel %vm456, %v493, 0.0
    %v506 = vsel %vm457, %v492, 0.0
    %v507 = vsel %vm458, %v491, 0.0
    %v508 = vsel %vm459, %v490, 0.0
    %v509 = vsel %vm460, %v489, 0.0
    %v510 = vsel %vm461, %v488, 0.0
    %v511 = vsel %vm462, %v487, 0.0
    %v512 = vsel %vm463, %v486, 0.0
    %v513 = vsel %vm464, %v485, 0.0
    %v514 = vsel %vm465, %v484, 0.0
    %v515 = vsel %vm466, %v499, 0.0
    %v516 = vpack.c.bf16 %v436, %v435
    %v517 = vpack.c.bf16 %v438, %v437
    %v518 = vpack.c.bf16 %v440, %v439
    %v519 = vpack.c.bf16 %v442, %v441
    %v520 = vpack.c.bf16 %v444, %v443
    %v521 = vpack.c.bf16 %v446, %v445
    %v522 = vpack.c.bf16 %v448, %v447
    %v523 = vpack.c.bf16 %v450, %v449
    %v524 = vld [vmem:[#allocation3] sm:$0xff]
    %v525 = vld [vmem:[#allocation3 + $0x8] sm:$0xff]
    %v526 = vld [vmem:[#allocation3 + $0x10] sm:$0xff]
    %v527 = vld [vmem:[#allocation3 + $0x18] sm:$0xff]
    %v528 = vpack.c.bf16 %v338, %v337
    %v529 = vpack.c.bf16 %v340, %v339
    %v530 = vpack.c.bf16 %v342, %v341
    %v531 = vpack.c.bf16 %v344, %v343
    %v532 = vpack.c.bf16 %v346, %v345
    %v533 = vpack.c.bf16 %v348, %v347
    %v534 = vpack.c.bf16 %v350, %v349
    %v535 = vpack.c.bf16 %v352, %v351
    %s536 = scalar_lea.vmem [#allocation3], 32
    %v537 = vld [vmem:[%s536] sm:$0xff]
    %v538 = vld [vmem:[%s536 + $0x8] sm:$0xff]
    %v539 = vld [vmem:[%s536 + $0x10] sm:$0xff]
    %v540 = vld [vmem:[%s536 + $0x18] sm:$0xff]
    %v545 = vunpack.c.l.b16 %v537
    %v546 = vunpack.c.h.b16 %v537
    %v547 = vunpack.c.l.b16 %v538
    %v548 = vunpack.c.h.b16 %v538
    %v549 = vunpack.c.l.b16 %v539
    %v550 = vunpack.c.h.b16 %v539
    %v551 = vunpack.c.l.b16 %v540
    %v552 = vunpack.c.h.b16 %v540
    %v553 = vpack.c.b16 %v547, %v545
    %v554 = vpack.c.b16 %v548, %v546
    %v555 = vpack.c.b16 %v551, %v549
    %v556 = vpack.c.b16 %v552, %v550
    %vm561 = vcmask 261120
    %v563 = vsel %vm561, %v528, 0
    %v566 = vsel %vm561, %v529, 0
    %v569 = vsel %vm561, %v530, 0
    %v572 = vsel %vm561, %v531, 0
    %v575 = vsel %vm561, %v532, 0
    %v578 = vsel %vm561, %v533, 0
    %v581 = vsel %vm561, %v534, 0
    %v584 = vsel %vm561, %v535, 0
    %586 = vmatpush.bf16.msra.mxu0 0
    %587 = vmatpush.bf16.msra.mxu0 0
    %588 = vmatpush.bf16.msra.mxu0 0
    %589 = vmatpush.bf16.msra.mxu0 0
    %590 = vmatpush.bf16.msra.mxu0 0
    %591 = vmatpush.bf16.msra.mxu0 0
    %592 = vmatpush.bf16.msra.mxu0 %v555
    %593 = vmatpush.bf16.msra.mxu0 %v553
    %594 = vmatmul.bf16.gmra.mxu0 %v563
    %v595 = vpop.f32.mrf.mxu0
    %v596 = vadd.f32 0.0, %v595
    %v597 = vpop.f32.mrf.mxu0
    %v598 = vadd.f32 0.0, %v597
    %599 = vmatmul.bf16.gmra.mxu0 %v566
    %v600 = vpop.f32.mrf.mxu0
    %v601 = vadd.f32 0.0, %v600
    %v602 = vpop.f32.mrf.mxu0
    %v603 = vadd.f32 0.0, %v602
    %604 = vmatmul.bf16.gmra.mxu0 %v569
    %v605 = vpop.f32.mrf.mxu0
    %v606 = vadd.f32 0.0, %v605
    %v607 = vpop.f32.mrf.mxu0
    %v608 = vadd.f32 0.0, %v607
    %609 = vmatmul.bf16.gmra.mxu0 %v572
    %v610 = vpop.f32.mrf.mxu0
    %v611 = vadd.f32 0.0, %v610
    %v612 = vpop.f32.mrf.mxu0
    %v613 = vadd.f32 0.0, %v612
    %614 = vmatmul.bf16.gmra.mxu0 %v575
    %v615 = vpop.f32.mrf.mxu0
    %v616 = vadd.f32 0.0, %v615
    %v617 = vpop.f32.mrf.mxu0
    %v618 = vadd.f32 0.0, %v617
    %619 = vmatmul.bf16.gmra.mxu0 %v578
    %v620 = vpop.f32.mrf.mxu0
    %v621 = vadd.f32 0.0, %v620
    %v622 = vpop.f32.mrf.mxu0
    %v623 = vadd.f32 0.0, %v622
    %624 = vmatmul.bf16.gmra.mxu0 %v581
    %v625 = vpop.f32.mrf.mxu0
    %v626 = vadd.f32 0.0, %v625
    %v627 = vpop.f32.mrf.mxu0
    %v628 = vadd.f32 0.0, %v627
    %629 = vmatmul.bf16.gmra.mxu0 %v584
    %v630 = vpop.f32.mrf.mxu0
    %v631 = vadd.f32 0.0, %v630
    %v632 = vpop.f32.mrf.mxu0
    %v633 = vadd.f32 0.0, %v632
    %634 = vdwg.mxu0
    %635 = vmatpush.bf16.msra.mxu0 0
    %636 = vmatpush.bf16.msra.mxu0 0
    %637 = vmatpush.bf16.msra.mxu0 0
    %638 = vmatpush.bf16.msra.mxu0 0
    %639 = vmatpush.bf16.msra.mxu0 0
    %640 = vmatpush.bf16.msra.mxu0 0
    %641 = vmatpush.bf16.msra.mxu0 %v556
    %642 = vmatpush.bf16.msra.mxu0 %v554
    %643 = vmatmul.bf16.gmra.mxu0 %v563
    %v644 = vpop.f32.mrf.mxu0
    %v645 = vadd.f32 0.0, %v644
    %v646 = vpop.f32.mrf.mxu0
    %v647 = vadd.f32 0.0, %v646
    %648 = vmatmul.bf16.gmra.mxu0 %v566
    %v649 = vpop.f32.mrf.mxu0
    %v650 = vadd.f32 0.0, %v649
    %v651 = vpop.f32.mrf.mxu0
    %v652 = vadd.f32 0.0, %v651
    %653 = vmatmul.bf16.gmra.mxu0 %v569
    %v654 = vpop.f32.mrf.mxu0
    %v655 = vadd.f32 0.0, %v654
    %v656 = vpop.f32.mrf.mxu0
    %v657 = vadd.f32 0.0, %v656
    %658 = vmatmul.bf16.gmra.mxu0 %v572
    %v659 = vpop.f32.mrf.mxu0
    %v660 = vadd.f32 0.0, %v659
    %v661 = vpop.f32.mrf.mxu0
    %v662 = vadd.f32 0.0, %v661
    %663 = vmatmul.bf16.gmra.mxu0 %v575
    %v664 = vpop.f32.mrf.mxu0
    %v665 = vadd.f32 0.0, %v664
    %v666 = vpop.f32.mrf.mxu0
    %v667 = vadd.f32 0.0, %v666
    %668 = vmatmul.bf16.gmra.mxu0 %v578
    %v669 = vpop.f32.mrf.mxu0
    %v670 = vadd.f32 0.0, %v669
    %v671 = vpop.f32.mrf.mxu0
    %v672 = vadd.f32 0.0, %v671
    %673 = vmatmul.bf16.gmra.mxu0 %v581
    %v674 = vpop.f32.mrf.mxu0
    %v675 = vadd.f32 0.0, %v674
    %v676 = vpop.f32.mrf.mxu0
    %v677 = vadd.f32 0.0, %v676
    %678 = vmatmul.bf16.gmra.mxu0 %v584
    %v679 = vpop.f32.mrf.mxu0
    %v680 = vadd.f32 0.0, %v679
    %v681 = vpop.f32.mrf.mxu0
    %v682 = vadd.f32 0.0, %v681
    %683 = vdwg.mxu0
    %v688 = vunpack.c.l.b16 %v524
    %v689 = vunpack.c.h.b16 %v524
    %v690 = vunpack.c.l.b16 %v525
    %v691 = vunpack.c.h.b16 %v525
    %v692 = vunpack.c.l.b16 %v526
    %v693 = vunpack.c.h.b16 %v526
    %v694 = vunpack.c.l.b16 %v527
    %v695 = vunpack.c.h.b16 %v527
    %v696 = vpack.c.b16 %v690, %v688
    %v697 = vpack.c.b16 %v691, %v689
    %v698 = vpack.c.b16 %v694, %v692
    %v699 = vpack.c.b16 %v695, %v693
    %v705 = vsel %vm561, %v516, 0
    %v708 = vsel %vm561, %v517, 0
    %v711 = vsel %vm561, %v518, 0
    %v714 = vsel %vm561, %v519, 0
    %v717 = vsel %vm561, %v520, 0
    %v720 = vsel %vm561, %v521, 0
    %v723 = vsel %vm561, %v522, 0
    %v726 = vsel %vm561, %v523, 0
    %728 = vmatpush.bf16.msra.mxu0 0
    %729 = vmatpush.bf16.msra.mxu0 0
    %730 = vmatpush.bf16.msra.mxu0 0
    %731 = vmatpush.bf16.msra.mxu0 0
    %732 = vmatpush.bf16.msra.mxu0 0
    %733 = vmatpush.bf16.msra.mxu0 0
    %734 = vmatpush.bf16.msra.mxu0 %v698
    %735 = vmatpush.bf16.msra.mxu0 %v696
    %736 = vmatmul.bf16.gmra.mxu0 %v705
    %v737 = vpop.f32.mrf.mxu0
    %v738 = vadd.f32 %v596, %v737
    %v739 = vpop.f32.mrf.mxu0
    %v740 = vadd.f32 %v598, %v739
    %741 = vmatmul.bf16.gmra.mxu0 %v708
    %v742 = vpop.f32.mrf.mxu0
    %v743 = vadd.f32 %v601, %v742
    %v744 = vpop.f32.mrf.mxu0
    %v745 = vadd.f32 %v603, %v744
    %746 = vmatmul.bf16.gmra.mxu0 %v711
    %v747 = vpop.f32.mrf.mxu0
    %v748 = vadd.f32 %v606, %v747
    %v749 = vpop.f32.mrf.mxu0
    %v750 = vadd.f32 %v608, %v749
    %751 = vmatmul.bf16.gmra.mxu0 %v714
    %v752 = vpop.f32.mrf.mxu0
    %v753 = vadd.f32 %v611, %v752
    %v754 = vpop.f32.mrf.mxu0
    %v755 = vadd.f32 %v613, %v754
    %756 = vmatmul.bf16.gmra.mxu0 %v717
    %v757 = vpop.f32.mrf.mxu0
    %v758 = vadd.f32 %v616, %v757
    %v759 = vpop.f32.mrf.mxu0
    %v760 = vadd.f32 %v618, %v759
    %761 = vmatmul.bf16.gmra.mxu0 %v720
    %v762 = vpop.f32.mrf.mxu0
    %v763 = vadd.f32 %v621, %v762
    %v764 = vpop.f32.mrf.mxu0
    %v765 = vadd.f32 %v623, %v764
    %766 = vmatmul.bf16.gmra.mxu0 %v723
    %v767 = vpop.f32.mrf.mxu0
    %v768 = vadd.f32 %v626, %v767
    %v769 = vpop.f32.mrf.mxu0
    %v770 = vadd.f32 %v628, %v769
    %771 = vmatmul.bf16.gmra.mxu0 %v726
    %v772 = vpop.f32.mrf.mxu0
    %v773 = vadd.f32 %v631, %v772
    %v774 = vpop.f32.mrf.mxu0
    %v775 = vadd.f32 %v633, %v774
    %776 = vdwg.mxu0
    %777 = vmatpush.bf16.msra.mxu0 0
    %778 = vmatpush.bf16.msra.mxu0 0
    %779 = vmatpush.bf16.msra.mxu0 0
    %780 = vmatpush.bf16.msra.mxu0 0
    %781 = vmatpush.bf16.msra.mxu0 0
    %782 = vmatpush.bf16.msra.mxu0 0
    %783 = vmatpush.bf16.msra.mxu0 %v699
    %784 = vmatpush.bf16.msra.mxu0 %v697
    %785 = vmatmul.bf16.gmra.mxu0 %v705
    %v786 = vpop.f32.mrf.mxu0
    %v787 = vadd.f32 %v645, %v786
    %v788 = vpop.f32.mrf.mxu0
    %v789 = vadd.f32 %v647, %v788
    %790 = vmatmul.bf16.gmra.mxu0 %v708
    %v791 = vpop.f32.mrf.mxu0
    %v792 = vadd.f32 %v650, %v791
    %v793 = vpop.f32.mrf.mxu0
    %v794 = vadd.f32 %v652, %v793
    %795 = vmatmul.bf16.gmra.mxu0 %v711
    %v796 = vpop.f32.mrf.mxu0
    %v797 = vadd.f32 %v655, %v796
    %v798 = vpop.f32.mrf.mxu0
    %v799 = vadd.f32 %v657, %v798
    %800 = vmatmul.bf16.gmra.mxu0 %v714
    %v801 = vpop.f32.mrf.mxu0
    %v802 = vadd.f32 %v660, %v801
    %v803 = vpop.f32.mrf.mxu0
    %v804 = vadd.f32 %v662, %v803
    %805 = vmatmul.bf16.gmra.mxu0 %v717
    %v806 = vpop.f32.mrf.mxu0
    %v807 = vadd.f32 %v665, %v806
    %v808 = vpop.f32.mrf.mxu0
    %v809 = vadd.f32 %v667, %v808
    %810 = vmatmul.bf16.gmra.mxu0 %v720
    %v811 = vpop.f32.mrf.mxu0
    %v812 = vadd.f32 %v670, %v811
    %v813 = vpop.f32.mrf.mxu0
    %v814 = vadd.f32 %v672, %v813
    %815 = vmatmul.bf16.gmra.mxu0 %v723
    %v816 = vpop.f32.mrf.mxu0
    %v817 = vadd.f32 %v675, %v816
    %v818 = vpop.f32.mrf.mxu0
    %v819 = vadd.f32 %v677, %v818
    %820 = vmatmul.bf16.gmra.mxu0 %v726
    %v821 = vpop.f32.mrf.mxu0
    %v822 = vadd.f32 %v680, %v821
    %v823 = vpop.f32.mrf.mxu0
    %v824 = vadd.f32 %v682, %v823
    %825 = vdwg.mxu0
    %v826 = vpack.c.bf16 %v501, %v500
    %v827 = vpack.c.bf16 %v503, %v502
    %v828 = vpack.c.bf16 %v505, %v504
    %v829 = vpack.c.bf16 %v507, %v506
    %v830 = vpack.c.bf16 %v509, %v508
    %v831 = vpack.c.bf16 %v511, %v510
    %v832 = vpack.c.bf16 %v513, %v512
    %v833 = vpack.c.bf16 %v515, %v514
    %s834 = scalar_lea.vmem [#allocation3], 64
    %v835 = vld [vmem:[%s834] sm:$0xff]
    %v836 = vld [vmem:[%s834 + $0x8] sm:$0xff]
    %v837 = vld [vmem:[%s834 + $0x10] sm:$0xff]
    %v838 = vld [vmem:[%s834 + $0x18] sm:$0xff]
    %v843 = vunpack.c.l.b16 %v835
    %v844 = vunpack.c.h.b16 %v835
    %v845 = vunpack.c.l.b16 %v836
    %v846 = vunpack.c.h.b16 %v836
    %v847 = vunpack.c.l.b16 %v837
    %v848 = vunpack.c.h.b16 %v837
    %v849 = vunpack.c.l.b16 %v838
    %v850 = vunpack.c.h.b16 %v838
    %v851 = vpack.c.b16 %v845, %v843
    %v852 = vpack.c.b16 %v846, %v844
    %v853 = vpack.c.b16 %v849, %v847
    %v854 = vpack.c.b16 %v850, %v848
    %v860 = vsel %vm561, %v826, 0
    %v863 = vsel %vm561, %v827, 0
    %v866 = vsel %vm561, %v828, 0
    %v869 = vsel %vm561, %v829, 0
    %v872 = vsel %vm561, %v830, 0
    %v875 = vsel %vm561, %v831, 0
    %v878 = vsel %vm561, %v832, 0
    %v881 = vsel %vm561, %v833, 0
    %883 = vmatpush.bf16.msra.mxu0 0
    %884 = vmatpush.bf16.msra.mxu0 0
    %885 = vmatpush.bf16.msra.mxu0 0
    %886 = vmatpush.bf16.msra.mxu0 0
    %887 = vmatpush.bf16.msra.mxu0 0
    %888 = vmatpush.bf16.msra.mxu0 0
    %889 = vmatpush.bf16.msra.mxu0 %v853
    %890 = vmatpush.bf16.msra.mxu0 %v851
    %891 = vmatmul.bf16.gmra.mxu0 %v860
    %v892 = vpop.f32.mrf.mxu0
    %v893 = vadd.f32 0.0, %v892
    %v894 = vpop.f32.mrf.mxu0
    %v895 = vadd.f32 0.0, %v894
    %896 = vmatmul.bf16.gmra.mxu0 %v863
    %v897 = vpop.f32.mrf.mxu0
    %v898 = vadd.f32 0.0, %v897
    %v899 = vpop.f32.mrf.mxu0
    %v900 = vadd.f32 0.0, %v899
    %901 = vmatmul.bf16.gmra.mxu0 %v866
    %v902 = vpop.f32.mrf.mxu0
    %v903 = vadd.f32 0.0, %v902
    %v904 = vpop.f32.mrf.mxu0
    %v905 = vadd.f32 0.0, %v904
    %906 = vmatmul.bf16.gmra.mxu0 %v869
    %v907 = vpop.f32.mrf.mxu0
    %v908 = vadd.f32 0.0, %v907
    %v909 = vpop.f32.mrf.mxu0
    %v910 = vadd.f32 0.0, %v909
    %911 = vmatmul.bf16.gmra.mxu0 %v872
    %v912 = vpop.f32.mrf.mxu0
    %v913 = vadd.f32 0.0, %v912
    %v914 = vpop.f32.mrf.mxu0
    %v915 = vadd.f32 0.0, %v914
    %916 = vmatmul.bf16.gmra.mxu0 %v875
    %v917 = vpop.f32.mrf.mxu0
    %v918 = vadd.f32 0.0, %v917
    %v919 = vpop.f32.mrf.mxu0
    %v920 = vadd.f32 0.0, %v919
    %921 = vmatmul.bf16.gmra.mxu0 %v878
    %v922 = vpop.f32.mrf.mxu0
    %v923 = vadd.f32 0.0, %v922
    %v924 = vpop.f32.mrf.mxu0
    %v925 = vadd.f32 0.0, %v924
    %926 = vmatmul.bf16.gmra.mxu0 %v881
    %v927 = vpop.f32.mrf.mxu0
    %v928 = vadd.f32 0.0, %v927
    %v929 = vpop.f32.mrf.mxu0
    %v930 = vadd.f32 0.0, %v929
    %931 = vdwg.mxu0
    %932 = vmatpush.bf16.msra.mxu0 0
    %933 = vmatpush.bf16.msra.mxu0 0
    %934 = vmatpush.bf16.msra.mxu0 0
    %935 = vmatpush.bf16.msra.mxu0 0
    %936 = vmatpush.bf16.msra.mxu0 0
    %937 = vmatpush.bf16.msra.mxu0 0
    %938 = vmatpush.bf16.msra.mxu0 %v854
    %939 = vmatpush.bf16.msra.mxu0 %v852
    %940 = vmatmul.bf16.gmra.mxu0 %v860
    %v941 = vpop.f32.mrf.mxu0
    %v942 = vadd.f32 0.0, %v941
    %v943 = vpop.f32.mrf.mxu0
    %v944 = vadd.f32 0.0, %v943
    %945 = vmatmul.bf16.gmra.mxu0 %v863
    %v946 = vpop.f32.mrf.mxu0
    %v947 = vadd.f32 0.0, %v946
    %v948 = vpop.f32.mrf.mxu0
    %v949 = vadd.f32 0.0, %v948
    %950 = vmatmul.bf16.gmra.mxu0 %v866
    %v951 = vpop.f32.mrf.mxu0
    %v952 = vadd.f32 0.0, %v951
    %v953 = vpop.f32.mrf.mxu0
    %v954 = vadd.f32 0.0, %v953
    %955 = vmatmul.bf16.gmra.mxu0 %v869
    %v956 = vpop.f32.mrf.mxu0
    %v957 = vadd.f32 0.0, %v956
    %v958 = vpop.f32.mrf.mxu0
    %v959 = vadd.f32 0.0, %v958
    %960 = vmatmul.bf16.gmra.mxu0 %v872
    %v961 = vpop.f32.mrf.mxu0
    %v962 = vadd.f32 0.0, %v961
    %v963 = vpop.f32.mrf.mxu0
    %v964 = vadd.f32 0.0, %v963
    %965 = vmatmul.bf16.gmra.mxu0 %v875
    %v966 = vpop.f32.mrf.mxu0
    %v967 = vadd.f32 0.0, %v966
    %v968 = vpop.f32.mrf.mxu0
    %v969 = vadd.f32 0.0, %v968
    %970 = vmatmul.bf16.gmra.mxu0 %v878
    %v971 = vpop.f32.mrf.mxu0
    %v972 = vadd.f32 0.0, %v971
    %v973 = vpop.f32.mrf.mxu0
    %v974 = vadd.f32 0.0, %v973
    %975 = vmatmul.bf16.gmra.mxu0 %v881
    %v976 = vpop.f32.mrf.mxu0
    %v977 = vadd.f32 0.0, %v976
    %v978 = vpop.f32.mrf.mxu0
    %v979 = vadd.f32 0.0, %v978
    %980 = vdwg.mxu0
    %v981 = vadd.f32 %v738, %v893
    %v982 = vadd.f32 %v787, %v942
    %v983 = vadd.f32 %v740, %v895
    %v984 = vadd.f32 %v789, %v944
    %v985 = vadd.f32 %v743, %v898
    %v986 = vadd.f32 %v792, %v947
    %v987 = vadd.f32 %v745, %v900
    %v988 = vadd.f32 %v794, %v949
    %v989 = vadd.f32 %v748, %v903
    %v990 = vadd.f32 %v797, %v952
    %v991 = vadd.f32 %v750, %v905
    %v992 = vadd.f32 %v799, %v954
    %v993 = vadd.f32 %v753, %v908
    %v994 = vadd.f32 %v802, %v957
    %v995 = vadd.f32 %v755, %v910
    %v996 = vadd.f32 %v804, %v959
    %v997 = vadd.f32 %v758, %v913
    %v998 = vadd.f32 %v807, %v962
    %v999 = vadd.f32 %v760, %v915
    %v1000 = vadd.f32 %v809, %v964
    %v1001 = vadd.f32 %v763, %v918
    %v1002 = vadd.f32 %v812, %v967
    %v1003 = vadd.f32 %v765, %v920
    %v1004 = vadd.f32 %v814, %v969
    %v1005 = vadd.f32 %v768, %v923
    %v1006 = vadd.f32 %v817, %v972
    %v1007 = vadd.f32 %v770, %v925
    %v1008 = vadd.f32 %v819, %v974
    %v1009 = vadd.f32 %v773, %v928
    %v1010 = vadd.f32 %v822, %v977
    %v1011 = vadd.f32 %v775, %v930
    %v1012 = vadd.f32 %v824, %v979
    %v1013 = vld [vmem:[#allocation5] sm:$0x3]
    %v1015 = vperm.slane %v1013, 0
    %v1016 = vperm.slane %v1013, 1
    %v1019 = vadd.f32 %v981, %v1015
    %v1020 = vadd.f32 %v982, %v1016
    %v1021 = vadd.f32 %v983, %v1015
    %v1022 = vadd.f32 %v984, %v1016
    %v1023 = vadd.f32 %v985, %v1015
    %v1024 = vadd.f32 %v986, %v1016
    %v1025 = vadd.f32 %v987, %v1015
    %v1026 = vadd.f32 %v988, %v1016
    %v1027 = vadd.f32 %v989, %v1015
    %v1028 = vadd.f32 %v990, %v1016
    %v1029 = vadd.f32 %v991, %v1015
    %v1030 = vadd.f32 %v992, %v1016
    %v1031 = vadd.f32 %v993, %v1015
    %v1032 = vadd.f32 %v994, %v1016
    %v1033 = vadd.f32 %v995, %v1015
    %v1034 = vadd.f32 %v996, %v1016
    %v1035 = vadd.f32 %v997, %v1015
    %v1036 = vadd.f32 %v998, %v1016
    %v1037 = vadd.f32 %v999, %v1015
    %v1038 = vadd.f32 %v1000, %v1016
    %v1039 = vadd.f32 %v1001, %v1015
    %v1040 = vadd.f32 %v1002, %v1016
    %v1041 = vadd.f32 %v1003, %v1015
    %v1042 = vadd.f32 %v1004, %v1016
    %v1043 = vadd.f32 %v1005, %v1015
    %v1044 = vadd.f32 %v1006, %v1016
    %v1045 = vadd.f32 %v1007, %v1015
    %v1046 = vadd.f32 %v1008, %v1016
    %v1047 = vadd.f32 %v1009, %v1015
    %v1048 = vadd.f32 %v1010, %v1016
    %v1049 = vadd.f32 %v1011, %v1015
    %v1050 = vadd.f32 %v1012, %v1016
    %vm1051 = vcmp.ge.f32.partialorder %v1019, 0.0
    %vm1052 = vcmp.ge.f32.partialorder %v1020, 0.0
    %vm1053 = vcmp.ge.f32.partialorder %v1021, 0.0
    %vm1054 = vcmp.ge.f32.partialorder %v1022, 0.0
    %vm1055 = vcmp.ge.f32.partialorder %v1023, 0.0
    %vm1056 = vcmp.ge.f32.partialorder %v1024, 0.0
    %vm1057 = vcmp.ge.f32.partialorder %v1025, 0.0
    %vm1058 = vcmp.ge.f32.partialorder %v1026, 0.0
    %vm1059 = vcmp.ge.f32.partialorder %v1027, 0.0
    %vm1060 = vcmp.ge.f32.partialorder %v1028, 0.0
    %vm1061 = vcmp.ge.f32.partialorder %v1029, 0.0
    %vm1062 = vcmp.ge.f32.partialorder %v1030, 0.0
    %vm1063 = vcmp.ge.f32.partialorder %v1031, 0.0
    %vm1064 = vcmp.ge.f32.partialorder %v1032, 0.0
    %vm1065 = vcmp.ge.f32.partialorder %v1033, 0.0
    %vm1066 = vcmp.ge.f32.partialorder %v1034, 0.0
    %vm1067 = vcmp.ge.f32.partialorder %v1035, 0.0
    %vm1068 = vcmp.ge.f32.partialorder %v1036, 0.0
    %vm1069 = vcmp.ge.f32.partialorder %v1037, 0.0
    %vm1070 = vcmp.ge.f32.partialorder %v1038, 0.0
    %vm1071 = vcmp.ge.f32.partialorder %v1039, 0.0
    %vm1072 = vcmp.ge.f32.partialorder %v1040, 0.0
    %vm1073 = vcmp.ge.f32.partialorder %v1041, 0.0
    %vm1074 = vcmp.ge.f32.partialorder %v1042, 0.0
    %vm1075 = vcmp.ge.f32.partialorder %v1043, 0.0
    %vm1076 = vcmp.ge.f32.partialorder %v1044, 0.0
    %vm1077 = vcmp.ge.f32.partialorder %v1045, 0.0
    %vm1078 = vcmp.ge.f32.partialorder %v1046, 0.0
    %vm1079 = vcmp.ge.f32.partialorder %v1047, 0.0
    %vm1080 = vcmp.ge.f32.partialorder %v1048, 0.0
    %vm1081 = vcmp.ge.f32.partialorder %v1049, 0.0
    %vm1082 = vcmp.ge.f32.partialorder %v1050, 0.0
    %v1083 = vmul.f32 %v1019, 0.01
    %v1084 = vmul.f32 %v1020, 0.01
    %v1085 = vmul.f32 %v1021, 0.01
    %v1086 = vmul.f32 %v1022, 0.01
    %v1087 = vmul.f32 %v1023, 0.01
    %v1088 = vmul.f32 %v1024, 0.01
    %v1089 = vmul.f32 %v1025, 0.01
    %v1090 = vmul.f32 %v1026, 0.01
    %v1091 = vmul.f32 %v1027, 0.01
    %v1092 = vmul.f32 %v1028, 0.01
    %v1093 = vmul.f32 %v1029, 0.01
    %v1094 = vmul.f32 %v1030, 0.01
    %v1095 = vmul.f32 %v1031, 0.01
    %v1096 = vmul.f32 %v1032, 0.01
    %v1097 = vmul.f32 %v1033, 0.01
    %v1098 = vmul.f32 %v1034, 0.01
    %v1099 = vmul.f32 %v1035, 0.01
    %v1100 = vmul.f32 %v1036, 0.01
    %v1101 = vmul.f32 %v1037, 0.01
    %v1102 = vmul.f32 %v1038, 0.01
    %v1103 = vmul.f32 %v1039, 0.01
    %v1104 = vmul.f32 %v1040, 0.01
    %v1105 = vmul.f32 %v1041, 0.01
    %v1106 = vmul.f32 %v1042, 0.01
    %v1107 = vmul.f32 %v1043, 0.01
    %v1108 = vmul.f32 %v1044, 0.01
    %v1109 = vmul.f32 %v1045, 0.01
    %v1110 = vmul.f32 %v1046, 0.01
    %v1111 = vmul.f32 %v1047, 0.01
    %v1112 = vmul.f32 %v1048, 0.01
    %v1113 = vmul.f32 %v1049, 0.01
    %v1114 = vmul.f32 %v1050, 0.01
    %v1115 = vsel %vm1051, %v1019, %v1083
    %v1116 = vsel %vm1052, %v1020, %v1084
    %v1117 = vsel %vm1053, %v1021, %v1085
    %v1118 = vsel %vm1054, %v1022, %v1086
    %v1119 = vsel %vm1055, %v1023, %v1087
    %v1120 = vsel %vm1056, %v1024, %v1088
    %v1121 = vsel %vm1057, %v1025, %v1089
    %v1122 = vsel %vm1058, %v1026, %v1090
    %v1123 = vsel %vm1059, %v1027, %v1091
    %v1124 = vsel %vm1060, %v1028, %v1092
    %v1125 = vsel %vm1061, %v1029, %v1093
    %v1126 = vsel %vm1062, %v1030, %v1094
    %v1127 = vsel %vm1063, %v1031, %v1095
    %v1128 = vsel %vm1064, %v1032, %v1096
    %v1129 = vsel %vm1065, %v1033, %v1097
    %v1130 = vsel %vm1066, %v1034, %v1098
    %v1131 = vsel %vm1067, %v1035, %v1099
    %v1132 = vsel %vm1068, %v1036, %v1100
    %v1133 = vsel %vm1069, %v1037, %v1101
    %v1134 = vsel %vm1070, %v1038, %v1102
    %v1135 = vsel %vm1071, %v1039, %v1103
    %v1136 = vsel %vm1072, %v1040, %v1104
    %v1137 = vsel %vm1073, %v1041, %v1105
    %v1138 = vsel %vm1074, %v1042, %v1106
    %v1139 = vsel %vm1075, %v1043, %v1107
    %v1140 = vsel %vm1076, %v1044, %v1108
    %v1141 = vsel %vm1077, %v1045, %v1109
    %v1142 = vsel %vm1078, %v1046, %v1110
    %v1143 = vsel %vm1079, %v1047, %v1111
    %v1144 = vsel %vm1080, %v1048, %v1112
    %v1145 = vsel %vm1081, %v1049, %v1113
    %v1146 = vsel %vm1082, %v1050, %v1114
    %1147 = vrot.lane.b32.xlu0 %v1115, 120
    %v1148 = vpop.permute.xlu0 %1147
    %1149 = vrot.lane.b32.xlu0 %v1117, 120
    %v1150 = vpop.permute.xlu0 %1149
    %1151 = vrot.lane.b32.xlu0 %v1119, 120
    %v1152 = vpop.permute.xlu0 %1151
    %1153 = vrot.lane.b32.xlu0 %v1121, 120
    %v1154 = vpop.permute.xlu0 %1153
    %1155 = vrot.lane.b32.xlu0 %v1123, 120
    %v1156 = vpop.permute.xlu0 %1155
    %1157 = vrot.lane.b32.xlu0 %v1125, 120
    %v1158 = vpop.permute.xlu0 %1157
    %1159 = vrot.lane.b32.xlu0 %v1127, 120
    %v1160 = vpop.permute.xlu0 %1159
    %1161 = vrot.lane.b32.xlu0 %v1129, 120
    %v1162 = vpop.permute.xlu0 %1161
    %1163 = vrot.lane.b32.xlu0 %v1131, 120
    %v1164 = vpop.permute.xlu0 %1163
    %1165 = vrot.lane.b32.xlu0 %v1133, 120
    %v1166 = vpop.permute.xlu0 %1165
    %1167 = vrot.lane.b32.xlu0 %v1135, 120
    %v1168 = vpop.permute.xlu0 %1167
    %1169 = vrot.lane.b32.xlu0 %v1137, 120
    %v1170 = vpop.permute.xlu0 %1169
    %1171 = vrot.lane.b32.xlu0 %v1139, 120
    %v1172 = vpop.permute.xlu0 %1171
    %1173 = vrot.lane.b32.xlu0 %v1141, 120
    %v1174 = vpop.permute.xlu0 %1173
    %1175 = vrot.lane.b32.xlu0 %v1143, 120
    %v1176 = vpop.permute.xlu0 %1175
    %1177 = vrot.lane.b32.xlu0 %v1145, 120
    %v1178 = vpop.permute.xlu0 %1177
    %1179 = vrot.lane.b32.xlu0 %v1116, 120
    %v1180 = vpop.permute.xlu0 %1179
    %1181 = vrot.lane.b32.xlu0 %v1118, 120
    %v1182 = vpop.permute.xlu0 %1181
    %1183 = vrot.lane.b32.xlu0 %v1120, 120
    %v1184 = vpop.permute.xlu0 %1183
    %1185 = vrot.lane.b32.xlu0 %v1122, 120
    %v1186 = vpop.permute.xlu0 %1185
    %1187 = vrot.lane.b32.xlu0 %v1124, 120
    %v1188 = vpop.permute.xlu0 %1187
    %1189 = vrot.lane.b32.xlu0 %v1126, 120
    %v1190 = vpop.permute.xlu0 %1189
    %1191 = vrot.lane.b32.xlu0 %v1128, 120
    %v1192 = vpop.permute.xlu0 %1191
    %1193 = vrot.lane.b32.xlu0 %v1130, 120
    %v1194 = vpop.permute.xlu0 %1193
    %1195 = vrot.lane.b32.xlu0 %v1132, 120
    %v1196 = vpop.permute.xlu0 %1195
    %1197 = vrot.lane.b32.xlu0 %v1134, 120
    %v1198 = vpop.permute.xlu0 %1197
    %1199 = vrot.lane.b32.xlu0 %v1136, 120
    %v1200 = vpop.permute.xlu0 %1199
    %1201 = vrot.lane.b32.xlu0 %v1138, 120
    %v1202 = vpop.permute.xlu0 %1201
    %1203 = vrot.lane.b32.xlu0 %v1140, 120
    %v1204 = vpop.permute.xlu0 %1203
    %1205 = vrot.lane.b32.xlu0 %v1142, 120
    %v1206 = vpop.permute.xlu0 %1205
    %1207 = vrot.lane.b32.xlu0 %v1144, 120
    %v1208 = vpop.permute.xlu0 %1207
    %1209 = vrot.lane.b32.xlu0 %v1146, 120
    %v1210 = vpop.permute.xlu0 %1209
    %v1211 = vlaneseq
    %v1212 = vand.u32 %v1211, 127
    %vm1213 = vcmp.lt.s32.totalorder %v1212, 120
    %v1214 = vsel %vm1213, %v1148, %v1180
    %v1215 = vsel %vm1213, %v1150, %v1182
    %v1216 = vsel %vm1213, %v1152, %v1184
    %v1217 = vsel %vm1213, %v1154, %v1186
    %v1218 = vsel %vm1213, %v1156, %v1188
    %v1219 = vsel %vm1213, %v1158, %v1190
    %v1220 = vsel %vm1213, %v1160, %v1192
    %v1221 = vsel %vm1213, %v1162, %v1194
    %v1222 = vsel %vm1213, %v1164, %v1196
    %v1223 = vsel %vm1213, %v1166, %v1198
    %v1224 = vsel %vm1213, %v1168, %v1200
    %v1225 = vsel %vm1213, %v1170, %v1202
    %v1226 = vsel %vm1213, %v1172, %v1204
    %v1227 = vsel %vm1213, %v1174, %v1206
    %v1228 = vsel %vm1213, %v1176, %v1208
    %v1229 = vsel %vm1213, %v1178, %v1210
    %v1230 = vsel %vm1213, %v1180, %v1148
    %v1231 = vsel %vm1213, %v1182, %v1150
    %v1232 = vsel %vm1213, %v1184, %v1152
    %v1233 = vsel %vm1213, %v1186, %v1154
    %v1234 = vsel %vm1213, %v1188, %v1156
    %v1235 = vsel %vm1213, %v1190, %v1158
    %v1236 = vsel %vm1213, %v1192, %v1160
    %v1237 = vsel %vm1213, %v1194, %v1162
    %v1238 = vsel %vm1213, %v1196, %v1164
    %v1239 = vsel %vm1213, %v1198, %v1166
    %v1240 = vsel %vm1213, %v1200, %v1168
    %v1241 = vsel %vm1213, %v1202, %v1170
    %v1242 = vsel %vm1213, %v1204, %v1172
    %v1243 = vsel %vm1213, %v1206, %v1174
    %v1244 = vsel %vm1213, %v1208, %v1176
    %v1245 = vsel %vm1213, %v1210, %v1178
    %v1246 = vmax.f32 %v1115, %v1214
    %v1247 = vmax.f32 %v1116, %v1230
    %v1248 = vmax.f32 %v1117, %v1215
    %v1249 = vmax.f32 %v1118, %v1231
    %v1250 = vmax.f32 %v1119, %v1216
    %v1251 = vmax.f32 %v1120, %v1232
    %v1252 = vmax.f32 %v1121, %v1217
    %v1253 = vmax.f32 %v1122, %v1233
    %v1254 = vmax.f32 %v1123, %v1218
    %v1255 = vmax.f32 %v1124, %v1234
    %v1256 = vmax.f32 %v1125, %v1219
    %v1257 = vmax.f32 %v1126, %v1235
    %v1258 = vmax.f32 %v1127, %v1220
    %v1259 = vmax.f32 %v1128, %v1236
    %v1260 = vmax.f32 %v1129, %v1221
    %v1261 = vmax.f32 %v1130, %v1237
    %v1262 = vmax.f32 %v1131, %v1222
    %v1263 = vmax.f32 %v1132, %v1238
    %v1264 = vmax.f32 %v1133, %v1223
    %v1265 = vmax.f32 %v1134, %v1239
    %v1266 = vmax.f32 %v1135, %v1224
    %v1267 = vmax.f32 %v1136, %v1240
    %v1268 = vmax.f32 %v1137, %v1225
    %v1269 = vmax.f32 %v1138, %v1241
    %v1270 = vmax.f32 %v1139, %v1226
    %v1271 = vmax.f32 %v1140, %v1242
    %v1272 = vmax.f32 %v1141, %v1227
    %v1273 = vmax.f32 %v1142, %v1243
    %v1274 = vmax.f32 %v1143, %v1228
    %v1275 = vmax.f32 %v1144, %v1244
    %v1276 = vmax.f32 %v1145, %v1229
    %v1277 = vmax.f32 %v1146, %v1245
    %v1278 = vrot.slane %v1246, 1
    %v1279 = vrot.slane %v1247, 1
    %v1280 = vrot.slane %v1248, 1
    %v1281 = vrot.slane %v1249, 1
    %v1282 = vrot.slane %v1250, 1
    %v1283 = vrot.slane %v1251, 1
    %v1284 = vrot.slane %v1252, 1
    %v1285 = vrot.slane %v1253, 1
    %v1286 = vrot.slane %v1254, 1
    %v1287 = vrot.slane %v1255, 1
    %v1288 = vrot.slane %v1256, 1
    %v1289 = vrot.slane %v1257, 1
    %v1290 = vrot.slane %v1258, 1
    %v1291 = vrot.slane %v1259, 1
    %v1292 = vrot.slane %v1260, 1
    %v1293 = vrot.slane %v1261, 1
    %v1294 = vrot.slane %v1262, 1
    %v1295 = vrot.slane %v1263, 1
    %v1296 = vrot.slane %v1264, 1
    %v1297 = vrot.slane %v1265, 1
    %v1298 = vrot.slane %v1266, 1
    %v1299 = vrot.slane %v1267, 1
    %v1300 = vrot.slane %v1268, 1
    %v1301 = vrot.slane %v1269, 1
    %v1302 = vrot.slane %v1270, 1
    %v1303 = vrot.slane %v1271, 1
    %v1304 = vrot.slane %v1272, 1
    %v1305 = vrot.slane %v1273, 1
    %v1306 = vrot.slane %v1274, 1
    %v1307 = vrot.slane %v1275, 1
    %v1308 = vrot.slane %v1276, 1
    %v1309 = vrot.slane %v1277, 1
    %v1310 = vsel %vm483, %v1306, %v1308
    %v1311 = vsel %vm483, %v1307, %v1309
    %v1312 = vsel %vm483, %v1304, %v1306
    %v1313 = vsel %vm483, %v1305, %v1307
    %v1314 = vsel %vm483, %v1302, %v1304
    %v1315 = vsel %vm483, %v1303, %v1305
    %v1316 = vsel %vm483, %v1300, %v1302
    %v1317 = vsel %vm483, %v1301, %v1303
    %v1318 = vsel %vm483, %v1298, %v1300
    %v1319 = vsel %vm483, %v1299, %v1301
    %v1320 = vsel %vm483, %v1296, %v1298
    %v1321 = vsel %vm483, %v1297, %v1299
    %v1322 = vsel %vm483, %v1294, %v1296
    %v1323 = vsel %vm483, %v1295, %v1297
    %v1324 = vsel %vm483, %v1292, %v1294
    %v1325 = vsel %vm483, %v1293, %v1295
    %v1326 = vsel %vm483, %v1290, %v1292
    %v1327 = vsel %vm483, %v1291, %v1293
    %v1328 = vsel %vm483, %v1288, %v1290
    %v1329 = vsel %vm483, %v1289, %v1291
    %v1330 = vsel %vm483, %v1286, %v1288
    %v1331 = vsel %vm483, %v1287, %v1289
    %v1332 = vsel %vm483, %v1284, %v1286
    %v1333 = vsel %vm483, %v1285, %v1287
    %v1334 = vsel %vm483, %v1282, %v1284
    %v1335 = vsel %vm483, %v1283, %v1285
    %v1336 = vsel %vm483, %v1280, %v1282
    %v1337 = vsel %vm483, %v1281, %v1283
    %v1338 = vsel %vm483, %v1278, %v1280
    %v1339 = vsel %vm483, %v1279, %v1281
    %v1340 = vsel %vm483, %v1308, %v1278
    %v1341 = vsel %vm483, %v1309, %v1279
    %v1342 = vmax.f32 %v1246, %v1338
    %v1343 = vmax.f32 %v1247, %v1339
    %v1344 = vmax.f32 %v1248, %v1336
    %v1345 = vmax.f32 %v1249, %v1337
    %v1346 = vmax.f32 %v1250, %v1334
    %v1347 = vmax.f32 %v1251, %v1335
    %v1348 = vmax.f32 %v1252, %v1332
    %v1349 = vmax.f32 %v1253, %v1333
    %v1350 = vmax.f32 %v1254, %v1330
    %v1351 = vmax.f32 %v1255, %v1331
    %v1352 = vmax.f32 %v1256, %v1328
    %v1353 = vmax.f32 %v1257, %v1329
    %v1354 = vmax.f32 %v1258, %v1326
    %v1355 = vmax.f32 %v1259, %v1327
    %v1356 = vmax.f32 %v1260, %v1324
    %v1357 = vmax.f32 %v1261, %v1325
    %v1358 = vmax.f32 %v1262, %v1322
    %v1359 = vmax.f32 %v1263, %v1323
    %v1360 = vmax.f32 %v1264, %v1320
    %v1361 = vmax.f32 %v1265, %v1321
    %v1362 = vmax.f32 %v1266, %v1318
    %v1363 = vmax.f32 %v1267, %v1319
    %v1364 = vmax.f32 %v1268, %v1316
    %v1365 = vmax.f32 %v1269, %v1317
    %v1366 = vmax.f32 %v1270, %v1314
    %v1367 = vmax.f32 %v1271, %v1315
    %v1368 = vmax.f32 %v1272, %v1312
    %v1369 = vmax.f32 %v1273, %v1313
    %v1370 = vmax.f32 %v1274, %v1310
    %v1371 = vmax.f32 %v1275, %v1311
    %v1372 = vmax.f32 %v1276, %v1340
    %v1373 = vmax.f32 %v1277, %v1341
    %v1374 = vld [vmem:[#allocation16] sm:$0xf]
    %v1375 = vld [vmem:[#allocation16 + $0x4] sm:$0xf]
    %v1376 = vld [vmem:[#allocation16 + $0x8] sm:$0xf]
    %v1377 = vld [vmem:[#allocation16 + $0xc] sm:$0xf]
    %v1378 = vld [vmem:[#allocation16 + $0x10] sm:$0xf]
    %v1379 = vld [vmem:[#allocation16 + $0x14] sm:$0xf]
    %v1380 = vld [vmem:[#allocation16 + $0x18] sm:$0xf]
    %v1381 = vld [vmem:[#allocation16 + $0x1c] sm:$0xf]
    %v1382 = vpack.c.bf16 %v1344, %v1342
    %v1383 = vpack.c.bf16 %v1345, %v1343
    %v1384 = vpack.c.bf16 %v1348, %v1346
    %v1385 = vpack.c.bf16 %v1349, %v1347
    %v1386 = vpack.c.bf16 %v1352, %v1350
    %v1387 = vpack.c.bf16 %v1353, %v1351
    %v1388 = vpack.c.bf16 %v1356, %v1354
    %v1389 = vpack.c.bf16 %v1357, %v1355
    %v1390 = vpack.c.bf16 %v1360, %v1358
    %v1391 = vpack.c.bf16 %v1361, %v1359
    %v1392 = vpack.c.bf16 %v1364, %v1362
    %v1393 = vpack.c.bf16 %v1365, %v1363
    %v1394 = vpack.c.bf16 %v1368, %v1366
    %v1395 = vpack.c.bf16 %v1369, %v1367
    %v1396 = vpack.c.bf16 %v1372, %v1370
    %v1397 = vpack.c.bf16 %v1373, %v1371
    %v1406 = vunpack.c.l.b16 %v1374
    %v1407 = vunpack.c.l.b16 %v1375
    %v1408 = vunpack.c.l.b16 %v1376
    %v1409 = vunpack.c.l.b16 %v1377
    %v1410 = vunpack.c.l.b16 %v1378
    %v1411 = vunpack.c.l.b16 %v1379
    %v1412 = vunpack.c.l.b16 %v1380
    %v1413 = vunpack.c.l.b16 %v1381
    %v1414 = vpack.c.b16 %v1407, %v1406
    %v1415 = vpack.c.b16 %v1409, %v1408
    %v1416 = vpack.c.b16 %v1411, %v1410
    %v1417 = vpack.c.b16 %v1413, %v1412
    %1422 = vmatpush.bf16.msra.mxu0 %v1396
    %1423 = vmatpush.bf16.msra.mxu0 %v1394
    %1424 = vmatpush.bf16.msra.mxu0 %v1392
    %1425 = vmatpush.bf16.msra.mxu0 %v1390
    %1426 = vmatpush.bf16.msra.mxu0 %v1388
    %1427 = vmatpush.bf16.msra.mxu0 %v1386
    %1428 = vmatpush.bf16.msra.mxu0 %v1384
    %1429 = vmatpush.bf16.msra.mxu0 %v1382
    %1430 = vmatmul.bf16.gmra.mxu0 %v1414
    %v1431 = vpop.f32.mrf.mxu0
    %v1432 = vadd.f32 0.0, %v1431
    %v1433 = vpop.f32.mrf.mxu0
    %v1434 = vadd.f32 0.0, %v1433
    %1435 = vmatmul.bf16.gmra.mxu0 %v1415
    %v1436 = vpop.f32.mrf.mxu0
    %v1437 = vadd.f32 0.0, %v1436
    %v1438 = vpop.f32.mrf.mxu0
    %v1439 = vadd.f32 0.0, %v1438
    %1440 = vmatmul.bf16.gmra.mxu0 %v1416
    %v1441 = vpop.f32.mrf.mxu0
    %v1442 = vadd.f32 0.0, %v1441
    %v1443 = vpop.f32.mrf.mxu0
    %v1444 = vadd.f32 0.0, %v1443
    %1445 = vmatmul.bf16.gmra.mxu0 %v1417
    %v1446 = vpop.f32.mrf.mxu0
    %v1447 = vadd.f32 0.0, %v1446
    %v1448 = vpop.f32.mrf.mxu0
    %v1449 = vadd.f32 0.0, %v1448
    %1450 = vdwg.mxu0
    %1451 = vmatpush.bf16.msra.mxu0 %v1397
    %1452 = vmatpush.bf16.msra.mxu0 %v1395
    %1453 = vmatpush.bf16.msra.mxu0 %v1393
    %1454 = vmatpush.bf16.msra.mxu0 %v1391
    %1455 = vmatpush.bf16.msra.mxu0 %v1389
    %1456 = vmatpush.bf16.msra.mxu0 %v1387
    %1457 = vmatpush.bf16.msra.mxu0 %v1385
    %1458 = vmatpush.bf16.msra.mxu0 %v1383
    %1459 = vmatmul.bf16.gmra.mxu0 %v1414
    %v1460 = vpop.f32.mrf.mxu0
    %v1461 = vadd.f32 0.0, %v1460
    %v1462 = vpop.f32.mrf.mxu0
    %v1463 = vadd.f32 0.0, %v1462
    %1464 = vmatmul.bf16.gmra.mxu0 %v1415
    %v1465 = vpop.f32.mrf.mxu0
    %v1466 = vadd.f32 0.0, %v1465
    %v1467 = vpop.f32.mrf.mxu0
    %v1468 = vadd.f32 0.0, %v1467
    %1469 = vmatmul.bf16.gmra.mxu0 %v1416
    %v1470 = vpop.f32.mrf.mxu0
    %v1471 = vadd.f32 0.0, %v1470
    %v1472 = vpop.f32.mrf.mxu0
    %v1473 = vadd.f32 0.0, %v1472
    %1474 = vmatmul.bf16.gmra.mxu0 %v1417
    %v1475 = vpop.f32.mrf.mxu0
    %v1476 = vadd.f32 0.0, %v1475
    %v1477 = vpop.f32.mrf.mxu0
    %v1478 = vadd.f32 0.0, %v1477
    %1479 = vdwg.mxu0
    %v1480 = vand.u32 %v354, 31
    %v1481 = vand.u32 %v355, 31
    %v1482 = vand.u32 %v356, 31
    %v1483 = vand.u32 %v357, 31
    %v1484 = vand.u32 %v358, 31
    %v1485 = vand.u32 %v359, 31
    %v1486 = vand.u32 %v360, 31
    %v1487 = vand.u32 %v361, 31
    %vm1488 = vcmp.ge.s32.totalorder %v1480, 1
    %vm1489 = vcmp.ge.s32.totalorder %v1481, 1
    %vm1490 = vcmp.ge.s32.totalorder %v1482, 1
    %vm1491 = vcmp.ge.s32.totalorder %v1483, 1
    %vm1492 = vcmp.ge.s32.totalorder %v1484, 1
    %vm1493 = vcmp.ge.s32.totalorder %v1485, 1
    %vm1494 = vcmp.ge.s32.totalorder %v1486, 1
    %vm1495 = vcmp.ge.s32.totalorder %v1487, 1
    %v1496 = vrot.slane %v1432, 7
    %v1497 = vrot.slane %v1461, 7
    %v1498 = vrot.slane %v1434, 7
    %v1499 = vrot.slane %v1463, 7
    %v1500 = vrot.slane %v1437, 7
    %v1501 = vrot.slane %v1466, 7
    %v1502 = vrot.slane %v1439, 7
    %v1503 = vrot.slane %v1468, 7
    %v1504 = vrot.slane %v1442, 7
    %v1505 = vrot.slane %v1471, 7
    %v1506 = vrot.slane %v1444, 7
    %v1507 = vrot.slane %v1473, 7
    %v1508 = vrot.slane %v1447, 7
    %v1509 = vrot.slane %v1476, 7
    %v1510 = vrot.slane %v1449, 7
    %v1511 = vrot.slane %v1478, 7
    %v1512 = vsel %vm418, %v1508, %v1510
    %v1513 = vsel %vm418, %v1509, %v1511
    %v1514 = vsel %vm418, %v1506, %v1508
    %v1515 = vsel %vm418, %v1507, %v1509
    %v1516 = vsel %vm418, %v1504, %v1506
    %v1517 = vsel %vm418, %v1505, %v1507
    %v1518 = vsel %vm418, %v1502, %v1504
    %v1519 = vsel %vm418, %v1503, %v1505
    %v1520 = vsel %vm418, %v1500, %v1502
    %v1521 = vsel %vm418, %v1501, %v1503
    %v1522 = vsel %vm418, %v1498, %v1500
    %v1523 = vsel %vm418, %v1499, %v1501
    %v1524 = vsel %vm418, %v1496, %v1498
    %v1525 = vsel %vm418, %v1497, %v1499
    %v1526 = vsel %vm418, %v1510, %v1496
    %v1527 = vsel %vm418, %v1511, %v1497
    %v1528 = vsel %vm1488, %v1526, 0.0
    %v1529 = vsel %vm1488, %v1527, 0.0
    %v1530 = vsel %vm1489, %v1524, 0.0
    %v1531 = vsel %vm1489, %v1525, 0.0
    %v1532 = vsel %vm1490, %v1522, 0.0
    %v1533 = vsel %vm1490, %v1523, 0.0
    %v1534 = vsel %vm1491, %v1520, 0.0
    %v1535 = vsel %vm1491, %v1521, 0.0
    %v1536 = vsel %vm1492, %v1518, 0.0
    %v1537 = vsel %vm1492, %v1519, 0.0
    %v1538 = vsel %vm1493, %v1516, 0.0
    %v1539 = vsel %vm1493, %v1517, 0.0
    %v1540 = vsel %vm1494, %v1514, 0.0
    %v1541 = vsel %vm1494, %v1515, 0.0
    %v1542 = vsel %vm1495, %v1512, 0.0
    %v1543 = vsel %vm1495, %v1513, 0.0
    %vm1544 = vcmp.le.s32.totalorder %v1480, 30
    %vm1545 = vcmp.le.s32.totalorder %v1481, 30
    %vm1546 = vcmp.le.s32.totalorder %v1482, 30
    %vm1547 = vcmp.le.s32.totalorder %v1483, 30
    %vm1548 = vcmp.le.s32.totalorder %v1484, 30
    %vm1549 = vcmp.le.s32.totalorder %v1485, 30
    %vm1550 = vcmp.le.s32.totalorder %v1486, 30
    %vm1551 = vcmp.le.s32.totalorder %v1487, 30
    %v1552 = vrot.slane %v1432, 1
    %v1553 = vrot.slane %v1461, 1
    %v1554 = vrot.slane %v1434, 1
    %v1555 = vrot.slane %v1463, 1
    %v1556 = vrot.slane %v1437, 1
    %v1557 = vrot.slane %v1466, 1
    %v1558 = vrot.slane %v1439, 1
    %v1559 = vrot.slane %v1468, 1
    %v1560 = vrot.slane %v1442, 1
    %v1561 = vrot.slane %v1471, 1
    %v1562 = vrot.slane %v1444, 1
    %v1563 = vrot.slane %v1473, 1
    %v1564 = vrot.slane %v1447, 1
    %v1565 = vrot.slane %v1476, 1
    %v1566 = vrot.slane %v1449, 1
    %v1567 = vrot.slane %v1478, 1
    %v1568 = vsel %vm483, %v1564, %v1566
    %v1569 = vsel %vm483, %v1565, %v1567
    %v1570 = vsel %vm483, %v1562, %v1564
    %v1571 = vsel %vm483, %v1563, %v1565
    %v1572 = vsel %vm483, %v1560, %v1562
    %v1573 = vsel %vm483, %v1561, %v1563
    %v1574 = vsel %vm483, %v1558, %v1560
    %v1575 = vsel %vm483, %v1559, %v1561
    %v1576 = vsel %vm483, %v1556, %v1558
    %v1577 = vsel %vm483, %v1557, %v1559
    %v1578 = vsel %vm483, %v1554, %v1556
    %v1579 = vsel %vm483, %v1555, %v1557
    %v1580 = vsel %vm483, %v1552, %v1554
    %v1581 = vsel %vm483, %v1553, %v1555
    %v1582 = vsel %vm483, %v1566, %v1552
    %v1583 = vsel %vm483, %v1567, %v1553
    %v1584 = vsel %vm1544, %v1580, 0.0
    %v1585 = vsel %vm1544, %v1581, 0.0
    %v1586 = vsel %vm1545, %v1578, 0.0
    %v1587 = vsel %vm1545, %v1579, 0.0
    %v1588 = vsel %vm1546, %v1576, 0.0
    %v1589 = vsel %vm1546, %v1577, 0.0
    %v1590 = vsel %vm1547, %v1574, 0.0
    %v1591 = vsel %vm1547, %v1575, 0.0
    %v1592 = vsel %vm1548, %v1572, 0.0
    %v1593 = vsel %vm1548, %v1573, 0.0
    %v1594 = vsel %vm1549, %v1570, 0.0
    %v1595 = vsel %vm1549, %v1571, 0.0
    %v1596 = vsel %vm1550, %v1568, 0.0
    %v1597 = vsel %vm1550, %v1569, 0.0
    %v1598 = vsel %vm1551, %v1582, 0.0
    %v1599 = vsel %vm1551, %v1583, 0.0
    %v1600 = vpack.c.bf16 %v1530, %v1528
    %v1601 = vpack.c.bf16 %v1531, %v1529
    %v1602 = vpack.c.bf16 %v1534, %v1532
    %v1603 = vpack.c.bf16 %v1535, %v1533
    %v1604 = vpack.c.bf16 %v1538, %v1536
    %v1605 = vpack.c.bf16 %v1539, %v1537
    %v1606 = vpack.c.bf16 %v1542, %v1540
    %v1607 = vpack.c.bf16 %v1543, %v1541
    %v1608 = vld [vmem:[#allocation7] sm:$0xff]
    %v1609 = vld [vmem:[#allocation7 + $0x8] sm:$0xff]
    %v1610 = vld [vmem:[#allocation7 + $0x10] sm:$0xff]
    %v1611 = vld [vmem:[#allocation7 + $0x18] sm:$0xff]
    %v1612 = vld [vmem:[#allocation7 + $0x20] sm:$0xff]
    %v1613 = vld [vmem:[#allocation7 + $0x28] sm:$0xff]
    %v1614 = vld [vmem:[#allocation7 + $0x30] sm:$0xff]
    %v1615 = vld [vmem:[#allocation7 + $0x38] sm:$0xff]
    %v1616 = vld [vmem:[#allocation7 + $0x40] sm:$0xff]
    %v1617 = vld [vmem:[#allocation7 + $0x48] sm:$0xff]
    %v1618 = vld [vmem:[#allocation7 + $0x50] sm:$0xff]
    %v1619 = vld [vmem:[#allocation7 + $0x58] sm:$0xff]
    %v1620 = vld [vmem:[#allocation7 + $0x60] sm:$0xff]
    %v1621 = vld [vmem:[#allocation7 + $0x68] sm:$0xff]
    %v1622 = vld [vmem:[#allocation7 + $0x70] sm:$0xff]
    %v1623 = vld [vmem:[#allocation7 + $0x78] sm:$0xff]
    %v1624 = vld [vmem:[#allocation7 + $0x80] sm:$0xff]
    %v1625 = vld [vmem:[#allocation7 + $0x88] sm:$0xff]
    %v1626 = vld [vmem:[#allocation7 + $0x90] sm:$0xff]
    %v1627 = vld [vmem:[#allocation7 + $0x98] sm:$0xff]
    %v1628 = vld [vmem:[#allocation7 + $0xa0] sm:$0xff]
    %v1629 = vld [vmem:[#allocation7 + $0xa8] sm:$0xff]
    %v1630 = vld [vmem:[#allocation7 + $0xb0] sm:$0xff]
    %v1631 = vld [vmem:[#allocation7 + $0xb8] sm:$0xff]
    %v1632 = vld [vmem:[#allocation7 + $0xc0] sm:$0xff]
    %v1633 = vld [vmem:[#allocation7 + $0xc8] sm:$0xff]
    %v1634 = vld [vmem:[#allocation7 + $0xd0] sm:$0xff]
    %v1635 = vld [vmem:[#allocation7 + $0xd8] sm:$0xff]
    %v1636 = vld [vmem:[#allocation7 + $0xe0] sm:$0xff]
    %v1637 = vld [vmem:[#allocation7 + $0xe8] sm:$0xff]
    %v1638 = vld [vmem:[#allocation7 + $0xf0] sm:$0xff]
    %v1639 = vld [vmem:[#allocation7 + $0xf8] sm:$0xff]
    %v1640 = vpack.c.bf16 %v1434, %v1432
    %v1641 = vpack.c.bf16 %v1463, %v1461
    %v1642 = vpack.c.bf16 %v1439, %v1437
    %v1643 = vpack.c.bf16 %v1468, %v1466
    %v1644 = vpack.c.bf16 %v1444, %v1442
    %v1645 = vpack.c.bf16 %v1473, %v1471
    %v1646 = vpack.c.bf16 %v1449, %v1447
    %v1647 = vpack.c.bf16 %v1478, %v1476
    %s1648 = scalar_lea.vmem [#allocation7], 256
    %v1649 = vld [vmem:[%s1648] sm:$0xff]
    %v1650 = vld [vmem:[%s1648 + $0x8] sm:$0xff]
    %v1651 = vld [vmem:[%s1648 + $0x10] sm:$0xff]
    %v1652 = vld [vmem:[%s1648 + $0x18] sm:$0xff]
    %v1653 = vld [vmem:[%s1648 + $0x20] sm:$0xff]
    %v1654 = vld [vmem:[%s1648 + $0x28] sm:$0xff]
    %v1655 = vld [vmem:[%s1648 + $0x30] sm:$0xff]
    %v1656 = vld [vmem:[%s1648 + $0x38] sm:$0xff]
    %v1657 = vld [vmem:[%s1648 + $0x40] sm:$0xff]
    %v1658 = vld [vmem:[%s1648 + $0x48] sm:$0xff]
    %v1659 = vld [vmem:[%s1648 + $0x50] sm:$0xff]
    %v1660 = vld [vmem:[%s1648 + $0x58] sm:$0xff]
    %v1661 = vld [vmem:[%s1648 + $0x60] sm:$0xff]
    %v1662 = vld [vmem:[%s1648 + $0x68] sm:$0xff]
    %v1663 = vld [vmem:[%s1648 + $0x70] sm:$0xff]
    %v1664 = vld [vmem:[%s1648 + $0x78] sm:$0xff]
    %v1665 = vld [vmem:[%s1648 + $0x80] sm:$0xff]
    %v1666 = vld [vmem:[%s1648 + $0x88] sm:$0xff]
    %v1667 = vld [vmem:[%s1648 + $0x90] sm:$0xff]
    %v1668 = vld [vmem:[%s1648 + $0x98] sm:$0xff]
    %v1669 = vld [vmem:[%s1648 + $0xa0] sm:$0xff]
    %v1670 = vld [vmem:[%s1648 + $0xa8] sm:$0xff]
    %v1671 = vld [vmem:[%s1648 + $0xb0] sm:$0xff]
    %v1672 = vld [vmem:[%s1648 + $0xb8] sm:$0xff]
    %v1673 = vld [vmem:[%s1648 + $0xc0] sm:$0xff]
    %v1674 = vld [vmem:[%s1648 + $0xc8] sm:$0xff]
    %v1675 = vld [vmem:[%s1648 + $0xd0] sm:$0xff]
    %v1676 = vld [vmem:[%s1648 + $0xd8] sm:$0xff]
    %v1677 = vld [vmem:[%s1648 + $0xe0] sm:$0xff]
    %v1678 = vld [vmem:[%s1648 + $0xe8] sm:$0xff]
    %v1679 = vld [vmem:[%s1648 + $0xf0] sm:$0xff]
    %v1680 = vld [vmem:[%s1648 + $0xf8] sm:$0xff]
    %v1713 = vunpack.c.l.b16 %v1649
    %v1714 = vunpack.c.h.b16 %v1649
    %v1715 = vunpack.c.l.b16 %v1650
    %v1716 = vunpack.c.h.b16 %v1650
    %v1717 = vunpack.c.l.b16 %v1651
    %v1718 = vunpack.c.h.b16 %v1651
    %v1719 = vunpack.c.l.b16 %v1652
    %v1720 = vunpack.c.h.b16 %v1652
    %v1721 = vunpack.c.l.b16 %v1653
    %v1722 = vunpack.c.h.b16 %v1653
    %v1723 = vunpack.c.l.b16 %v1654
    %v1724 = vunpack.c.h.b16 %v1654
    %v1725 = vunpack.c.l.b16 %v1655
    %v1726 = vunpack.c.h.b16 %v1655
    %v1727 = vunpack.c.l.b16 %v1656
    %v1728 = vunpack.c.h.b16 %v1656
    %v1729 = vunpack.c.l.b16 %v1657
    %v1730 = vunpack.c.h.b16 %v1657
    %v1731 = vunpack.c.l.b16 %v1658
    %v1732 = vunpack.c.h.b16 %v1658
    %v1733 = vunpack.c.l.b16 %v1659
    %v1734 = vunpack.c.h.b16 %v1659
    %v1735 = vunpack.c.l.b16 %v1660
    %v1736 = vunpack.c.h.b16 %v1660
    %v1737 = vunpack.c.l.b16 %v1661
    %v1738 = vunpack.c.h.b16 %v1661
    %v1739 = vunpack.c.l.b16 %v1662
    %v1740 = vunpack.c.h.b16 %v1662
    %v1741 = vunpack.c.l.b16 %v1663
    %v1742 = vunpack.c.h.b16 %v1663
    %v1743 = vunpack.c.l.b16 %v1664
    %v1744 = vunpack.c.h.b16 %v1664
    %v1745 = vunpack.c.l.b16 %v1665
    %v1746 = vunpack.c.h.b16 %v1665
    %v1747 = vunpack.c.l.b16 %v1666
    %v1748 = vunpack.c.h.b16 %v1666
    %v1749 = vunpack.c.l.b16 %v1667
    %v1750 = vunpack.c.h.b16 %v1667
    %v1751 = vunpack.c.l.b16 %v1668
    %v1752 = vunpack.c.h.b16 %v1668
    %v1753 = vunpack.c.l.b16 %v1669
    %v1754 = vunpack.c.h.b16 %v1669
    %v1755 = vunpack.c.l.b16 %v1670
    %v1756 = vunpack.c.h.b16 %v1670
    %v1757 = vunpack.c.l.b16 %v1671
    %v1758 = vunpack.c.h.b16 %v1671
    %v1759 = vunpack.c.l.b16 %v1672
    %v1760 = vunpack.c.h.b16 %v1672
    %v1761 = vunpack.c.l.b16 %v1673
    %v1762 = vunpack.c.h.b16 %v1673
    %v1763 = vunpack.c.l.b16 %v1674
    %v1764 = vunpack.c.h.b16 %v1674
    %v1765 = vunpack.c.l.b16 %v1675
    %v1766 = vunpack.c.h.b16 %v1675
    %v1767 = vunpack.c.l.b16 %v1676
    %v1768 = vunpack.c.h.b16 %v1676
    %v1769 = vunpack.c.l.b16 %v1677
    %v1770 = vunpack.c.h.b16 %v1677
    %v1771 = vunpack.c.l.b16 %v1678
    %v1772 = vunpack.c.h.b16 %v1678
    %v1773 = vunpack.c.l.b16 %v1679
    %v1774 = vunpack.c.h.b16 %v1679
    %v1775 = vunpack.c.l.b16 %v1680
    %v1776 = vunpack.c.h.b16 %v1680
    %v1777 = vpack.c.b16 %v1715, %v1713
    %v1778 = vpack.c.b16 %v1716, %v1714
    %v1779 = vpack.c.b16 %v1719, %v1717
    %v1780 = vpack.c.b16 %v1720, %v1718
    %v1781 = vpack.c.b16 %v1723, %v1721
    %v1782 = vpack.c.b16 %v1724, %v1722
    %v1783 = vpack.c.b16 %v1727, %v1725
    %v1784 = vpack.c.b16 %v1728, %v1726
    %v1785 = vpack.c.b16 %v1731, %v1729
    %v1786 = vpack.c.b16 %v1732, %v1730
    %v1787 = vpack.c.b16 %v1735, %v1733
    %v1788 = vpack.c.b16 %v1736, %v1734
    %v1789 = vpack.c.b16 %v1739, %v1737
    %v1790 = vpack.c.b16 %v1740, %v1738
    %v1791 = vpack.c.b16 %v1743, %v1741
    %v1792 = vpack.c.b16 %v1744, %v1742
    %v1793 = vpack.c.b16 %v1747, %v1745
    %v1794 = vpack.c.b16 %v1748, %v1746
    %v1795 = vpack.c.b16 %v1751, %v1749
    %v1796 = vpack.c.b16 %v1752, %v1750
    %v1797 = vpack.c.b16 %v1755, %v1753
    %v1798 = vpack.c.b16 %v1756, %v1754
    %v1799 = vpack.c.b16 %v1759, %v1757
    %v1800 = vpack.c.b16 %v1760, %v1758
    %v1801 = vpack.c.b16 %v1763, %v1761
    %v1802 = vpack.c.b16 %v1764, %v1762
    %v1803 = vpack.c.b16 %v1767, %v1765
    %v1804 = vpack.c.b16 %v1768, %v1766
    %v1805 = vpack.c.b16 %v1771, %v1769
    %v1806 = vpack.c.b16 %v1772, %v1770
    %v1807 = vpack.c.b16 %v1775, %v1773
    %v1808 = vpack.c.b16 %v1776, %v1774
    %1841 = vmatpush.bf16.msra.mxu0 %v1791
    %1842 = vmatpush.bf16.msra.mxu0 %v1789
    %1843 = vmatpush.bf16.msra.mxu0 %v1787
    %1844 = vmatpush.bf16.msra.mxu0 %v1785
    %1845 = vmatpush.bf16.msra.mxu0 %v1783
    %1846 = vmatpush.bf16.msra.mxu0 %v1781
    %1847 = vmatpush.bf16.msra.mxu0 %v1779
    %1848 = vmatpush.bf16.msra.mxu0 %v1777
    %1849 = vmatmul.bf16.gmra.mxu0 %v1640
    %v1850 = vpop.f32.mrf.mxu0
    %v1851 = vadd.f32 0.0, %v1850
    %v1852 = vpop.f32.mrf.mxu0
    %v1853 = vadd.f32 0.0, %v1852
    %1854 = vmatmul.bf16.gmra.mxu0 %v1642
    %v1855 = vpop.f32.mrf.mxu0
    %v1856 = vadd.f32 0.0, %v1855
    %v1857 = vpop.f32.mrf.mxu0
    %v1858 = vadd.f32 0.0, %v1857
    %1859 = vmatmul.bf16.gmra.mxu0 %v1644
    %v1860 = vpop.f32.mrf.mxu0
    %v1861 = vadd.f32 0.0, %v1860
    %v1862 = vpop.f32.mrf.mxu0
    %v1863 = vadd.f32 0.0, %v1862
    %1864 = vmatmul.bf16.gmra.mxu0 %v1646
    %v1865 = vpop.f32.mrf.mxu0
    %v1866 = vadd.f32 0.0, %v1865
    %v1867 = vpop.f32.mrf.mxu0
    %v1868 = vadd.f32 0.0, %v1867
    %1869 = vdwg.mxu0
    %1870 = vmatpush.bf16.msra.mxu0 %v1807
    %1871 = vmatpush.bf16.msra.mxu0 %v1805
    %1872 = vmatpush.bf16.msra.mxu0 %v1803
    %1873 = vmatpush.bf16.msra.mxu0 %v1801
    %1874 = vmatpush.bf16.msra.mxu0 %v1799
    %1875 = vmatpush.bf16.msra.mxu0 %v1797
    %1876 = vmatpush.bf16.msra.mxu0 %v1795
    %1877 = vmatpush.bf16.msra.mxu0 %v1793
    %1878 = vmatmul.bf16.gmra.mxu0 %v1641
    %v1879 = vpop.f32.mrf.mxu0
    %v1880 = vadd.f32 %v1851, %v1879
    %v1881 = vpop.f32.mrf.mxu0
    %v1882 = vadd.f32 %v1853, %v1881
    %1883 = vmatmul.bf16.gmra.mxu0 %v1643
    %v1884 = vpop.f32.mrf.mxu0
    %v1885 = vadd.f32 %v1856, %v1884
    %v1886 = vpop.f32.mrf.mxu0
    %v1887 = vadd.f32 %v1858, %v1886
    %1888 = vmatmul.bf16.gmra.mxu0 %v1645
    %v1889 = vpop.f32.mrf.mxu0
    %v1890 = vadd.f32 %v1861, %v1889
    %v1891 = vpop.f32.mrf.mxu0
    %v1892 = vadd.f32 %v1863, %v1891
    %1893 = vmatmul.bf16.gmra.mxu0 %v1647
    %v1894 = vpop.f32.mrf.mxu0
    %v1895 = vadd.f32 %v1866, %v1894
    %v1896 = vpop.f32.mrf.mxu0
    %v1897 = vadd.f32 %v1868, %v1896
    %1898 = vdwg.mxu0
    %1899 = vmatpush.bf16.msra.mxu0 %v1792
    %1900 = vmatpush.bf16.msra.mxu0 %v1790
    %1901 = vmatpush.bf16.msra.mxu0 %v1788
    %1902 = vmatpush.bf16.msra.mxu0 %v1786
    %1903 = vmatpush.bf16.msra.mxu0 %v1784
    %1904 = vmatpush.bf16.msra.mxu0 %v1782
    %1905 = vmatpush.bf16.msra.mxu0 %v1780
    %1906 = vmatpush.bf16.msra.mxu0 %v1778
    %1907 = vmatmul.bf16.gmra.mxu0 %v1640
    %v1908 = vpop.f32.mrf.mxu0
    %v1909 = vadd.f32 0.0, %v1908
    %v1910 = vpop.f32.mrf.mxu0
    %v1911 = vadd.f32 0.0, %v1910
    %1912 = vmatmul.bf16.gmra.mxu0 %v1642
    %v1913 = vpop.f32.mrf.mxu0
    %v1914 = vadd.f32 0.0, %v1913
    %v1915 = vpop.f32.mrf.mxu0
    %v1916 = vadd.f32 0.0, %v1915
    %1917 = vmatmul.bf16.gmra.mxu0 %v1644
    %v1918 = vpop.f32.mrf.mxu0
    %v1919 = vadd.f32 0.0, %v1918
    %v1920 = vpop.f32.mrf.mxu0
    %v1921 = vadd.f32 0.0, %v1920
    %1922 = vmatmul.bf16.gmra.mxu0 %v1646
    %v1923 = vpop.f32.mrf.mxu0
    %v1924 = vadd.f32 0.0, %v1923
    %v1925 = vpop.f32.mrf.mxu0
    %v1926 = vadd.f32 0.0, %v1925
    %1927 = vdwg.mxu0
    %1928 = vmatpush.bf16.msra.mxu0 %v1808
    %1929 = vmatpush.bf16.msra.mxu0 %v1806
    %1930 = vmatpush.bf16.msra.mxu0 %v1804
    %1931 = vmatpush.bf16.msra.mxu0 %v1802
    %1932 = vmatpush.bf16.msra.mxu0 %v1800
    %1933 = vmatpush.bf16.msra.mxu0 %v1798
    %1934 = vmatpush.bf16.msra.mxu0 %v1796
    %1935 = vmatpush.bf16.msra.mxu0 %v1794
    %1936 = vmatmul.bf16.gmra.mxu0 %v1641
    %v1937 = vpop.f32.mrf.mxu0
    %v1938 = vadd.f32 %v1909, %v1937
    %v1939 = vpop.f32.mrf.mxu0
    %v1940 = vadd.f32 %v1911, %v1939
    %1941 = vmatmul.bf16.gmra.mxu0 %v1643
    %v1942 = vpop.f32.mrf.mxu0
    %v1943 = vadd.f32 %v1914, %v1942
    %v1944 = vpop.f32.mrf.mxu0
    %v1945 = vadd.f32 %v1916, %v1944
    %1946 = vmatmul.bf16.gmra.mxu0 %v1645
    %v1947 = vpop.f32.mrf.mxu0
    %v1948 = vadd.f32 %v1919, %v1947
    %v1949 = vpop.f32.mrf.mxu0
    %v1950 = vadd.f32 %v1921, %v1949
    %1951 = vmatmul.bf16.gmra.mxu0 %v1647
    %v1952 = vpop.f32.mrf.mxu0
    %v1953 = vadd.f32 %v1924, %v1952
    %v1954 = vpop.f32.mrf.mxu0
    %v1955 = vadd.f32 %v1926, %v1954
    %1956 = vdwg.mxu0
    %v1989 = vunpack.c.l.b16 %v1608
    %v1990 = vunpack.c.h.b16 %v1608
    %v1991 = vunpack.c.l.b16 %v1609
    %v1992 = vunpack.c.h.b16 %v1609
    %v1993 = vunpack.c.l.b16 %v1610
    %v1994 = vunpack.c.h.b16 %v1610
    %v1995 = vunpack.c.l.b16 %v1611
    %v1996 = vunpack.c.h.b16 %v1611
    %v1997 = vunpack.c.l.b16 %v1612
    %v1998 = vunpack.c.h.b16 %v1612
    %v1999 = vunpack.c.l.b16 %v1613
    %v2000 = vunpack.c.h.b16 %v1613
    %v2001 = vunpack.c.l.b16 %v1614
    %v2002 = vunpack.c.h.b16 %v1614
    %v2003 = vunpack.c.l.b16 %v1615
    %v2004 = vunpack.c.h.b16 %v1615
    %v2005 = vunpack.c.l.b16 %v1616
    %v2006 = vunpack.c.h.b16 %v1616
    %v2007 = vunpack.c.l.b16 %v1617
    %v2008 = vunpack.c.h.b16 %v1617
    %v2009 = vunpack.c.l.b16 %v1618
    %v2010 = vunpack.c.h.b16 %v1618
    %v2011 = vunpack.c.l.b16 %v1619
    %v2012 = vunpack.c.h.b16 %v1619
    %v2013 = vunpack.c.l.b16 %v1620
    %v2014 = vunpack.c.h.b16 %v1620
    %v2015 = vunpack.c.l.b16 %v1621
    %v2016 = vunpack.c.h.b16 %v1621
    %v2017 = vunpack.c.l.b16 %v1622
    %v2018 = vunpack.c.h.b16 %v1622
    %v2019 = vunpack.c.l.b16 %v1623
    %v2020 = vunpack.c.h.b16 %v1623
    %v2021 = vunpack.c.l.b16 %v1624
    %v2022 = vunpack.c.h.b16 %v1624
    %v2023 = vunpack.c.l.b16 %v1625
    %v2024 = vunpack.c.h.b16 %v1625
    %v2025 = vunpack.c.l.b16 %v1626
    %v2026 = vunpack.c.h.b16 %v1626
    %v2027 = vunpack.c.l.b16 %v1627
    %v2028 = vunpack.c.h.b16 %v1627
    %v2029 = vunpack.c.l.b16 %v1628
    %v2030 = vunpack.c.h.b16 %v1628
    %v2031 = vunpack.c.l.b16 %v1629
    %v2032 = vunpack.c.h.b16 %v1629
    %v2033 = vunpack.c.l.b16 %v1630
    %v2034 = vunpack.c.h.b16 %v1630
    %v2035 = vunpack.c.l.b16 %v1631
    %v2036 = vunpack.c.h.b16 %v1631
    %v2037 = vunpack.c.l.b16 %v1632
    %v2038 = vunpack.c.h.b16 %v1632
    %v2039 = vunpack.c.l.b16 %v1633
    %v2040 = vunpack.c.h.b16 %v1633
    %v2041 = vunpack.c.l.b16 %v1634
    %v2042 = vunpack.c.h.b16 %v1634
    %v2043 = vunpack.c.l.b16 %v1635
    %v2044 = vunpack.c.h.b16 %v1635
    %v2045 = vunpack.c.l.b16 %v1636
    %v2046 = vunpack.c.h.b16 %v1636
    %v2047 = vunpack.c.l.b16 %v1637
    %v2048 = vunpack.c.h.b16 %v1637
    %v2049 = vunpack.c.l.b16 %v1638
    %v2050 = vunpack.c.h.b16 %v1638
    %v2051 = vunpack.c.l.b16 %v1639
    %v2052 = vunpack.c.h.b16 %v1639
    %v2053 = vpack.c.b16 %v1991, %v1989
    %v2054 = vpack.c.b16 %v1992, %v1990
    %v2055 = vpack.c.b16 %v1995, %v1993
    %v2056 = vpack.c.b16 %v1996, %v1994
    %v2057 = vpack.c.b16 %v1999, %v1997
    %v2058 = vpack.c.b16 %v2000, %v1998
    %v2059 = vpack.c.b16 %v2003, %v2001
    %v2060 = vpack.c.b16 %v2004, %v2002
    %v2061 = vpack.c.b16 %v2007, %v2005
    %v2062 = vpack.c.b16 %v2008, %v2006
    %v2063 = vpack.c.b16 %v2011, %v2009
    %v2064 = vpack.c.b16 %v2012, %v2010
    %v2065 = vpack.c.b16 %v2015, %v2013
    %v2066 = vpack.c.b16 %v2016, %v2014
    %v2067 = vpack.c.b16 %v2019, %v2017
    %v2068 = vpack.c.b16 %v2020, %v2018
    %v2069 = vpack.c.b16 %v2023, %v2021
    %v2070 = vpack.c.b16 %v2024, %v2022
    %v2071 = vpack.c.b16 %v2027, %v2025
    %v2072 = vpack.c.b16 %v2028, %v2026
    %v2073 = vpack.c.b16 %v2031, %v2029
    %v2074 = vpack.c.b16 %v2032, %v2030
    %v2075 = vpack.c.b16 %v2035, %v2033
    %v2076 = vpack.c.b16 %v2036, %v2034
    %v2077 = vpack.c.b16 %v2039, %v2037
    %v2078 = vpack.c.b16 %v2040, %v2038
    %v2079 = vpack.c.b16 %v2043, %v2041
    %v2080 = vpack.c.b16 %v2044, %v2042
    %v2081 = vpack.c.b16 %v2047, %v2045
    %v2082 = vpack.c.b16 %v2048, %v2046
    %v2083 = vpack.c.b16 %v2051, %v2049
    %v2084 = vpack.c.b16 %v2052, %v2050
    %2117 = vmatpush.bf16.msra.mxu0 %v2067
    %2118 = vmatpush.bf16.msra.mxu0 %v2065
    %2119 = vmatpush.bf16.msra.mxu0 %v2063
    %2120 = vmatpush.bf16.msra.mxu0 %v2061
    %2121 = vmatpush.bf16.msra.mxu0 %v2059
    %2122 = vmatpush.bf16.msra.mxu0 %v2057
    %2123 = vmatpush.bf16.msra.mxu0 %v2055
    %2124 = vmatpush.bf16.msra.mxu0 %v2053
    %2125 = vmatmul.bf16.gmra.mxu0 %v1600
    %v2126 = vpop.f32.mrf.mxu0
    %v2127 = vadd.f32 %v1880, %v2126
    %v2128 = vpop.f32.mrf.mxu0
    %v2129 = vadd.f32 %v1882, %v2128
    %2130 = vmatmul.bf16.gmra.mxu0 %v1602
    %v2131 = vpop.f32.mrf.mxu0
    %v2132 = vadd.f32 %v1885, %v2131
    %v2133 = vpop.f32.mrf.mxu0
    %v2134 = vadd.f32 %v1887, %v2133
    %2135 = vmatmul.bf16.gmra.mxu0 %v1604
    %v2136 = vpop.f32.mrf.mxu0
    %v2137 = vadd.f32 %v1890, %v2136
    %v2138 = vpop.f32.mrf.mxu0
    %v2139 = vadd.f32 %v1892, %v2138
    %2140 = vmatmul.bf16.gmra.mxu0 %v1606
    %v2141 = vpop.f32.mrf.mxu0
    %v2142 = vadd.f32 %v1895, %v2141
    %v2143 = vpop.f32.mrf.mxu0
    %v2144 = vadd.f32 %v1897, %v2143
    %2145 = vdwg.mxu0
    %2146 = vmatpush.bf16.msra.mxu0 %v2083
    %2147 = vmatpush.bf16.msra.mxu0 %v2081
    %2148 = vmatpush.bf16.msra.mxu0 %v2079
    %2149 = vmatpush.bf16.msra.mxu0 %v2077
    %2150 = vmatpush.bf16.msra.mxu0 %v2075
    %2151 = vmatpush.bf16.msra.mxu0 %v2073
    %2152 = vmatpush.bf16.msra.mxu0 %v2071
    %2153 = vmatpush.bf16.msra.mxu0 %v2069
    %2154 = vmatmul.bf16.gmra.mxu0 %v1601
    %v2155 = vpop.f32.mrf.mxu0
    %v2156 = vadd.f32 %v2127, %v2155
    %v2157 = vpop.f32.mrf.mxu0
    %v2158 = vadd.f32 %v2129, %v2157
    %2159 = vmatmul.bf16.gmra.mxu0 %v1603
    %v2160 = vpop.f32.mrf.mxu0
    %v2161 = vadd.f32 %v2132, %v2160
    %v2162 = vpop.f32.mrf.mxu0
    %v2163 = vadd.f32 %v2134, %v2162
    %2164 = vmatmul.bf16.gmra.mxu0 %v1605
    %v2165 = vpop.f32.mrf.mxu0
    %v2166 = vadd.f32 %v2137, %v2165
    %v2167 = vpop.f32.mrf.mxu0
    %v2168 = vadd.f32 %v2139, %v2167
    %2169 = vmatmul.bf16.gmra.mxu0 %v1607
    %v2170 = vpop.f32.mrf.mxu0
    %v2171 = vadd.f32 %v2142, %v2170
    %v2172 = vpop.f32.mrf.mxu0
    %v2173 = vadd.f32 %v2144, %v2172
    %2174 = vdwg.mxu0
    %2175 = vmatpush.bf16.msra.mxu0 %v2068
    %2176 = vmatpush.bf16.msra.mxu0 %v2066
    %2177 = vmatpush.bf16.msra.mxu0 %v2064
    %2178 = vmatpush.bf16.msra.mxu0 %v2062
    %2179 = vmatpush.bf16.msra.mxu0 %v2060
    %2180 = vmatpush.bf16.msra.mxu0 %v2058
    %2181 = vmatpush.bf16.msra.mxu0 %v2056
    %2182 = vmatpush.bf16.msra.mxu0 %v2054
    %2183 = vmatmul.bf16.gmra.mxu0 %v1600
    %v2184 = vpop.f32.mrf.mxu0
    %v2185 = vadd.f32 %v1938, %v2184
    %v2186 = vpop.f32.mrf.mxu0
    %v2187 = vadd.f32 %v1940, %v2186
    %2188 = vmatmul.bf16.gmra.mxu0 %v1602
    %v2189 = vpop.f32.mrf.mxu0
    %v2190 = vadd.f32 %v1943, %v2189
    %v2191 = vpop.f32.mrf.mxu0
    %v2192 = vadd.f32 %v1945, %v2191
    %2193 = vmatmul.bf16.gmra.mxu0 %v1604
    %v2194 = vpop.f32.mrf.mxu0
    %v2195 = vadd.f32 %v1948, %v2194
    %v2196 = vpop.f32.mrf.mxu0
    %v2197 = vadd.f32 %v1950, %v2196
    %2198 = vmatmul.bf16.gmra.mxu0 %v1606
    %v2199 = vpop.f32.mrf.mxu0
    %v2200 = vadd.f32 %v1953, %v2199
    %v2201 = vpop.f32.mrf.mxu0
    %v2202 = vadd.f32 %v1955, %v2201
    %2203 = vdwg.mxu0
    %2204 = vmatpush.bf16.msra.mxu0 %v2084
    %2205 = vmatpush.bf16.msra.mxu0 %v2082
    %2206 = vmatpush.bf16.msra.mxu0 %v2080
    %2207 = vmatpush.bf16.msra.mxu0 %v2078
    %2208 = vmatpush.bf16.msra.mxu0 %v2076
    %2209 = vmatpush.bf16.msra.mxu0 %v2074
    %2210 = vmatpush.bf16.msra.mxu0 %v2072
    %2211 = vmatpush.bf16.msra.mxu0 %v2070
    %2212 = vmatmul.bf16.gmra.mxu0 %v1601
    %v2213 = vpop.f32.mrf.mxu0
    %v2214 = vadd.f32 %v2185, %v2213
    %v2215 = vpop.f32.mrf.mxu0
    %v2216 = vadd.f32 %v2187, %v2215
    %2217 = vmatmul.bf16.gmra.mxu0 %v1603
    %v2218 = vpop.f32.mrf.mxu0
    %v2219 = vadd.f32 %v2190, %v2218
    %v2220 = vpop.f32.mrf.mxu0
    %v2221 = vadd.f32 %v2192, %v2220
    %2222 = vmatmul.bf16.gmra.mxu0 %v1605
    %v2223 = vpop.f32.mrf.mxu0
    %v2224 = vadd.f32 %v2195, %v2223
    %v2225 = vpop.f32.mrf.mxu0
    %v2226 = vadd.f32 %v2197, %v2225
    %2227 = vmatmul.bf16.gmra.mxu0 %v1607
    %v2228 = vpop.f32.mrf.mxu0
    %v2229 = vadd.f32 %v2200, %v2228
    %v2230 = vpop.f32.mrf.mxu0
    %v2231 = vadd.f32 %v2202, %v2230
    %2232 = vdwg.mxu0
    %v2233 = vpack.c.bf16 %v1586, %v1584
    %v2234 = vpack.c.bf16 %v1587, %v1585
    %v2235 = vpack.c.bf16 %v1590, %v1588
    %v2236 = vpack.c.bf16 %v1591, %v1589
    %v2237 = vpack.c.bf16 %v1594, %v1592
    %v2238 = vpack.c.bf16 %v1595, %v1593
    %v2239 = vpack.c.bf16 %v1598, %v1596
    %v2240 = vpack.c.bf16 %v1599, %v1597
    %s2241 = scalar_lea.vmem [#allocation7], 512
    %v2242 = vld [vmem:[%s2241] sm:$0xff]
    %v2243 = vld [vmem:[%s2241 + $0x8] sm:$0xff]
    %v2244 = vld [vmem:[%s2241 + $0x10] sm:$0xff]
    %v2245 = vld [vmem:[%s2241 + $0x18] sm:$0xff]
    %v2246 = vld [vmem:[%s2241 + $0x20] sm:$0xff]
    %v2247 = vld [vmem:[%s2241 + $0x28] sm:$0xff]
    %v2248 = vld [vmem:[%s2241 + $0x30] sm:$0xff]
    %v2249 = vld [vmem:[%s2241 + $0x38] sm:$0xff]
    %v2250 = vld [vmem:[%s2241 + $0x40] sm:$0xff]
    %v2251 = vld [vmem:[%s2241 + $0x48] sm:$0xff]
    %v2252 = vld [vmem:[%s2241 + $0x50] sm:$0xff]
    %v2253 = vld [vmem:[%s2241 + $0x58] sm:$0xff]
    %v2254 = vld [vmem:[%s2241 + $0x60] sm:$0xff]
    %v2255 = vld [vmem:[%s2241 + $0x68] sm:$0xff]
    %v2256 = vld [vmem:[%s2241 + $0x70] sm:$0xff]
    %v2257 = vld [vmem:[%s2241 + $0x78] sm:$0xff]
    %v2258 = vld [vmem:[%s2241 + $0x80] sm:$0xff]
    %v2259 = vld [vmem:[%s2241 + $0x88] sm:$0xff]
    %v2260 = vld [vmem:[%s2241 + $0x90] sm:$0xff]
    %v2261 = vld [vmem:[%s2241 + $0x98] sm:$0xff]
    %v2262 = vld [vmem:[%s2241 + $0xa0] sm:$0xff]
    %v2263 = vld [vmem:[%s2241 + $0xa8] sm:$0xff]
    %v2264 = vld [vmem:[%s2241 + $0xb0] sm:$0xff]
    %v2265 = vld [vmem:[%s2241 + $0xb8] sm:$0xff]
    %v2266 = vld [vmem:[%s2241 + $0xc0] sm:$0xff]
    %v2267 = vld [vmem:[%s2241 + $0xc8] sm:$0xff]
    %v2268 = vld [vmem:[%s2241 + $0xd0] sm:$0xff]
    %v2269 = vld [vmem:[%s2241 + $0xd8] sm:$0xff]
    %v2270 = vld [vmem:[%s2241 + $0xe0] sm:$0xff]
    %v2271 = vld [vmem:[%s2241 + $0xe8] sm:$0xff]
    %v2272 = vld [vmem:[%s2241 + $0xf0] sm:$0xff]
    %v2273 = vld [vmem:[%s2241 + $0xf8] sm:$0xff]
    %v2306 = vunpack.c.l.b16 %v2242
    %v2307 = vunpack.c.h.b16 %v2242
    %v2308 = vunpack.c.l.b16 %v2243
    %v2309 = vunpack.c.h.b16 %v2243
    %v2310 = vunpack.c.l.b16 %v2244
    %v2311 = vunpack.c.h.b16 %v2244
    %v2312 = vunpack.c.l.b16 %v2245
    %v2313 = vunpack.c.h.b16 %v2245
    %v2314 = vunpack.c.l.b16 %v2246
    %v2315 = vunpack.c.h.b16 %v2246
    %v2316 = vunpack.c.l.b16 %v2247
    %v2317 = vunpack.c.h.b16 %v2247
    %v2318 = vunpack.c.l.b16 %v2248
    %v2319 = vunpack.c.h.b16 %v2248
    %v2320 = vunpack.c.l.b16 %v2249
    %v2321 = vunpack.c.h.b16 %v2249
    %v2322 = vunpack.c.l.b16 %v2250
    %v2323 = vunpack.c.h.b16 %v2250
    %v2324 = vunpack.c.l.b16 %v2251
    %v2325 = vunpack.c.h.b16 %v2251
    %v2326 = vunpack.c.l.b16 %v2252
    %v2327 = vunpack.c.h.b16 %v2252
    %v2328 = vunpack.c.l.b16 %v2253
    %v2329 = vunpack.c.h.b16 %v2253
    %v2330 = vunpack.c.l.b16 %v2254
    %v2331 = vunpack.c.h.b16 %v2254
    %v2332 = vunpack.c.l.b16 %v2255
    %v2333 = vunpack.c.h.b16 %v2255
    %v2334 = vunpack.c.l.b16 %v2256
    %v2335 = vunpack.c.h.b16 %v2256
    %v2336 = vunpack.c.l.b16 %v2257
    %v2337 = vunpack.c.h.b16 %v2257
    %v2338 = vunpack.c.l.b16 %v2258
    %v2339 = vunpack.c.h.b16 %v2258
    %v2340 = vunpack.c.l.b16 %v2259
    %v2341 = vunpack.c.h.b16 %v2259
    %v2342 = vunpack.c.l.b16 %v2260
    %v2343 = vunpack.c.h.b16 %v2260
    %v2344 = vunpack.c.l.b16 %v2261
    %v2345 = vunpack.c.h.b16 %v2261
    %v2346 = vunpack.c.l.b16 %v2262
    %v2347 = vunpack.c.h.b16 %v2262
    %v2348 = vunpack.c.l.b16 %v2263
    %v2349 = vunpack.c.h.b16 %v2263
    %v2350 = vunpack.c.l.b16 %v2264
    %v2351 = vunpack.c.h.b16 %v2264
    %v2352 = vunpack.c.l.b16 %v2265
    %v2353 = vunpack.c.h.b16 %v2265
    %v2354 = vunpack.c.l.b16 %v2266
    %v2355 = vunpack.c.h.b16 %v2266
    %v2356 = vunpack.c.l.b16 %v2267
    %v2357 = vunpack.c.h.b16 %v2267
    %v2358 = vunpack.c.l.b16 %v2268
    %v2359 = vunpack.c.h.b16 %v2268
    %v2360 = vunpack.c.l.b16 %v2269
    %v2361 = vunpack.c.h.b16 %v2269
    %v2362 = vunpack.c.l.b16 %v2270
    %v2363 = vunpack.c.h.b16 %v2270
    %v2364 = vunpack.c.l.b16 %v2271
    %v2365 = vunpack.c.h.b16 %v2271
    %v2366 = vunpack.c.l.b16 %v2272
    %v2367 = vunpack.c.h.b16 %v2272
    %v2368 = vunpack.c.l.b16 %v2273
    %v2369 = vunpack.c.h.b16 %v2273
    %v2370 = vpack.c.b16 %v2308, %v2306
    %v2371 = vpack.c.b16 %v2309, %v2307
    %v2372 = vpack.c.b16 %v2312, %v2310
    %v2373 = vpack.c.b16 %v2313, %v2311
    %v2374 = vpack.c.b16 %v2316, %v2314
    %v2375 = vpack.c.b16 %v2317, %v2315
    %v2376 = vpack.c.b16 %v2320, %v2318
    %v2377 = vpack.c.b16 %v2321, %v2319
    %v2378 = vpack.c.b16 %v2324, %v2322
    %v2379 = vpack.c.b16 %v2325, %v2323
    %v2380 = vpack.c.b16 %v2328, %v2326
    %v2381 = vpack.c.b16 %v2329, %v2327
    %v2382 = vpack.c.b16 %v2332, %v2330
    %v2383 = vpack.c.b16 %v2333, %v2331
    %v2384 = vpack.c.b16 %v2336, %v2334
    %v2385 = vpack.c.b16 %v2337, %v2335
    %v2386 = vpack.c.b16 %v2340, %v2338
    %v2387 = vpack.c.b16 %v2341, %v2339
    %v2388 = vpack.c.b16 %v2344, %v2342
    %v2389 = vpack.c.b16 %v2345, %v2343
    %v2390 = vpack.c.b16 %v2348, %v2346
    %v2391 = vpack.c.b16 %v2349, %v2347
    %v2392 = vpack.c.b16 %v2352, %v2350
    %v2393 = vpack.c.b16 %v2353, %v2351
    %v2394 = vpack.c.b16 %v2356, %v2354
    %v2395 = vpack.c.b16 %v2357, %v2355
    %v2396 = vpack.c.b16 %v2360, %v2358
    %v2397 = vpack.c.b16 %v2361, %v2359
    %v2398 = vpack.c.b16 %v2364, %v2362
    %v2399 = vpack.c.b16 %v2365, %v2363
    %v2400 = vpack.c.b16 %v2368, %v2366
    %v2401 = vpack.c.b16 %v2369, %v2367
    %2434 = vmatpush.bf16.msra.mxu0 %v2384
    %2435 = vmatpush.bf16.msra.mxu0 %v2382
    %2436 = vmatpush.bf16.msra.mxu0 %v2380
    %2437 = vmatpush.bf16.msra.mxu0 %v2378
    %2438 = vmatpush.bf16.msra.mxu0 %v2376
    %2439 = vmatpush.bf16.msra.mxu0 %v2374
    %2440 = vmatpush.bf16.msra.mxu0 %v2372
    %2441 = vmatpush.bf16.msra.mxu0 %v2370
    %2442 = vmatmul.bf16.gmra.mxu0 %v2233
    %v2443 = vpop.f32.mrf.mxu0
    %v2444 = vadd.f32 0.0, %v2443
    %v2445 = vpop.f32.mrf.mxu0
    %v2446 = vadd.f32 0.0, %v2445
    %2447 = vmatmul.bf16.gmra.mxu0 %v2235
    %v2448 = vpop.f32.mrf.mxu0
    %v2449 = vadd.f32 0.0, %v2448
    %v2450 = vpop.f32.mrf.mxu0
    %v2451 = vadd.f32 0.0, %v2450
    %2452 = vmatmul.bf16.gmra.mxu0 %v2237
    %v2453 = vpop.f32.mrf.mxu0
    %v2454 = vadd.f32 0.0, %v2453
    %v2455 = vpop.f32.mrf.mxu0
    %v2456 = vadd.f32 0.0, %v2455
    %2457 = vmatmul.bf16.gmra.mxu0 %v2239
    %v2458 = vpop.f32.mrf.mxu0
    %v2459 = vadd.f32 0.0, %v2458
    %v2460 = vpop.f32.mrf.mxu0
    %v2461 = vadd.f32 0.0, %v2460
    %2462 = vdwg.mxu0
    %2463 = vmatpush.bf16.msra.mxu0 %v2400
    %2464 = vmatpush.bf16.msra.mxu0 %v2398
    %2465 = vmatpush.bf16.msra.mxu0 %v2396
    %2466 = vmatpush.bf16.msra.mxu0 %v2394
    %2467 = vmatpush.bf16.msra.mxu0 %v2392
    %2468 = vmatpush.bf16.msra.mxu0 %v2390
    %2469 = vmatpush.bf16.msra.mxu0 %v2388
    %2470 = vmatpush.bf16.msra.mxu0 %v2386
    %2471 = vmatmul.bf16.gmra.mxu0 %v2234
    %v2472 = vpop.f32.mrf.mxu0
    %v2473 = vadd.f32 %v2444, %v2472
    %v2474 = vpop.f32.mrf.mxu0
    %v2475 = vadd.f32 %v2446, %v2474
    %2476 = vmatmul.bf16.gmra.mxu0 %v2236
    %v2477 = vpop.f32.mrf.mxu0
    %v2478 = vadd.f32 %v2449, %v2477
    %v2479 = vpop.f32.mrf.mxu0
    %v2480 = vadd.f32 %v2451, %v2479
    %2481 = vmatmul.bf16.gmra.mxu0 %v2238
    %v2482 = vpop.f32.mrf.mxu0
    %v2483 = vadd.f32 %v2454, %v2482
    %v2484 = vpop.f32.mrf.mxu0
    %v2485 = vadd.f32 %v2456, %v2484
    %2486 = vmatmul.bf16.gmra.mxu0 %v2240
    %v2487 = vpop.f32.mrf.mxu0
    %v2488 = vadd.f32 %v2459, %v2487
    %v2489 = vpop.f32.mrf.mxu0
    %v2490 = vadd.f32 %v2461, %v2489
    %2491 = vdwg.mxu0
    %2492 = vmatpush.bf16.msra.mxu0 %v2385
    %2493 = vmatpush.bf16.msra.mxu0 %v2383
    %2494 = vmatpush.bf16.msra.mxu0 %v2381
    %2495 = vmatpush.bf16.msra.mxu0 %v2379
    %2496 = vmatpush.bf16.msra.mxu0 %v2377
    %2497 = vmatpush.bf16.msra.mxu0 %v2375
    %2498 = vmatpush.bf16.msra.mxu0 %v2373
    %2499 = vmatpush.bf16.msra.mxu0 %v2371
    %2500 = vmatmul.bf16.gmra.mxu0 %v2233
    %v2501 = vpop.f32.mrf.mxu0
    %v2502 = vadd.f32 0.0, %v2501
    %v2503 = vpop.f32.mrf.mxu0
    %v2504 = vadd.f32 0.0, %v2503
    %2505 = vmatmul.bf16.gmra.mxu0 %v2235
    %v2506 = vpop.f32.mrf.mxu0
    %v2507 = vadd.f32 0.0, %v2506
    %v2508 = vpop.f32.mrf.mxu0
    %v2509 = vadd.f32 0.0, %v2508
    %2510 = vmatmul.bf16.gmra.mxu0 %v2237
    %v2511 = vpop.f32.mrf.mxu0
    %v2512 = vadd.f32 0.0, %v2511
    %v2513 = vpop.f32.mrf.mxu0
    %v2514 = vadd.f32 0.0, %v2513
    %2515 = vmatmul.bf16.gmra.mxu0 %v2239
    %v2516 = vpop.f32.mrf.mxu0
    %v2517 = vadd.f32 0.0, %v2516
    %v2518 = vpop.f32.mrf.mxu0
    %v2519 = vadd.f32 0.0, %v2518
    %2520 = vdwg.mxu0
    %2521 = vmatpush.bf16.msra.mxu0 %v2401
    %2522 = vmatpush.bf16.msra.mxu0 %v2399
    %2523 = vmatpush.bf16.msra.mxu0 %v2397
    %2524 = vmatpush.bf16.msra.mxu0 %v2395
    %2525 = vmatpush.bf16.msra.mxu0 %v2393
    %2526 = vmatpush.bf16.msra.mxu0 %v2391
    %2527 = vmatpush.bf16.msra.mxu0 %v2389
    %2528 = vmatpush.bf16.msra.mxu0 %v2387
    %2529 = vmatmul.bf16.gmra.mxu0 %v2234
    %v2530 = vpop.f32.mrf.mxu0
    %v2531 = vadd.f32 %v2502, %v2530
    %v2532 = vpop.f32.mrf.mxu0
    %v2533 = vadd.f32 %v2504, %v2532
    %2534 = vmatmul.bf16.gmra.mxu0 %v2236
    %v2535 = vpop.f32.mrf.mxu0
    %v2536 = vadd.f32 %v2507, %v2535
    %v2537 = vpop.f32.mrf.mxu0
    %v2538 = vadd.f32 %v2509, %v2537
    %2539 = vmatmul.bf16.gmra.mxu0 %v2238
    %v2540 = vpop.f32.mrf.mxu0
    %v2541 = vadd.f32 %v2512, %v2540
    %v2542 = vpop.f32.mrf.mxu0
    %v2543 = vadd.f32 %v2514, %v2542
    %2544 = vmatmul.bf16.gmra.mxu0 %v2240
    %v2545 = vpop.f32.mrf.mxu0
    %v2546 = vadd.f32 %v2517, %v2545
    %v2547 = vpop.f32.mrf.mxu0
    %v2548 = vadd.f32 %v2519, %v2547
    %2549 = vdwg.mxu0
    %v2550 = vadd.f32 %v2156, %v2473
    %v2551 = vadd.f32 %v2214, %v2531
    %v2552 = vadd.f32 %v2158, %v2475
    %v2553 = vadd.f32 %v2216, %v2533
    %v2554 = vadd.f32 %v2161, %v2478
    %v2555 = vadd.f32 %v2219, %v2536
    %v2556 = vadd.f32 %v2163, %v2480
    %v2557 = vadd.f32 %v2221, %v2538
    %v2558 = vadd.f32 %v2166, %v2483
    %v2559 = vadd.f32 %v2224, %v2541
    %v2560 = vadd.f32 %v2168, %v2485
    %v2561 = vadd.f32 %v2226, %v2543
    %v2562 = vadd.f32 %v2171, %v2488
    %v2563 = vadd.f32 %v2229, %v2546
    %v2564 = vadd.f32 %v2173, %v2490
    %v2565 = vadd.f32 %v2231, %v2548
    %v2566 = vld [vmem:[#allocation8] sm:$0x3]
    %v2568 = vperm.slane %v2566, 0
    %v2569 = vperm.slane %v2566, 1
    %v2572 = vadd.f32 %v2550, %v2568
    %v2573 = vadd.f32 %v2551, %v2569
    %v2574 = vadd.f32 %v2552, %v2568
    %v2575 = vadd.f32 %v2553, %v2569
    %v2576 = vadd.f32 %v2554, %v2568
    %v2577 = vadd.f32 %v2555, %v2569
    %v2578 = vadd.f32 %v2556, %v2568
    %v2579 = vadd.f32 %v2557, %v2569
    %v2580 = vadd.f32 %v2558, %v2568
    %v2581 = vadd.f32 %v2559, %v2569
    %v2582 = vadd.f32 %v2560, %v2568
    %v2583 = vadd.f32 %v2561, %v2569
    %v2584 = vadd.f32 %v2562, %v2568
    %v2585 = vadd.f32 %v2563, %v2569
    %v2586 = vadd.f32 %v2564, %v2568
    %v2587 = vadd.f32 %v2565, %v2569
    %vm2588 = vcmp.ge.f32.partialorder %v2572, 0.0
    %vm2589 = vcmp.ge.f32.partialorder %v2573, 0.0
    %vm2590 = vcmp.ge.f32.partialorder %v2574, 0.0
    %vm2591 = vcmp.ge.f32.partialorder %v2575, 0.0
    %vm2592 = vcmp.ge.f32.partialorder %v2576, 0.0
    %vm2593 = vcmp.ge.f32.partialorder %v2577, 0.0
    %vm2594 = vcmp.ge.f32.partialorder %v2578, 0.0
    %vm2595 = vcmp.ge.f32.partialorder %v2579, 0.0
    %vm2596 = vcmp.ge.f32.partialorder %v2580, 0.0
    %vm2597 = vcmp.ge.f32.partialorder %v2581, 0.0
    %vm2598 = vcmp.ge.f32.partialorder %v2582, 0.0
    %vm2599 = vcmp.ge.f32.partialorder %v2583, 0.0
    %vm2600 = vcmp.ge.f32.partialorder %v2584, 0.0
    %vm2601 = vcmp.ge.f32.partialorder %v2585, 0.0
    %vm2602 = vcmp.ge.f32.partialorder %v2586, 0.0
    %vm2603 = vcmp.ge.f32.partialorder %v2587, 0.0
    %v2604 = vmul.f32 %v2572, 0.01
    %v2605 = vmul.f32 %v2573, 0.01
    %v2606 = vmul.f32 %v2574, 0.01
    %v2607 = vmul.f32 %v2575, 0.01
    %v2608 = vmul.f32 %v2576, 0.01
    %v2609 = vmul.f32 %v2577, 0.01
    %v2610 = vmul.f32 %v2578, 0.01
    %v2611 = vmul.f32 %v2579, 0.01
    %v2612 = vmul.f32 %v2580, 0.01
    %v2613 = vmul.f32 %v2581, 0.01
    %v2614 = vmul.f32 %v2582, 0.01
    %v2615 = vmul.f32 %v2583, 0.01
    %v2616 = vmul.f32 %v2584, 0.01
    %v2617 = vmul.f32 %v2585, 0.01
    %v2618 = vmul.f32 %v2586, 0.01
    %v2619 = vmul.f32 %v2587, 0.01
    %v2620 = vsel %vm2588, %v2572, %v2604
    %v2621 = vsel %vm2589, %v2573, %v2605
    %v2622 = vsel %vm2590, %v2574, %v2606
    %v2623 = vsel %vm2591, %v2575, %v2607
    %v2624 = vsel %vm2592, %v2576, %v2608
    %v2625 = vsel %vm2593, %v2577, %v2609
    %v2626 = vsel %vm2594, %v2578, %v2610
    %v2627 = vsel %vm2595, %v2579, %v2611
    %v2628 = vsel %vm2596, %v2580, %v2612
    %v2629 = vsel %vm2597, %v2581, %v2613
    %v2630 = vsel %vm2598, %v2582, %v2614
    %v2631 = vsel %vm2599, %v2583, %v2615
    %v2632 = vsel %vm2600, %v2584, %v2616
    %v2633 = vsel %vm2601, %v2585, %v2617
    %v2634 = vsel %vm2602, %v2586, %v2618
    %v2635 = vsel %vm2603, %v2587, %v2619
    %2636 = vrot.lane.b32.xlu0 %v2620, 112
    %v2637 = vpop.permute.xlu0 %2636
    %2638 = vrot.lane.b32.xlu0 %v2622, 112
    %v2639 = vpop.permute.xlu0 %2638
    %2640 = vrot.lane.b32.xlu0 %v2624, 112
    %v2641 = vpop.permute.xlu0 %2640
    %2642 = vrot.lane.b32.xlu0 %v2626, 112
    %v2643 = vpop.permute.xlu0 %2642
    %2644 = vrot.lane.b32.xlu0 %v2628, 112
    %v2645 = vpop.permute.xlu0 %2644
    %2646 = vrot.lane.b32.xlu0 %v2630, 112
    %v2647 = vpop.permute.xlu0 %2646
    %2648 = vrot.lane.b32.xlu0 %v2632, 112
    %v2649 = vpop.permute.xlu0 %2648
    %2650 = vrot.lane.b32.xlu0 %v2634, 112
    %v2651 = vpop.permute.xlu0 %2650
    %2652 = vrot.lane.b32.xlu0 %v2621, 112
    %v2653 = vpop.permute.xlu0 %2652
    %2654 = vrot.lane.b32.xlu0 %v2623, 112
    %v2655 = vpop.permute.xlu0 %2654
    %2656 = vrot.lane.b32.xlu0 %v2625, 112
    %v2657 = vpop.permute.xlu0 %2656
    %2658 = vrot.lane.b32.xlu0 %v2627, 112
    %v2659 = vpop.permute.xlu0 %2658
    %2660 = vrot.lane.b32.xlu0 %v2629, 112
    %v2661 = vpop.permute.xlu0 %2660
    %2662 = vrot.lane.b32.xlu0 %v2631, 112
    %v2663 = vpop.permute.xlu0 %2662
    %2664 = vrot.lane.b32.xlu0 %v2633, 112
    %v2665 = vpop.permute.xlu0 %2664
    %2666 = vrot.lane.b32.xlu0 %v2635, 112
    %v2667 = vpop.permute.xlu0 %2666
    %vm2668 = vcmp.lt.s32.totalorder %v1212, 112
    %v2669 = vsel %vm2668, %v2637, %v2653
    %v2670 = vsel %vm2668, %v2639, %v2655
    %v2671 = vsel %vm2668, %v2641, %v2657
    %v2672 = vsel %vm2668, %v2643, %v2659
    %v2673 = vsel %vm2668, %v2645, %v2661
    %v2674 = vsel %vm2668, %v2647, %v2663
    %v2675 = vsel %vm2668, %v2649, %v2665
    %v2676 = vsel %vm2668, %v2651, %v2667
    %v2677 = vsel %vm2668, %v2653, %v2637
    %v2678 = vsel %vm2668, %v2655, %v2639
    %v2679 = vsel %vm2668, %v2657, %v2641
    %v2680 = vsel %vm2668, %v2659, %v2643
    %v2681 = vsel %vm2668, %v2661, %v2645
    %v2682 = vsel %vm2668, %v2663, %v2647
    %v2683 = vsel %vm2668, %v2665, %v2649
    %v2684 = vsel %vm2668, %v2667, %v2651
    %v2685 = vmax.f32 %v2620, %v2669
    %v2686 = vmax.f32 %v2621, %v2677
    %v2687 = vmax.f32 %v2622, %v2670
    %v2688 = vmax.f32 %v2623, %v2678
    %v2689 = vmax.f32 %v2624, %v2671
    %v2690 = vmax.f32 %v2625, %v2679
    %v2691 = vmax.f32 %v2626, %v2672
    %v2692 = vmax.f32 %v2627, %v2680
    %v2693 = vmax.f32 %v2628, %v2673
    %v2694 = vmax.f32 %v2629, %v2681
    %v2695 = vmax.f32 %v2630, %v2674
    %v2696 = vmax.f32 %v2631, %v2682
    %v2697 = vmax.f32 %v2632, %v2675
    %v2698 = vmax.f32 %v2633, %v2683
    %v2699 = vmax.f32 %v2634, %v2676
    %v2700 = vmax.f32 %v2635, %v2684
    %v2701 = vrot.slane %v2685, 1
    %v2702 = vrot.slane %v2686, 1
    %v2703 = vrot.slane %v2687, 1
    %v2704 = vrot.slane %v2688, 1
    %v2705 = vrot.slane %v2689, 1
    %v2706 = vrot.slane %v2690, 1
    %v2707 = vrot.slane %v2691, 1
    %v2708 = vrot.slane %v2692, 1
    %v2709 = vrot.slane %v2693, 1
    %v2710 = vrot.slane %v2694, 1
    %v2711 = vrot.slane %v2695, 1
    %v2712 = vrot.slane %v2696, 1
    %v2713 = vrot.slane %v2697, 1
    %v2714 = vrot.slane %v2698, 1
    %v2715 = vrot.slane %v2699, 1
    %v2716 = vrot.slane %v2700, 1
    %v2717 = vsel %vm483, %v2713, %v2715
    %v2718 = vsel %vm483, %v2714, %v2716
    %v2719 = vsel %vm483, %v2711, %v2713
    %v2720 = vsel %vm483, %v2712, %v2714
    %v2721 = vsel %vm483, %v2709, %v2711
    %v2722 = vsel %vm483, %v2710, %v2712
    %v2723 = vsel %vm483, %v2707, %v2709
    %v2724 = vsel %vm483, %v2708, %v2710
    %v2725 = vsel %vm483, %v2705, %v2707
    %v2726 = vsel %vm483, %v2706, %v2708
    %v2727 = vsel %vm483, %v2703, %v2705
    %v2728 = vsel %vm483, %v2704, %v2706
    %v2729 = vsel %vm483, %v2701, %v2703
    %v2730 = vsel %vm483, %v2702, %v2704
    %v2731 = vsel %vm483, %v2715, %v2701
    %v2732 = vsel %vm483, %v2716, %v2702
    %v2733 = vmax.f32 %v2685, %v2729
    %v2734 = vmax.f32 %v2686, %v2730
    %v2735 = vmax.f32 %v2687, %v2727
    %v2736 = vmax.f32 %v2688, %v2728
    %v2737 = vmax.f32 %v2689, %v2725
    %v2738 = vmax.f32 %v2690, %v2726
    %v2739 = vmax.f32 %v2691, %v2723
    %v2740 = vmax.f32 %v2692, %v2724
    %v2741 = vmax.f32 %v2693, %v2721
    %v2742 = vmax.f32 %v2694, %v2722
    %v2743 = vmax.f32 %v2695, %v2719
    %v2744 = vmax.f32 %v2696, %v2720
    %v2745 = vmax.f32 %v2697, %v2717
    %v2746 = vmax.f32 %v2698, %v2718
    %v2747 = vmax.f32 %v2699, %v2731
    %v2748 = vmax.f32 %v2700, %v2732
    %v2749 = vld [vmem:[#allocation17] sm:$0xf]
    %v2750 = vld [vmem:[#allocation17 + $0x4] sm:$0xf]
    %v2751 = vld [vmem:[#allocation17 + $0x8] sm:$0xf]
    %v2752 = vld [vmem:[#allocation17 + $0xc] sm:$0xf]
    %v2753 = vpack.c.bf16 %v2735, %v2733
    %v2754 = vpack.c.bf16 %v2736, %v2734
    %v2755 = vpack.c.bf16 %v2739, %v2737
    %v2756 = vpack.c.bf16 %v2740, %v2738
    %v2757 = vpack.c.bf16 %v2743, %v2741
    %v2758 = vpack.c.bf16 %v2744, %v2742
    %v2759 = vpack.c.bf16 %v2747, %v2745
    %v2760 = vpack.c.bf16 %v2748, %v2746
    %v2765 = vunpack.c.l.b16 %v2749
    %v2766 = vunpack.c.l.b16 %v2750
    %v2767 = vunpack.c.l.b16 %v2751
    %v2768 = vunpack.c.l.b16 %v2752
    %v2769 = vpack.c.b16 %v2766, %v2765
    %v2770 = vpack.c.b16 %v2768, %v2767
    %vm2771 = vcmask 523264
    %v2773 = vsel %vm2771, %v2769, 0
    %v2776 = vsel %vm2771, %v2770, 0
    %2778 = vmatpush.bf16.msra.mxu0 0
    %2779 = vmatpush.bf16.msra.mxu0 0
    %2780 = vmatpush.bf16.msra.mxu0 0
    %2781 = vmatpush.bf16.msra.mxu0 0
    %2782 = vmatpush.bf16.msra.mxu0 %v2759
    %2783 = vmatpush.bf16.msra.mxu0 %v2757
    %2784 = vmatpush.bf16.msra.mxu0 %v2755
    %2785 = vmatpush.bf16.msra.mxu0 %v2753
    %2786 = vmatmul.bf16.gmra.mxu0 %v2773
    %v2787 = vpop.f32.mrf.mxu0
    %v2788 = vadd.f32 0.0, %v2787
    %v2789 = vpop.f32.mrf.mxu0
    %v2790 = vadd.f32 0.0, %v2789
    %2791 = vmatmul.bf16.gmra.mxu0 %v2776
    %v2792 = vpop.f32.mrf.mxu0
    %v2793 = vadd.f32 0.0, %v2792
    %v2794 = vpop.f32.mrf.mxu0
    %v2795 = vadd.f32 0.0, %v2794
    %2796 = vdwg.mxu0
    %2797 = vmatpush.bf16.msra.mxu0 0
    %2798 = vmatpush.bf16.msra.mxu0 0
    %2799 = vmatpush.bf16.msra.mxu0 0
    %2800 = vmatpush.bf16.msra.mxu0 0
    %2801 = vmatpush.bf16.msra.mxu0 %v2760
    %2802 = vmatpush.bf16.msra.mxu0 %v2758
    %2803 = vmatpush.bf16.msra.mxu0 %v2756
    %2804 = vmatpush.bf16.msra.mxu0 %v2754
    %2805 = vmatmul.bf16.gmra.mxu0 %v2773
    %v2806 = vpop.f32.mrf.mxu0
    %v2807 = vadd.f32 0.0, %v2806
    %v2808 = vpop.f32.mrf.mxu0
    %v2809 = vadd.f32 0.0, %v2808
    %2810 = vmatmul.bf16.gmra.mxu0 %v2776
    %v2811 = vpop.f32.mrf.mxu0
    %v2812 = vadd.f32 0.0, %v2811
    %v2813 = vpop.f32.mrf.mxu0
    %v2814 = vadd.f32 0.0, %v2813
    %2815 = vdwg.mxu0
    %v2816 = vand.u32 %v354, 15
    %v2817 = vand.u32 %v355, 15
    %v2818 = vand.u32 %v356, 15
    %v2819 = vand.u32 %v357, 15
    %vm2820 = vcmp.ge.s32.totalorder %v2816, 1
    %vm2821 = vcmp.ge.s32.totalorder %v2817, 1
    %vm2822 = vcmp.ge.s32.totalorder %v2818, 1
    %vm2823 = vcmp.ge.s32.totalorder %v2819, 1
    %v2824 = vrot.slane %v2788, 7
    %v2825 = vrot.slane %v2807, 7
    %v2826 = vrot.slane %v2790, 7
    %v2827 = vrot.slane %v2809, 7
    %v2828 = vrot.slane %v2793, 7
    %v2829 = vrot.slane %v2812, 7
    %v2830 = vrot.slane %v2795, 7
    %v2831 = vrot.slane %v2814, 7
    %v2832 = vsel %vm418, %v2828, %v2830
    %v2833 = vsel %vm418, %v2829, %v2831
    %v2834 = vsel %vm418, %v2826, %v2828
    %v2835 = vsel %vm418, %v2827, %v2829
    %v2836 = vsel %vm418, %v2824, %v2826
    %v2837 = vsel %vm418, %v2825, %v2827
    %v2838 = vsel %vm418, %v2830, %v2824
    %v2839 = vsel %vm418, %v2831, %v2825
    %v2840 = vsel %vm2820, %v2838, 0.0
    %v2841 = vsel %vm2820, %v2839, 0.0
    %v2842 = vsel %vm2821, %v2836, 0.0
    %v2843 = vsel %vm2821, %v2837, 0.0
    %v2844 = vsel %vm2822, %v2834, 0.0
    %v2845 = vsel %vm2822, %v2835, 0.0
    %v2846 = vsel %vm2823, %v2832, 0.0
    %v2847 = vsel %vm2823, %v2833, 0.0
    %vm2848 = vcmp.le.s32.totalorder %v2816, 14
    %vm2849 = vcmp.le.s32.totalorder %v2817, 14
    %vm2850 = vcmp.le.s32.totalorder %v2818, 14
    %vm2851 = vcmp.le.s32.totalorder %v2819, 14
    %v2852 = vrot.slane %v2788, 1
    %v2853 = vrot.slane %v2807, 1
    %v2854 = vrot.slane %v2790, 1
    %v2855 = vrot.slane %v2809, 1
    %v2856 = vrot.slane %v2793, 1
    %v2857 = vrot.slane %v2812, 1
    %v2858 = vrot.slane %v2795, 1
    %v2859 = vrot.slane %v2814, 1
    %v2860 = vsel %vm483, %v2856, %v2858
    %v2861 = vsel %vm483, %v2857, %v2859
    %v2862 = vsel %vm483, %v2854, %v2856
    %v2863 = vsel %vm483, %v2855, %v2857
    %v2864 = vsel %vm483, %v2852, %v2854
    %v2865 = vsel %vm483, %v2853, %v2855
    %v2866 = vsel %vm483, %v2858, %v2852
    %v2867 = vsel %vm483, %v2859, %v2853
    %v2868 = vsel %vm2848, %v2864, 0.0
    %v2869 = vsel %vm2848, %v2865, 0.0
    %v2870 = vsel %vm2849, %v2862, 0.0
    %v2871 = vsel %vm2849, %v2863, 0.0
    %v2872 = vsel %vm2850, %v2860, 0.0
    %v2873 = vsel %vm2850, %v2861, 0.0
    %v2874 = vsel %vm2851, %v2866, 0.0
    %v2875 = vsel %vm2851, %v2867, 0.0
    %v2876 = vpack.c.bf16 %v2842, %v2840
    %v2877 = vpack.c.bf16 %v2843, %v2841
    %v2878 = vpack.c.bf16 %v2846, %v2844
    %v2879 = vpack.c.bf16 %v2847, %v2845
    %v2880 = vld [vmem:[#allocation10] sm:$0xf]
    %v2881 = vld [vmem:[#allocation10 + $0x4] sm:$0xf]
    %v2882 = vld [vmem:[#allocation10 + $0x8] sm:$0xf]
    %v2883 = vld [vmem:[#allocation10 + $0xc] sm:$0xf]
    %v2884 = vld [vmem:[#allocation10 + $0x10] sm:$0xf]
    %v2885 = vld [vmem:[#allocation10 + $0x14] sm:$0xf]
    %v2886 = vld [vmem:[#allocation10 + $0x18] sm:$0xf]
    %v2887 = vld [vmem:[#allocation10 + $0x1c] sm:$0xf]
    %v2888 = vld [vmem:[#allocation10 + $0x20] sm:$0xf]
    %v2889 = vld [vmem:[#allocation10 + $0x24] sm:$0xf]
    %v2890 = vld [vmem:[#allocation10 + $0x28] sm:$0xf]
    %v2891 = vld [vmem:[#allocation10 + $0x2c] sm:$0xf]
    %v2892 = vld [vmem:[#allocation10 + $0x30] sm:$0xf]
    %v2893 = vld [vmem:[#allocation10 + $0x34] sm:$0xf]
    %v2894 = vld [vmem:[#allocation10 + $0x38] sm:$0xf]
    %v2895 = vld [vmem:[#allocation10 + $0x3c] sm:$0xf]
    %v2896 = vld [vmem:[#allocation10 + $0x40] sm:$0xf]
    %v2897 = vld [vmem:[#allocation10 + $0x44] sm:$0xf]
    %v2898 = vld [vmem:[#allocation10 + $0x48] sm:$0xf]
    %v2899 = vld [vmem:[#allocation10 + $0x4c] sm:$0xf]
    %v2900 = vld [vmem:[#allocation10 + $0x50] sm:$0xf]
    %v2901 = vld [vmem:[#allocation10 + $0x54] sm:$0xf]
    %v2902 = vld [vmem:[#allocation10 + $0x58] sm:$0xf]
    %v2903 = vld [vmem:[#allocation10 + $0x5c] sm:$0xf]
    %v2904 = vld [vmem:[#allocation10 + $0x60] sm:$0xf]
    %v2905 = vld [vmem:[#allocation10 + $0x64] sm:$0xf]
    %v2906 = vld [vmem:[#allocation10 + $0x68] sm:$0xf]
    %v2907 = vld [vmem:[#allocation10 + $0x6c] sm:$0xf]
    %v2908 = vld [vmem:[#allocation10 + $0x70] sm:$0xf]
    %v2909 = vld [vmem:[#allocation10 + $0x74] sm:$0xf]
    %v2910 = vld [vmem:[#allocation10 + $0x78] sm:$0xf]
    %v2911 = vld [vmem:[#allocation10 + $0x7c] sm:$0xf]
    %v2912 = vpack.c.bf16 %v2790, %v2788
    %v2913 = vpack.c.bf16 %v2809, %v2807
    %v2914 = vpack.c.bf16 %v2795, %v2793
    %v2915 = vpack.c.bf16 %v2814, %v2812
    %s2916 = scalar_lea.vmem [#allocation10], 128
    %v2917 = vld [vmem:[%s2916] sm:$0xf]
    %v2918 = vld [vmem:[%s2916 + $0x4] sm:$0xf]
    %v2919 = vld [vmem:[%s2916 + $0x8] sm:$0xf]
    %v2920 = vld [vmem:[%s2916 + $0xc] sm:$0xf]
    %v2921 = vld [vmem:[%s2916 + $0x10] sm:$0xf]
    %v2922 = vld [vmem:[%s2916 + $0x14] sm:$0xf]
    %v2923 = vld [vmem:[%s2916 + $0x18] sm:$0xf]
    %v2924 = vld [vmem:[%s2916 + $0x1c] sm:$0xf]
    %v2925 = vld [vmem:[%s2916 + $0x20] sm:$0xf]
    %v2926 = vld [vmem:[%s2916 + $0x24] sm:$0xf]
    %v2927 = vld [vmem:[%s2916 + $0x28] sm:$0xf]
    %v2928 = vld [vmem:[%s2916 + $0x2c] sm:$0xf]
    %v2929 = vld [vmem:[%s2916 + $0x30] sm:$0xf]
    %v2930 = vld [vmem:[%s2916 + $0x34] sm:$0xf]
    %v2931 = vld [vmem:[%s2916 + $0x38] sm:$0xf]
    %v2932 = vld [vmem:[%s2916 + $0x3c] sm:$0xf]
    %v2933 = vld [vmem:[%s2916 + $0x40] sm:$0xf]
    %v2934 = vld [vmem:[%s2916 + $0x44] sm:$0xf]
    %v2935 = vld [vmem:[%s2916 + $0x48] sm:$0xf]
    %v2936 = vld [vmem:[%s2916 + $0x4c] sm:$0xf]
    %v2937 = vld [vmem:[%s2916 + $0x50] sm:$0xf]
    %v2938 = vld [vmem:[%s2916 + $0x54] sm:$0xf]
    %v2939 = vld [vmem:[%s2916 + $0x58] sm:$0xf]
    %v2940 = vld [vmem:[%s2916 + $0x5c] sm:$0xf]
    %v2941 = vld [vmem:[%s2916 + $0x60] sm:$0xf]
    %v2942 = vld [vmem:[%s2916 + $0x64] sm:$0xf]
    %v2943 = vld [vmem:[%s2916 + $0x68] sm:$0xf]
    %v2944 = vld [vmem:[%s2916 + $0x6c] sm:$0xf]
    %v2945 = vld [vmem:[%s2916 + $0x70] sm:$0xf]
    %v2946 = vld [vmem:[%s2916 + $0x74] sm:$0xf]
    %v2947 = vld [vmem:[%s2916 + $0x78] sm:$0xf]
    %v2948 = vld [vmem:[%s2916 + $0x7c] sm:$0xf]
    %v2981 = vunpack.c.l.b16 %v2917
    %v2982 = vunpack.c.l.b16 %v2918
    %v2983 = vunpack.c.l.b16 %v2919
    %v2984 = vunpack.c.l.b16 %v2920
    %v2985 = vunpack.c.l.b16 %v2921
    %v2986 = vunpack.c.l.b16 %v2922
    %v2987 = vunpack.c.l.b16 %v2923
    %v2988 = vunpack.c.l.b16 %v2924
    %v2989 = vunpack.c.l.b16 %v2925
    %v2990 = vunpack.c.l.b16 %v2926
    %v2991 = vunpack.c.l.b16 %v2927
    %v2992 = vunpack.c.l.b16 %v2928
    %v2993 = vunpack.c.l.b16 %v2929
    %v2994 = vunpack.c.l.b16 %v2930
    %v2995 = vunpack.c.l.b16 %v2931
    %v2996 = vunpack.c.l.b16 %v2932
    %v2997 = vunpack.c.l.b16 %v2933
    %v2998 = vunpack.c.l.b16 %v2934
    %v2999 = vunpack.c.l.b16 %v2935
    %v3000 = vunpack.c.l.b16 %v2936
    %v3001 = vunpack.c.l.b16 %v2937
    %v3002 = vunpack.c.l.b16 %v2938
    %v3003 = vunpack.c.l.b16 %v2939
    %v3004 = vunpack.c.l.b16 %v2940
    %v3005 = vunpack.c.l.b16 %v2941
    %v3006 = vunpack.c.l.b16 %v2942
    %v3007 = vunpack.c.l.b16 %v2943
    %v3008 = vunpack.c.l.b16 %v2944
    %v3009 = vunpack.c.l.b16 %v2945
    %v3010 = vunpack.c.l.b16 %v2946
    %v3011 = vunpack.c.l.b16 %v2947
    %v3012 = vunpack.c.l.b16 %v2948
    %v3013 = vpack.c.b16 %v2982, %v2981
    %v3014 = vpack.c.b16 %v2984, %v2983
    %v3015 = vpack.c.b16 %v2986, %v2985
    %v3016 = vpack.c.b16 %v2988, %v2987
    %v3017 = vpack.c.b16 %v2990, %v2989
    %v3018 = vpack.c.b16 %v2992, %v2991
    %v3019 = vpack.c.b16 %v2994, %v2993
    %v3020 = vpack.c.b16 %v2996, %v2995
    %v3021 = vpack.c.b16 %v2998, %v2997
    %v3022 = vpack.c.b16 %v3000, %v2999
    %v3023 = vpack.c.b16 %v3002, %v3001
    %v3024 = vpack.c.b16 %v3004, %v3003
    %v3025 = vpack.c.b16 %v3006, %v3005
    %v3026 = vpack.c.b16 %v3008, %v3007
    %v3027 = vpack.c.b16 %v3010, %v3009
    %v3028 = vpack.c.b16 %v3012, %v3011
    %3045 = vmatpush.bf16.msra.mxu0 %v3020
    %3046 = vmatpush.bf16.msra.mxu0 %v3019
    %3047 = vmatpush.bf16.msra.mxu0 %v3018
    %3048 = vmatpush.bf16.msra.mxu0 %v3017
    %3049 = vmatpush.bf16.msra.mxu0 %v3016
    %3050 = vmatpush.bf16.msra.mxu0 %v3015
    %3051 = vmatpush.bf16.msra.mxu0 %v3014
    %3052 = vmatpush.bf16.msra.mxu0 %v3013
    %3053 = vmatmul.bf16.gmra.mxu0 %v2912
    %v3054 = vpop.f32.mrf.mxu0
    %v3055 = vadd.f32 0.0, %v3054
    %v3056 = vpop.f32.mrf.mxu0
    %v3057 = vadd.f32 0.0, %v3056
    %3058 = vmatmul.bf16.gmra.mxu0 %v2914
    %v3059 = vpop.f32.mrf.mxu0
    %v3060 = vadd.f32 0.0, %v3059
    %v3061 = vpop.f32.mrf.mxu0
    %v3062 = vadd.f32 0.0, %v3061
    %3063 = vdwg.mxu0
    %3064 = vmatpush.bf16.msra.mxu0 %v3028
    %3065 = vmatpush.bf16.msra.mxu0 %v3027
    %3066 = vmatpush.bf16.msra.mxu0 %v3026
    %3067 = vmatpush.bf16.msra.mxu0 %v3025
    %3068 = vmatpush.bf16.msra.mxu0 %v3024
    %3069 = vmatpush.bf16.msra.mxu0 %v3023
    %3070 = vmatpush.bf16.msra.mxu0 %v3022
    %3071 = vmatpush.bf16.msra.mxu0 %v3021
    %3072 = vmatmul.bf16.gmra.mxu0 %v2913
    %v3073 = vpop.f32.mrf.mxu0
    %v3074 = vadd.f32 %v3055, %v3073
    %v3075 = vpop.f32.mrf.mxu0
    %v3076 = vadd.f32 %v3057, %v3075
    %3077 = vmatmul.bf16.gmra.mxu0 %v2915
    %v3078 = vpop.f32.mrf.mxu0
    %v3079 = vadd.f32 %v3060, %v3078
    %v3080 = vpop.f32.mrf.mxu0
    %v3081 = vadd.f32 %v3062, %v3080
    %3082 = vdwg.mxu0
    %v3115 = vunpack.c.l.b16 %v2880
    %v3116 = vunpack.c.l.b16 %v2881
    %v3117 = vunpack.c.l.b16 %v2882
    %v3118 = vunpack.c.l.b16 %v2883
    %v3119 = vunpack.c.l.b16 %v2884
    %v3120 = vunpack.c.l.b16 %v2885
    %v3121 = vunpack.c.l.b16 %v2886
    %v3122 = vunpack.c.l.b16 %v2887
    %v3123 = vunpack.c.l.b16 %v2888
    %v3124 = vunpack.c.l.b16 %v2889
    %v3125 = vunpack.c.l.b16 %v2890
    %v3126 = vunpack.c.l.b16 %v2891
    %v3127 = vunpack.c.l.b16 %v2892
    %v3128 = vunpack.c.l.b16 %v2893
    %v3129 = vunpack.c.l.b16 %v2894
    %v3130 = vunpack.c.l.b16 %v2895
    %v3131 = vunpack.c.l.b16 %v2896
    %v3132 = vunpack.c.l.b16 %v2897
    %v3133 = vunpack.c.l.b16 %v2898
    %v3134 = vunpack.c.l.b16 %v2899
    %v3135 = vunpack.c.l.b16 %v2900
    %v3136 = vunpack.c.l.b16 %v2901
    %v3137 = vunpack.c.l.b16 %v2902
    %v3138 = vunpack.c.l.b16 %v2903
    %v3139 = vunpack.c.l.b16 %v2904
    %v3140 = vunpack.c.l.b16 %v2905
    %v3141 = vunpack.c.l.b16 %v2906
    %v3142 = vunpack.c.l.b16 %v2907
    %v3143 = vunpack.c.l.b16 %v2908
    %v3144 = vunpack.c.l.b16 %v2909
    %v3145 = vunpack.c.l.b16 %v2910
    %v3146 = vunpack.c.l.b16 %v2911
    %v3147 = vpack.c.b16 %v3116, %v3115
    %v3148 = vpack.c.b16 %v3118, %v3117
    %v3149 = vpack.c.b16 %v3120, %v3119
    %v3150 = vpack.c.b16 %v3122, %v3121
    %v3151 = vpack.c.b16 %v3124, %v3123
    %v3152 = vpack.c.b16 %v3126, %v3125
    %v3153 = vpack.c.b16 %v3128, %v3127
    %v3154 = vpack.c.b16 %v3130, %v3129
    %v3155 = vpack.c.b16 %v3132, %v3131
    %v3156 = vpack.c.b16 %v3134, %v3133
    %v3157 = vpack.c.b16 %v3136, %v3135
    %v3158 = vpack.c.b16 %v3138, %v3137
    %v3159 = vpack.c.b16 %v3140, %v3139
    %v3160 = vpack.c.b16 %v3142, %v3141
    %v3161 = vpack.c.b16 %v3144, %v3143
    %v3162 = vpack.c.b16 %v3146, %v3145
    %3179 = vmatpush.bf16.msra.mxu0 %v3154
    %3180 = vmatpush.bf16.msra.mxu0 %v3153
    %3181 = vmatpush.bf16.msra.mxu0 %v3152
    %3182 = vmatpush.bf16.msra.mxu0 %v3151
    %3183 = vmatpush.bf16.msra.mxu0 %v3150
    %3184 = vmatpush.bf16.msra.mxu0 %v3149
    %3185 = vmatpush.bf16.msra.mxu0 %v3148
    %3186 = vmatpush.bf16.msra.mxu0 %v3147
    %3187 = vmatmul.bf16.gmra.mxu0 %v2876
    %v3188 = vpop.f32.mrf.mxu0
    %v3189 = vadd.f32 %v3074, %v3188
    %v3190 = vpop.f32.mrf.mxu0
    %v3191 = vadd.f32 %v3076, %v3190
    %3192 = vmatmul.bf16.gmra.mxu0 %v2878
    %v3193 = vpop.f32.mrf.mxu0
    %v3194 = vadd.f32 %v3079, %v3193
    %v3195 = vpop.f32.mrf.mxu0
    %v3196 = vadd.f32 %v3081, %v3195
    %3197 = vdwg.mxu0
    %3198 = vmatpush.bf16.msra.mxu0 %v3162
    %3199 = vmatpush.bf16.msra.mxu0 %v3161
    %3200 = vmatpush.bf16.msra.mxu0 %v3160
    %3201 = vmatpush.bf16.msra.mxu0 %v3159
    %3202 = vmatpush.bf16.msra.mxu0 %v3158
    %3203 = vmatpush.bf16.msra.mxu0 %v3157
    %3204 = vmatpush.bf16.msra.mxu0 %v3156
    %3205 = vmatpush.bf16.msra.mxu0 %v3155
    %3206 = vmatmul.bf16.gmra.mxu0 %v2877
    %v3207 = vpop.f32.mrf.mxu0
    %v3208 = vadd.f32 %v3189, %v3207
    %v3209 = vpop.f32.mrf.mxu0
    %v3210 = vadd.f32 %v3191, %v3209
    %3211 = vmatmul.bf16.gmra.mxu0 %v2879
    %v3212 = vpop.f32.mrf.mxu0
    %v3213 = vadd.f32 %v3194, %v3212
    %v3214 = vpop.f32.mrf.mxu0
    %v3215 = vadd.f32 %v3196, %v3214
    %3216 = vdwg.mxu0
    %v3217 = vpack.c.bf16 %v2870, %v2868
    %v3218 = vpack.c.bf16 %v2871, %v2869
    %v3219 = vpack.c.bf16 %v2874, %v2872
    %v3220 = vpack.c.bf16 %v2875, %v2873
    %s3221 = scalar_lea.vmem [#allocation10], 256
    %v3222 = vld [vmem:[%s3221] sm:$0xf]
    %v3223 = vld [vmem:[%s3221 + $0x4] sm:$0xf]
    %v3224 = vld [vmem:[%s3221 + $0x8] sm:$0xf]
    %v3225 = vld [vmem:[%s3221 + $0xc] sm:$0xf]
    %v3226 = vld [vmem:[%s3221 + $0x10] sm:$0xf]
    %v3227 = vld [vmem:[%s3221 + $0x14] sm:$0xf]
    %v3228 = vld [vmem:[%s3221 + $0x18] sm:$0xf]
    %v3229 = vld [vmem:[%s3221 + $0x1c] sm:$0xf]
    %v3230 = vld [vmem:[%s3221 + $0x20] sm:$0xf]
    %v3231 = vld [vmem:[%s3221 + $0x24] sm:$0xf]
    %v3232 = vld [vmem:[%s3221 + $0x28] sm:$0xf]
    %v3233 = vld [vmem:[%s3221 + $0x2c] sm:$0xf]
    %v3234 = vld [vmem:[%s3221 + $0x30] sm:$0xf]
    %v3235 = vld [vmem:[%s3221 + $0x34] sm:$0xf]
    %v3236 = vld [vmem:[%s3221 + $0x38] sm:$0xf]
    %v3237 = vld [vmem:[%s3221 + $0x3c] sm:$0xf]
    %v3238 = vld [vmem:[%s3221 + $0x40] sm:$0xf]
    %v3239 = vld [vmem:[%s3221 + $0x44] sm:$0xf]
    %v3240 = vld [vmem:[%s3221 + $0x48] sm:$0xf]
    %v3241 = vld [vmem:[%s3221 + $0x4c] sm:$0xf]
    %v3242 = vld [vmem:[%s3221 + $0x50] sm:$0xf]
    %v3243 = vld [vmem:[%s3221 + $0x54] sm:$0xf]
    %v3244 = vld [vmem:[%s3221 + $0x58] sm:$0xf]
    %v3245 = vld [vmem:[%s3221 + $0x5c] sm:$0xf]
    %v3246 = vld [vmem:[%s3221 + $0x60] sm:$0xf]
    %v3247 = vld [vmem:[%s3221 + $0x64] sm:$0xf]
    %v3248 = vld [vmem:[%s3221 + $0x68] sm:$0xf]
    %v3249 = vld [vmem:[%s3221 + $0x6c] sm:$0xf]
    %v3250 = vld [vmem:[%s3221 + $0x70] sm:$0xf]
    %v3251 = vld [vmem:[%s3221 + $0x74] sm:$0xf]
    %v3252 = vld [vmem:[%s3221 + $0x78] sm:$0xf]
    %v3253 = vld [vmem:[%s3221 + $0x7c] sm:$0xf]
    %v3286 = vunpack.c.l.b16 %v3222
    %v3287 = vunpack.c.l.b16 %v3223
    %v3288 = vunpack.c.l.b16 %v3224
    %v3289 = vunpack.c.l.b16 %v3225
    %v3290 = vunpack.c.l.b16 %v3226
    %v3291 = vunpack.c.l.b16 %v3227
    %v3292 = vunpack.c.l.b16 %v3228
    %v3293 = vunpack.c.l.b16 %v3229
    %v3294 = vunpack.c.l.b16 %v3230
    %v3295 = vunpack.c.l.b16 %v3231
    %v3296 = vunpack.c.l.b16 %v3232
    %v3297 = vunpack.c.l.b16 %v3233
    %v3298 = vunpack.c.l.b16 %v3234
    %v3299 = vunpack.c.l.b16 %v3235
    %v3300 = vunpack.c.l.b16 %v3236
    %v3301 = vunpack.c.l.b16 %v3237
    %v3302 = vunpack.c.l.b16 %v3238
    %v3303 = vunpack.c.l.b16 %v3239
    %v3304 = vunpack.c.l.b16 %v3240
    %v3305 = vunpack.c.l.b16 %v3241
    %v3306 = vunpack.c.l.b16 %v3242
    %v3307 = vunpack.c.l.b16 %v3243
    %v3308 = vunpack.c.l.b16 %v3244
    %v3309 = vunpack.c.l.b16 %v3245
    %v3310 = vunpack.c.l.b16 %v3246
    %v3311 = vunpack.c.l.b16 %v3247
    %v3312 = vunpack.c.l.b16 %v3248
    %v3313 = vunpack.c.l.b16 %v3249
    %v3314 = vunpack.c.l.b16 %v3250
    %v3315 = vunpack.c.l.b16 %v3251
    %v3316 = vunpack.c.l.b16 %v3252
    %v3317 = vunpack.c.l.b16 %v3253
    %v3318 = vpack.c.b16 %v3287, %v3286
    %v3319 = vpack.c.b16 %v3289, %v3288
    %v3320 = vpack.c.b16 %v3291, %v3290
    %v3321 = vpack.c.b16 %v3293, %v3292
    %v3322 = vpack.c.b16 %v3295, %v3294
    %v3323 = vpack.c.b16 %v3297, %v3296
    %v3324 = vpack.c.b16 %v3299, %v3298
    %v3325 = vpack.c.b16 %v3301, %v3300
    %v3326 = vpack.c.b16 %v3303, %v3302
    %v3327 = vpack.c.b16 %v3305, %v3304
    %v3328 = vpack.c.b16 %v3307, %v3306
    %v3329 = vpack.c.b16 %v3309, %v3308
    %v3330 = vpack.c.b16 %v3311, %v3310
    %v3331 = vpack.c.b16 %v3313, %v3312
    %v3332 = vpack.c.b16 %v3315, %v3314
    %v3333 = vpack.c.b16 %v3317, %v3316
    %3350 = vmatpush.bf16.msra.mxu0 %v3325
    %3351 = vmatpush.bf16.msra.mxu0 %v3324
    %3352 = vmatpush.bf16.msra.mxu0 %v3323
    %3353 = vmatpush.bf16.msra.mxu0 %v3322
    %3354 = vmatpush.bf16.msra.mxu0 %v3321
    %3355 = vmatpush.bf16.msra.mxu0 %v3320
    %3356 = vmatpush.bf16.msra.mxu0 %v3319
    %3357 = vmatpush.bf16.msra.mxu0 %v3318
    %3358 = vmatmul.bf16.gmra.mxu0 %v3217
    %v3359 = vpop.f32.mrf.mxu0
    %v3360 = vadd.f32 0.0, %v3359
    %v3361 = vpop.f32.mrf.mxu0
    %v3362 = vadd.f32 0.0, %v3361
    %3363 = vmatmul.bf16.gmra.mxu0 %v3219
    %v3364 = vpop.f32.mrf.mxu0
    %v3365 = vadd.f32 0.0, %v3364
    %v3366 = vpop.f32.mrf.mxu0
    %v3367 = vadd.f32 0.0, %v3366
    %3368 = vdwg.mxu0
    %3369 = vmatpush.bf16.msra.mxu0 %v3333
    %3370 = vmatpush.bf16.msra.mxu0 %v3332
    %3371 = vmatpush.bf16.msra.mxu0 %v3331
    %3372 = vmatpush.bf16.msra.mxu0 %v3330
    %3373 = vmatpush.bf16.msra.mxu0 %v3329
    %3374 = vmatpush.bf16.msra.mxu0 %v3328
    %3375 = vmatpush.bf16.msra.mxu0 %v3327
    %3376 = vmatpush.bf16.msra.mxu0 %v3326
    %3377 = vmatmul.bf16.gmra.mxu0 %v3218
    %v3378 = vpop.f32.mrf.mxu0
    %v3379 = vadd.f32 %v3360, %v3378
    %v3380 = vpop.f32.mrf.mxu0
    %v3381 = vadd.f32 %v3362, %v3380
    %3382 = vmatmul.bf16.gmra.mxu0 %v3220
    %v3383 = vpop.f32.mrf.mxu0
    %v3384 = vadd.f32 %v3365, %v3383
    %v3385 = vpop.f32.mrf.mxu0
    %v3386 = vadd.f32 %v3367, %v3385
    %3387 = vdwg.mxu0
    %v3388 = vadd.f32 %v3208, %v3379
    %v3389 = vadd.f32 %v3210, %v3381
    %v3390 = vadd.f32 %v3213, %v3384
    %v3391 = vadd.f32 %v3215, %v3386
    %v3392 = vld [vmem:[#allocation11] sm:$0x1]
    %v3394 = vperm.slane %v3392, 0
    %v3396 = vadd.f32 %v3388, %v3394
    %v3397 = vadd.f32 %v3389, %v3394
    %v3398 = vadd.f32 %v3390, %v3394
    %v3399 = vadd.f32 %v3391, %v3394
    %vm3400 = vcmp.ge.f32.partialorder %v3396, 0.0
    %vm3401 = vcmp.ge.f32.partialorder %v3397, 0.0
    %vm3402 = vcmp.ge.f32.partialorder %v3398, 0.0
    %vm3403 = vcmp.ge.f32.partialorder %v3399, 0.0
    %v3404 = vmul.f32 %v3396, 0.01
    %v3405 = vmul.f32 %v3397, 0.01
    %v3406 = vmul.f32 %v3398, 0.01
    %v3407 = vmul.f32 %v3399, 0.01
    %v3408 = vsel %vm3400, %v3396, %v3404
    %v3409 = vsel %vm3401, %v3397, %v3405
    %v3410 = vsel %vm3402, %v3398, %v3406
    %v3411 = vsel %vm3403, %v3399, %v3407
    %3412 = vrot.lane.b32.xlu0 %v3408, 112
    %v3413 = vpop.permute.xlu0 %3412
    %3414 = vrot.lane.b32.xlu0 %v3409, 112
    %v3415 = vpop.permute.xlu0 %3414
    %3416 = vrot.lane.b32.xlu0 %v3410, 112
    %v3417 = vpop.permute.xlu0 %3416
    %3418 = vrot.lane.b32.xlu0 %v3411, 112
    %v3419 = vpop.permute.xlu0 %3418
    %v3420 = vmax.f32 %v3408, %v3413
    %v3421 = vmax.f32 %v3409, %v3415
    %v3422 = vmax.f32 %v3410, %v3417
    %v3423 = vmax.f32 %v3411, %v3419
    %v3424 = vrot.slane %v3420, 1
    %v3425 = vrot.slane %v3421, 1
    %v3426 = vrot.slane %v3422, 1
    %v3427 = vrot.slane %v3423, 1
    %v3428 = vsel %vm483, %v3426, %v3427
    %v3429 = vsel %vm483, %v3425, %v3426
    %v3430 = vsel %vm483, %v3424, %v3425
    %v3431 = vsel %vm483, %v3427, %v3424
    %v3432 = vmax.f32 %v3420, %v3430
    %v3433 = vmax.f32 %v3421, %v3429
    %v3434 = vmax.f32 %v3422, %v3428
    %v3435 = vmax.f32 %v3423, %v3431
    %v3436 = vld [vmem:[#allocation19] sm:$0xf]
    %v3437 = vld [vmem:[#allocation19 + $0x4] sm:$0xf]
    %v3438 = vpack.c.bf16 %v3433, %v3432
    %v3439 = vpack.c.bf16 %v3435, %v3434
    %v3442 = vunpack.c.l.b16 %v3436
    %v3443 = vunpack.c.l.b16 %v3437
    %v3444 = vpack.c.b16 %v3443, %v3442
    %v3446 = vsel %vm561, %v3444, 0
    %3448 = vmatpush.bf16.msra.mxu0 0
    %3449 = vmatpush.bf16.msra.mxu0 0
    %3450 = vmatpush.bf16.msra.mxu0 0
    %3451 = vmatpush.bf16.msra.mxu0 0
    %3452 = vmatpush.bf16.msra.mxu0 0
    %3453 = vmatpush.bf16.msra.mxu0 0
    %3454 = vmatpush.bf16.msra.mxu0 %v3439
    %3455 = vmatpush.bf16.msra.mxu0 %v3438
    %3456 = vmatmul.bf16.gmra.mxu0 %v3446
    %v3457 = vpop.f32.mrf.mxu0
    %v3458 = vadd.f32 0.0, %v3457
    %v3459 = vpop.f32.mrf.mxu0
    %v3460 = vadd.f32 0.0, %v3459
    %3461 = vdwg.mxu0
    %v3462 = vand.u32 %v354, 7
    %v3463 = vand.u32 %v355, 7
    %vm3464 = vcmp.ge.s32.totalorder %v3462, 1
    %vm3465 = vcmp.ge.s32.totalorder %v3463, 1
    %v3466 = vrot.slane %v3458, 7
    %v3467 = vrot.slane %v3460, 7
    %v3468 = vsel %vm418, %v3466, %v3467
    %v3469 = vsel %vm418, %v3467, %v3466
    %v3470 = vsel %vm3464, %v3469, 0.0
    %v3471 = vsel %vm3465, %v3468, 0.0
    %vm3472 = vcmp.le.s32.totalorder %v3462, 6
    %vm3473 = vcmp.le.s32.totalorder %v3463, 6
    %v3474 = vrot.slane %v3458, 1
    %v3475 = vrot.slane %v3460, 1
    %v3476 = vsel %vm483, %v3474, %v3475
    %v3477 = vsel %vm483, %v3475, %v3474
    %v3478 = vsel %vm3472, %v3476, 0.0
    %v3479 = vsel %vm3473, %v3477, 0.0
    %v3480 = vpack.c.bf16 %v3471, %v3470
    %v3481 = vld [vmem:[#allocation13] sm:$0xf]
    %v3482 = vld [vmem:[#allocation13 + $0x4] sm:$0xf]
    %v3483 = vld [vmem:[#allocation13 + $0x8] sm:$0xf]
    %v3484 = vld [vmem:[#allocation13 + $0xc] sm:$0xf]
    %v3485 = vld [vmem:[#allocation13 + $0x10] sm:$0xf]
    %v3486 = vld [vmem:[#allocation13 + $0x14] sm:$0xf]
    %v3487 = vld [vmem:[#allocation13 + $0x18] sm:$0xf]
    %v3488 = vld [vmem:[#allocation13 + $0x1c] sm:$0xf]
    %v3489 = vld [vmem:[#allocation13 + $0x20] sm:$0xf]
    %v3490 = vld [vmem:[#allocation13 + $0x24] sm:$0xf]
    %v3491 = vld [vmem:[#allocation13 + $0x28] sm:$0xf]
    %v3492 = vld [vmem:[#allocation13 + $0x2c] sm:$0xf]
    %v3493 = vld [vmem:[#allocation13 + $0x30] sm:$0xf]
    %v3494 = vld [vmem:[#allocation13 + $0x34] sm:$0xf]
    %v3495 = vld [vmem:[#allocation13 + $0x38] sm:$0xf]
    %v3496 = vld [vmem:[#allocation13 + $0x3c] sm:$0xf]
    %v3497 = vpack.c.bf16 %v3460, %v3458
    %s3498 = scalar_lea.vmem [#allocation13], 64
    %v3499 = vld [vmem:[%s3498] sm:$0xf]
    %v3500 = vld [vmem:[%s3498 + $0x4] sm:$0xf]
    %v3501 = vld [vmem:[%s3498 + $0x8] sm:$0xf]
    %v3502 = vld [vmem:[%s3498 + $0xc] sm:$0xf]
    %v3503 = vld [vmem:[%s3498 + $0x10] sm:$0xf]
    %v3504 = vld [vmem:[%s3498 + $0x14] sm:$0xf]
    %v3505 = vld [vmem:[%s3498 + $0x18] sm:$0xf]
    %v3506 = vld [vmem:[%s3498 + $0x1c] sm:$0xf]
    %v3507 = vld [vmem:[%s3498 + $0x20] sm:$0xf]
    %v3508 = vld [vmem:[%s3498 + $0x24] sm:$0xf]
    %v3509 = vld [vmem:[%s3498 + $0x28] sm:$0xf]
    %v3510 = vld [vmem:[%s3498 + $0x2c] sm:$0xf]
    %v3511 = vld [vmem:[%s3498 + $0x30] sm:$0xf]
    %v3512 = vld [vmem:[%s3498 + $0x34] sm:$0xf]
    %v3513 = vld [vmem:[%s3498 + $0x38] sm:$0xf]
    %v3514 = vld [vmem:[%s3498 + $0x3c] sm:$0xf]
    %v3531 = vunpack.c.l.b16 %v3499
    %v3532 = vunpack.c.l.b16 %v3500
    %v3533 = vunpack.c.l.b16 %v3501
    %v3534 = vunpack.c.l.b16 %v3502
    %v3535 = vunpack.c.l.b16 %v3503
    %v3536 = vunpack.c.l.b16 %v3504
    %v3537 = vunpack.c.l.b16 %v3505
    %v3538 = vunpack.c.l.b16 %v3506
    %v3539 = vunpack.c.l.b16 %v3507
    %v3540 = vunpack.c.l.b16 %v3508
    %v3541 = vunpack.c.l.b16 %v3509
    %v3542 = vunpack.c.l.b16 %v3510
    %v3543 = vunpack.c.l.b16 %v3511
    %v3544 = vunpack.c.l.b16 %v3512
    %v3545 = vunpack.c.l.b16 %v3513
    %v3546 = vunpack.c.l.b16 %v3514
    %v3547 = vpack.c.b16 %v3532, %v3531
    %v3548 = vpack.c.b16 %v3534, %v3533
    %v3549 = vpack.c.b16 %v3536, %v3535
    %v3550 = vpack.c.b16 %v3538, %v3537
    %v3551 = vpack.c.b16 %v3540, %v3539
    %v3552 = vpack.c.b16 %v3542, %v3541
    %v3553 = vpack.c.b16 %v3544, %v3543
    %v3554 = vpack.c.b16 %v3546, %v3545
    %3563 = vmatpush.bf16.msra.mxu0 %v3554
    %3564 = vmatpush.bf16.msra.mxu0 %v3553
    %3565 = vmatpush.bf16.msra.mxu0 %v3552
    %3566 = vmatpush.bf16.msra.mxu0 %v3551
    %3567 = vmatpush.bf16.msra.mxu0 %v3550
    %3568 = vmatpush.bf16.msra.mxu0 %v3549
    %3569 = vmatpush.bf16.msra.mxu0 %v3548
    %3570 = vmatpush.bf16.msra.mxu0 %v3547
    %3571 = vmatmul.bf16.gmra.mxu0 %v3497
    %v3572 = vpop.f32.mrf.mxu0
    %v3573 = vadd.f32 0.0, %v3572
    %v3574 = vpop.f32.mrf.mxu0
    %v3575 = vadd.f32 0.0, %v3574
    %3576 = vdwg.mxu0
    %v3593 = vunpack.c.l.b16 %v3481
    %v3594 = vunpack.c.l.b16 %v3482
    %v3595 = vunpack.c.l.b16 %v3483
    %v3596 = vunpack.c.l.b16 %v3484
    %v3597 = vunpack.c.l.b16 %v3485
    %v3598 = vunpack.c.l.b16 %v3486
    %v3599 = vunpack.c.l.b16 %v3487
    %v3600 = vunpack.c.l.b16 %v3488
    %v3601 = vunpack.c.l.b16 %v3489
    %v3602 = vunpack.c.l.b16 %v3490
    %v3603 = vunpack.c.l.b16 %v3491
    %v3604 = vunpack.c.l.b16 %v3492
    %v3605 = vunpack.c.l.b16 %v3493
    %v3606 = vunpack.c.l.b16 %v3494
    %v3607 = vunpack.c.l.b16 %v3495
    %v3608 = vunpack.c.l.b16 %v3496
    %v3609 = vpack.c.b16 %v3594, %v3593
    %v3610 = vpack.c.b16 %v3596, %v3595
    %v3611 = vpack.c.b16 %v3598, %v3597
    %v3612 = vpack.c.b16 %v3600, %v3599
    %v3613 = vpack.c.b16 %v3602, %v3601
    %v3614 = vpack.c.b16 %v3604, %v3603
    %v3615 = vpack.c.b16 %v3606, %v3605
    %v3616 = vpack.c.b16 %v3608, %v3607
    %3625 = vmatpush.bf16.msra.mxu0 %v3616
    %3626 = vmatpush.bf16.msra.mxu0 %v3615
    %3627 = vmatpush.bf16.msra.mxu0 %v3614
    %3628 = vmatpush.bf16.msra.mxu0 %v3613
    %3629 = vmatpush.bf16.msra.mxu0 %v3612
    %3630 = vmatpush.bf16.msra.mxu0 %v3611
    %3631 = vmatpush.bf16.msra.mxu0 %v3610
    %3632 = vmatpush.bf16.msra.mxu0 %v3609
    %3633 = vmatmul.bf16.gmra.mxu0 %v3480
    %v3634 = vpop.f32.mrf.mxu0
    %v3635 = vadd.f32 %v3573, %v3634
    %v3636 = vpop.f32.mrf.mxu0
    %v3637 = vadd.f32 %v3575, %v3636
    %3638 = vdwg.mxu0
    %v3639 = vpack.c.bf16 %v3479, %v3478
    %s3640 = scalar_lea.vmem [#allocation13], 128
    %v3641 = vld [vmem:[%s3640] sm:$0xf]
    %v3642 = vld [vmem:[%s3640 + $0x4] sm:$0xf]
    %v3643 = vld [vmem:[%s3640 + $0x8] sm:$0xf]
    %v3644 = vld [vmem:[%s3640 + $0xc] sm:$0xf]
    %v3645 = vld [vmem:[%s3640 + $0x10] sm:$0xf]
    %v3646 = vld [vmem:[%s3640 + $0x14] sm:$0xf]
    %v3647 = vld [vmem:[%s3640 + $0x18] sm:$0xf]
    %v3648 = vld [vmem:[%s3640 + $0x1c] sm:$0xf]
    %v3649 = vld [vmem:[%s3640 + $0x20] sm:$0xf]
    %v3650 = vld [vmem:[%s3640 + $0x24] sm:$0xf]
    %v3651 = vld [vmem:[%s3640 + $0x28] sm:$0xf]
    %v3652 = vld [vmem:[%s3640 + $0x2c] sm:$0xf]
    %v3653 = vld [vmem:[%s3640 + $0x30] sm:$0xf]
    %v3654 = vld [vmem:[%s3640 + $0x34] sm:$0xf]
    %v3655 = vld [vmem:[%s3640 + $0x38] sm:$0xf]
    %v3656 = vld [vmem:[%s3640 + $0x3c] sm:$0xf]
    %v3673 = vunpack.c.l.b16 %v3641
    %v3674 = vunpack.c.l.b16 %v3642
    %v3675 = vunpack.c.l.b16 %v3643
    %v3676 = vunpack.c.l.b16 %v3644
    %v3677 = vunpack.c.l.b16 %v3645
    %v3678 = vunpack.c.l.b16 %v3646
    %v3679 = vunpack.c.l.b16 %v3647
    %v3680 = vunpack.c.l.b16 %v3648
    %v3681 = vunpack.c.l.b16 %v3649
    %v3682 = vunpack.c.l.b16 %v3650
    %v3683 = vunpack.c.l.b16 %v3651
    %v3684 = vunpack.c.l.b16 %v3652
    %v3685 = vunpack.c.l.b16 %v3653
    %v3686 = vunpack.c.l.b16 %v3654
    %v3687 = vunpack.c.l.b16 %v3655
    %v3688 = vunpack.c.l.b16 %v3656
    %v3689 = vpack.c.b16 %v3674, %v3673
    %v3690 = vpack.c.b16 %v3676, %v3675
    %v3691 = vpack.c.b16 %v3678, %v3677
    %v3692 = vpack.c.b16 %v3680, %v3679
    %v3693 = vpack.c.b16 %v3682, %v3681
    %v3694 = vpack.c.b16 %v3684, %v3683
    %v3695 = vpack.c.b16 %v3686, %v3685
    %v3696 = vpack.c.b16 %v3688, %v3687
    %3705 = vmatpush.bf16.msra.mxu0 %v3696
    %3706 = vmatpush.bf16.msra.mxu0 %v3695
    %3707 = vmatpush.bf16.msra.mxu0 %v3694
    %3708 = vmatpush.bf16.msra.mxu0 %v3693
    %3709 = vmatpush.bf16.msra.mxu0 %v3692
    %3710 = vmatpush.bf16.msra.mxu0 %v3691
    %3711 = vmatpush.bf16.msra.mxu0 %v3690
    %3712 = vmatpush.bf16.msra.mxu0 %v3689
    %3713 = vmatmul.bf16.gmra.mxu0 %v3639
    %v3714 = vpop.f32.mrf.mxu0
    %v3715 = vadd.f32 0.0, %v3714
    %v3716 = vpop.f32.mrf.mxu0
    %v3717 = vadd.f32 0.0, %v3716
    %3718 = vdwg.mxu0
    %v3719 = vadd.f32 %v3635, %v3715
    %v3720 = vadd.f32 %v3637, %v3717
    %v3721 = vld [vmem:[#allocation14] sm:$0x1]
    %v3723 = vperm.slane %v3721, 0
    %v3725 = vadd.f32 %v3719, %v3723
    %v3726 = vadd.f32 %v3720, %v3723
    %vm3727 = vcmp.ge.f32.partialorder %v3725, 0.0
    %vm3728 = vcmp.ge.f32.partialorder %v3726, 0.0
    %v3729 = vmul.f32 %v3725, 0.01
    %v3730 = vmul.f32 %v3726, 0.01
    %v3731 = vsel %vm3727, %v3725, %v3729
    %v3732 = vsel %vm3728, %v3726, %v3730
    %v3733 = vld [vmem:[#allocation20] sm:$0x3]
    %vm3734 = vcmask 130048
    %v3736 = vsel %vm3734, %v3733, 0
    %3738 = vmatpush.msra.mxu0 0.0
    %3739 = vmatpush.msra.mxu0 0.0
    %3740 = vmatpush.msra.mxu0 0.0
    %3741 = vmatpush.msra.mxu0 0.0
    %3742 = vmatpush.msra.mxu0 0.0
    %3743 = vmatpush.msra.mxu0 0.0
    %3744 = vmatpush.msra.mxu0 0.0
    %3745 = vmatpush.msra.mxu0 0.0
    %3746 = vmatpush.msra.mxu0 0.0
    %3747 = vmatpush.msra.mxu0 0.0
    %3748 = vmatpush.msra.mxu0 0.0
    %3749 = vmatpush.msra.mxu0 0.0
    %3750 = vmatpush.msra.mxu0 0.0
    %3751 = vmatpush.msra.mxu0 0.0
    %3752 = vmatpush.msra.mxu0 %v3732
    %3753 = vmatpush.msra.mxu0 %v3731
    %3754 = vmatmul.f32.gmra.mxu0 %v3736
    %v3755 = vpop.f32.mrf.mxu0
    %v3756 = vadd.f32 0.0, %v3755
    %3757 = vdwg.mxu0
    %v3758 = vld [vmem:[#allocation22] sm:$0xff]
    %v3759 = vld [vmem:[#allocation22 + $0x8] sm:$0xff]
    %v3760 = vld [vmem:[#allocation22 + $0x10] sm:$0xff]
    %v3761 = vld [vmem:[#allocation22 + $0x18] sm:$0xff]
    %v3762 = vld [vmem:[#allocation22 + $0x20] sm:$0xff]
    %v3763 = vld [vmem:[#allocation22 + $0x28] sm:$0xff]
    %v3764 = vld [vmem:[#allocation22 + $0x30] sm:$0xff]
    %v3765 = vld [vmem:[#allocation22 + $0x38] sm:$0xff]
    %v3766 = vld [vmem:[#allocation22 + $0x40] sm:$0xff]
    %v3767 = vld [vmem:[#allocation22 + $0x48] sm:$0xff]
    %v3768 = vld [vmem:[#allocation22 + $0x50] sm:$0xff]
    %v3769 = vld [vmem:[#allocation22 + $0x58] sm:$0xff]
    %v3770 = vld [vmem:[#allocation22 + $0x60] sm:$0xff]
    %v3771 = vld [vmem:[#allocation22 + $0x68] sm:$0xff]
    %v3772 = vld [vmem:[#allocation22 + $0x70] sm:$0xff]
    %v3773 = vld [vmem:[#allocation22 + $0x78] sm:$0xff]
    %v3774 = vld [vmem:[#allocation22 + $0x80] sm:$0xff]
    %v3775 = vld [vmem:[#allocation22 + $0x88] sm:$0xff]
    %v3776 = vld [vmem:[#allocation22 + $0x90] sm:$0xff]
    %v3777 = vld [vmem:[#allocation22 + $0x98] sm:$0xff]
    %v3778 = vld [vmem:[#allocation22 + $0xa0] sm:$0xff]
    %v3779 = vld [vmem:[#allocation22 + $0xa8] sm:$0xff]
    %v3780 = vld [vmem:[#allocation22 + $0xb0] sm:$0xff]
    %v3781 = vld [vmem:[#allocation22 + $0xb8] sm:$0xff]
    %v3782 = vld [vmem:[#allocation22 + $0xc0] sm:$0xff]
    %v3783 = vld [vmem:[#allocation22 + $0xc8] sm:$0xff]
    %v3784 = vld [vmem:[#allocation22 + $0xd0] sm:$0xff]
    %v3785 = vld [vmem:[#allocation22 + $0xd8] sm:$0xff]
    %v3786 = vld [vmem:[#allocation22 + $0xe0] sm:$0xff]
    %v3787 = vld [vmem:[#allocation22 + $0xe8] sm:$0xff]
    %v3788 = vld [vmem:[#allocation22 + $0xf0] sm:$0xff]
    %v3789 = vld [vmem:[#allocation22 + $0xf8] sm:$0xff]
    %v3790 = vld [vmem:[#allocation22 + $0x100] sm:$0xff]
    %v3791 = vld [vmem:[#allocation22 + $0x108] sm:$0xff]
    %v3792 = vld [vmem:[#allocation22 + $0x110] sm:$0xff]
    %v3793 = vld [vmem:[#allocation22 + $0x118] sm:$0xff]
    %v3794 = vld [vmem:[#allocation22 + $0x120] sm:$0xff]
    %v3795 = vld [vmem:[#allocation22 + $0x128] sm:$0xff]
    %v3796 = vld [vmem:[#allocation22 + $0x130] sm:$0xff]
    %v3797 = vld [vmem:[#allocation22 + $0x138] sm:$0xff]
    %v3798 = vld [vmem:[#allocation22 + $0x140] sm:$0xff]
    %v3799 = vld [vmem:[#allocation22 + $0x148] sm:$0xff]
    %v3800 = vld [vmem:[#allocation22 + $0x150] sm:$0xff]
    %v3801 = vld [vmem:[#allocation22 + $0x158] sm:$0xff]
    %v3802 = vld [vmem:[#allocation22 + $0x160] sm:$0xff]
    %v3803 = vld [vmem:[#allocation22 + $0x168] sm:$0xff]
    %v3804 = vld [vmem:[#allocation22 + $0x170] sm:$0xff]
    %v3805 = vld [vmem:[#allocation22 + $0x178] sm:$0xff]
    %v3806 = vld [vmem:[#allocation22 + $0x180] sm:$0xff]
    %v3807 = vld [vmem:[#allocation22 + $0x188] sm:$0xff]
    %v3808 = vld [vmem:[#allocation22 + $0x190] sm:$0xff]
    %v3809 = vld [vmem:[#allocation22 + $0x198] sm:$0xff]
    %v3810 = vld [vmem:[#allocation22 + $0x1a0] sm:$0xff]
    %v3811 = vld [vmem:[#allocation22 + $0x1a8] sm:$0xff]
    %v3812 = vld [vmem:[#allocation22 + $0x1b0] sm:$0xff]
    %v3813 = vld [vmem:[#allocation22 + $0x1b8] sm:$0xff]
    %v3814 = vld [vmem:[#allocation22 + $0x1c0] sm:$0xff]
    %v3815 = vld [vmem:[#allocation22 + $0x1c8] sm:$0xff]
    %v3816 = vld [vmem:[#allocation22 + $0x1d0] sm:$0xff]
    %v3817 = vld [vmem:[#allocation22 + $0x1d8] sm:$0xff]
    %v3818 = vld [vmem:[#allocation22 + $0x1e0] sm:$0xff]
    %v3819 = vld [vmem:[#allocation22 + $0x1e8] sm:$0xff]
    %v3820 = vld [vmem:[#allocation22 + $0x1f0] sm:$0xff]
    %v3821 = vld [vmem:[#allocation22 + $0x1f8] sm:$0xff]
    %s3822 = scalar_lea.vmem [#allocation20], 2
    %v3823 = vld [vmem:[%s3822] sm:$0x3]
    %v3825 = vsel %vm3734, %v3823, 0
    %3827 = vmatpush.msra.mxu0 0.0
    %3828 = vmatpush.msra.mxu0 0.0
    %3829 = vmatpush.msra.mxu0 0.0
    %3830 = vmatpush.msra.mxu0 0.0
    %3831 = vmatpush.msra.mxu0 0.0
    %3832 = vmatpush.msra.mxu0 0.0
    %3833 = vmatpush.msra.mxu0 0.0
    %3834 = vmatpush.msra.mxu0 0.0
    %3835 = vmatpush.msra.mxu0 0.0
    %3836 = vmatpush.msra.mxu0 0.0
    %3837 = vmatpush.msra.mxu0 0.0
    %3838 = vmatpush.msra.mxu0 0.0
    %3839 = vmatpush.msra.mxu0 0.0
    %3840 = vmatpush.msra.mxu0 0.0
    %3841 = vmatpush.msra.mxu0 %v3732
    %3842 = vmatpush.msra.mxu0 %v3731
    %3843 = vmatmul.f32.gmra.mxu0 %v3825
    %v3844 = vpop.f32.mrf.mxu0
    %v3845 = vadd.f32 0.0, %v3844
    %3846 = vdwg.mxu0
    %s3847 = scalar_lea.vmem [#allocation22], 512
    %v3848 = vld [vmem:[%s3847] sm:$0xff]
    %v3849 = vld [vmem:[%s3847 + $0x8] sm:$0xff]
    %v3850 = vld [vmem:[%s3847 + $0x10] sm:$0xff]
    %v3851 = vld [vmem:[%s3847 + $0x18] sm:$0xff]
    %v3852 = vld [vmem:[%s3847 + $0x20] sm:$0xff]
    %v3853 = vld [vmem:[%s3847 + $0x28] sm:$0xff]
    %v3854 = vld [vmem:[%s3847 + $0x30] sm:$0xff]
    %v3855 = vld [vmem:[%s3847 + $0x38] sm:$0xff]
    %v3856 = vld [vmem:[%s3847 + $0x40] sm:$0xff]
    %v3857 = vld [vmem:[%s3847 + $0x48] sm:$0xff]
    %v3858 = vld [vmem:[%s3847 + $0x50] sm:$0xff]
    %v3859 = vld [vmem:[%s3847 + $0x58] sm:$0xff]
    %v3860 = vld [vmem:[%s3847 + $0x60] sm:$0xff]
    %v3861 = vld [vmem:[%s3847 + $0x68] sm:$0xff]
    %v3862 = vld [vmem:[%s3847 + $0x70] sm:$0xff]
    %v3863 = vld [vmem:[%s3847 + $0x78] sm:$0xff]
    %v3864 = vld [vmem:[%s3847 + $0x80] sm:$0xff]
    %v3865 = vld [vmem:[%s3847 + $0x88] sm:$0xff]
    %v3866 = vld [vmem:[%s3847 + $0x90] sm:$0xff]
    %v3867 = vld [vmem:[%s3847 + $0x98] sm:$0xff]
    %v3868 = vld [vmem:[%s3847 + $0xa0] sm:$0xff]
    %v3869 = vld [vmem:[%s3847 + $0xa8] sm:$0xff]
    %v3870 = vld [vmem:[%s3847 + $0xb0] sm:$0xff]
    %v3871 = vld [vmem:[%s3847 + $0xb8] sm:$0xff]
    %v3872 = vld [vmem:[%s3847 + $0xc0] sm:$0xff]
    %v3873 = vld [vmem:[%s3847 + $0xc8] sm:$0xff]
    %v3874 = vld [vmem:[%s3847 + $0xd0] sm:$0xff]
    %v3875 = vld [vmem:[%s3847 + $0xd8] sm:$0xff]
    %v3876 = vld [vmem:[%s3847 + $0xe0] sm:$0xff]
    %v3877 = vld [vmem:[%s3847 + $0xe8] sm:$0xff]
    %v3878 = vld [vmem:[%s3847 + $0xf0] sm:$0xff]
    %v3879 = vld [vmem:[%s3847 + $0xf8] sm:$0xff]
    %v3880 = vld [vmem:[%s3847 + $0x100] sm:$0xff]
    %v3881 = vld [vmem:[%s3847 + $0x108] sm:$0xff]
    %v3882 = vld [vmem:[%s3847 + $0x110] sm:$0xff]
    %v3883 = vld [vmem:[%s3847 + $0x118] sm:$0xff]
    %v3884 = vld [vmem:[%s3847 + $0x120] sm:$0xff]
    %v3885 = vld [vmem:[%s3847 + $0x128] sm:$0xff]
    %v3886 = vld [vmem:[%s3847 + $0x130] sm:$0xff]
    %v3887 = vld [vmem:[%s3847 + $0x138] sm:$0xff]
    %v3888 = vld [vmem:[%s3847 + $0x140] sm:$0xff]
    %v3889 = vld [vmem:[%s3847 + $0x148] sm:$0xff]
    %v3890 = vld [vmem:[%s3847 + $0x150] sm:$0xff]
    %v3891 = vld [vmem:[%s3847 + $0x158] sm:$0xff]
    %v3892 = vld [vmem:[%s3847 + $0x160] sm:$0xff]
    %v3893 = vld [vmem:[%s3847 + $0x168] sm:$0xff]
    %v3894 = vld [vmem:[%s3847 + $0x170] sm:$0xff]
    %v3895 = vld [vmem:[%s3847 + $0x178] sm:$0xff]
    %v3896 = vld [vmem:[%s3847 + $0x180] sm:$0xff]
    %v3897 = vld [vmem:[%s3847 + $0x188] sm:$0xff]
    %v3898 = vld [vmem:[%s3847 + $0x190] sm:$0xff]
    %v3899 = vld [vmem:[%s3847 + $0x198] sm:$0xff]
    %v3900 = vld [vmem:[%s3847 + $0x1a0] sm:$0xff]
    %v3901 = vld [vmem:[%s3847 + $0x1a8] sm:$0xff]
    %v3902 = vld [vmem:[%s3847 + $0x1b0] sm:$0xff]
    %v3903 = vld [vmem:[%s3847 + $0x1b8] sm:$0xff]
    %v3904 = vld [vmem:[%s3847 + $0x1c0] sm:$0xff]
    %v3905 = vld [vmem:[%s3847 + $0x1c8] sm:$0xff]
    %v3906 = vld [vmem:[%s3847 + $0x1d0] sm:$0xff]
    %v3907 = vld [vmem:[%s3847 + $0x1d8] sm:$0xff]
    %v3908 = vld [vmem:[%s3847 + $0x1e0] sm:$0xff]
    %v3909 = vld [vmem:[%s3847 + $0x1e8] sm:$0xff]
    %v3910 = vld [vmem:[%s3847 + $0x1f0] sm:$0xff]
    %v3911 = vld [vmem:[%s3847 + $0x1f8] sm:$0xff]
    %3912 = vmatpush.msra.mxu0 %v3908
    %3913 = vmatpush.msra.mxu0 %v3904
    %3914 = vmatpush.msra.mxu0 %v3900
    %3915 = vmatpush.msra.mxu0 %v3896
    %3916 = vmatpush.msra.mxu0 %v3892
    %3917 = vmatpush.msra.mxu0 %v3888
    %3918 = vmatpush.msra.mxu0 %v3884
    %3919 = vmatpush.msra.mxu0 %v3880
    %3920 = vmatpush.msra.mxu0 %v3876
    %3921 = vmatpush.msra.mxu0 %v3872
    %3922 = vmatpush.msra.mxu0 %v3868
    %3923 = vmatpush.msra.mxu0 %v3864
    %3924 = vmatpush.msra.mxu0 %v3860
    %3925 = vmatpush.msra.mxu0 %v3856
    %3926 = vmatpush.msra.mxu0 %v3852
    %3927 = vmatpush.msra.mxu0 %v3848
    %3928 = vmatmul.f32.gmra.mxu0 %v3845
    %v3929 = vpop.f32.mrf.mxu0
    %v3930 = vadd.f32 0.0, %v3929
    %3931 = vdwg.mxu0
    %3932 = vmatpush.msra.mxu0 %v3909
    %3933 = vmatpush.msra.mxu0 %v3905
    %3934 = vmatpush.msra.mxu0 %v3901
    %3935 = vmatpush.msra.mxu0 %v3897
    %3936 = vmatpush.msra.mxu0 %v3893
    %3937 = vmatpush.msra.mxu0 %v3889
    %3938 = vmatpush.msra.mxu0 %v3885
    %3939 = vmatpush.msra.mxu0 %v3881
    %3940 = vmatpush.msra.mxu0 %v3877
    %3941 = vmatpush.msra.mxu0 %v3873
    %3942 = vmatpush.msra.mxu0 %v3869
    %3943 = vmatpush.msra.mxu0 %v3865
    %3944 = vmatpush.msra.mxu0 %v3861
    %3945 = vmatpush.msra.mxu0 %v3857
    %3946 = vmatpush.msra.mxu0 %v3853
    %3947 = vmatpush.msra.mxu0 %v3849
    %3948 = vmatmul.f32.gmra.mxu0 %v3845
    %v3949 = vpop.f32.mrf.mxu0
    %v3950 = vadd.f32 0.0, %v3949
    %3951 = vdwg.mxu0
    %3952 = vmatpush.msra.mxu0 %v3910
    %3953 = vmatpush.msra.mxu0 %v3906
    %3954 = vmatpush.msra.mxu0 %v3902
    %3955 = vmatpush.msra.mxu0 %v3898
    %3956 = vmatpush.msra.mxu0 %v3894
    %3957 = vmatpush.msra.mxu0 %v3890
    %3958 = vmatpush.msra.mxu0 %v3886
    %3959 = vmatpush.msra.mxu0 %v3882
    %3960 = vmatpush.msra.mxu0 %v3878
    %3961 = vmatpush.msra.mxu0 %v3874
    %3962 = vmatpush.msra.mxu0 %v3870
    %3963 = vmatpush.msra.mxu0 %v3866
    %3964 = vmatpush.msra.mxu0 %v3862
    %3965 = vmatpush.msra.mxu0 %v3858
    %3966 = vmatpush.msra.mxu0 %v3854
    %3967 = vmatpush.msra.mxu0 %v3850
    %3968 = vmatmul.f32.gmra.mxu0 %v3845
    %v3969 = vpop.f32.mrf.mxu0
    %v3970 = vadd.f32 0.0, %v3969
    %3971 = vdwg.mxu0
    %3972 = vmatpush.msra.mxu0 %v3911
    %3973 = vmatpush.msra.mxu0 %v3907
    %3974 = vmatpush.msra.mxu0 %v3903
    %3975 = vmatpush.msra.mxu0 %v3899
    %3976 = vmatpush.msra.mxu0 %v3895
    %3977 = vmatpush.msra.mxu0 %v3891
    %3978 = vmatpush.msra.mxu0 %v3887
    %3979 = vmatpush.msra.mxu0 %v3883
    %3980 = vmatpush.msra.mxu0 %v3879
    %3981 = vmatpush.msra.mxu0 %v3875
    %3982 = vmatpush.msra.mxu0 %v3871
    %3983 = vmatpush.msra.mxu0 %v3867
    %3984 = vmatpush.msra.mxu0 %v3863
    %3985 = vmatpush.msra.mxu0 %v3859
    %3986 = vmatpush.msra.mxu0 %v3855
    %3987 = vmatpush.msra.mxu0 %v3851
    %3988 = vmatmul.f32.gmra.mxu0 %v3845
    %v3989 = vpop.f32.mrf.mxu0
    %v3990 = vadd.f32 0.0, %v3989
    %3991 = vdwg.mxu0
    %3992 = vmatpush.msra.mxu0 %v3818
    %3993 = vmatpush.msra.mxu0 %v3814
    %3994 = vmatpush.msra.mxu0 %v3810
    %3995 = vmatpush.msra.mxu0 %v3806
    %3996 = vmatpush.msra.mxu0 %v3802
    %3997 = vmatpush.msra.mxu0 %v3798
    %3998 = vmatpush.msra.mxu0 %v3794
    %3999 = vmatpush.msra.mxu0 %v3790
    %4000 = vmatpush.msra.mxu0 %v3786
    %4001 = vmatpush.msra.mxu0 %v3782
    %4002 = vmatpush.msra.mxu0 %v3778
    %4003 = vmatpush.msra.mxu0 %v3774
    %4004 = vmatpush.msra.mxu0 %v3770
    %4005 = vmatpush.msra.mxu0 %v3766
    %4006 = vmatpush.msra.mxu0 %v3762
    %4007 = vmatpush.msra.mxu0 %v3758
    %4008 = vmatmul.f32.gmra.mxu0 %v3756
    %v4009 = vpop.f32.mrf.mxu0
    %v4010 = vadd.f32 %v3930, %v4009
    %4011 = vdwg.mxu0
    %4012 = vmatpush.msra.mxu0 %v3819
    %4013 = vmatpush.msra.mxu0 %v3815
    %4014 = vmatpush.msra.mxu0 %v3811
    %4015 = vmatpush.msra.mxu0 %v3807
    %4016 = vmatpush.msra.mxu0 %v3803
    %4017 = vmatpush.msra.mxu0 %v3799
    %4018 = vmatpush.msra.mxu0 %v3795
    %4019 = vmatpush.msra.mxu0 %v3791
    %4020 = vmatpush.msra.mxu0 %v3787
    %4021 = vmatpush.msra.mxu0 %v3783
    %4022 = vmatpush.msra.mxu0 %v3779
    %4023 = vmatpush.msra.mxu0 %v3775
    %4024 = vmatpush.msra.mxu0 %v3771
    %4025 = vmatpush.msra.mxu0 %v3767
    %4026 = vmatpush.msra.mxu0 %v3763
    %4027 = vmatpush.msra.mxu0 %v3759
    %4028 = vmatmul.f32.gmra.mxu0 %v3756
    %v4029 = vpop.f32.mrf.mxu0
    %v4030 = vadd.f32 %v3950, %v4029
    %4031 = vdwg.mxu0
    %4032 = vmatpush.msra.mxu0 %v3820
    %4033 = vmatpush.msra.mxu0 %v3816
    %4034 = vmatpush.msra.mxu0 %v3812
    %4035 = vmatpush.msra.mxu0 %v3808
    %4036 = vmatpush.msra.mxu0 %v3804
    %4037 = vmatpush.msra.mxu0 %v3800
    %4038 = vmatpush.msra.mxu0 %v3796
    %4039 = vmatpush.msra.mxu0 %v3792
    %4040 = vmatpush.msra.mxu0 %v3788
    %4041 = vmatpush.msra.mxu0 %v3784
    %4042 = vmatpush.msra.mxu0 %v3780
    %4043 = vmatpush.msra.mxu0 %v3776
    %4044 = vmatpush.msra.mxu0 %v3772
    %4045 = vmatpush.msra.mxu0 %v3768
    %4046 = vmatpush.msra.mxu0 %v3764
    %4047 = vmatpush.msra.mxu0 %v3760
    %4048 = vmatmul.f32.gmra.mxu0 %v3756
    %v4049 = vpop.f32.mrf.mxu0
    %v4050 = vadd.f32 %v3970, %v4049
    %4051 = vdwg.mxu0
    %4052 = vmatpush.msra.mxu0 %v3821
    %4053 = vmatpush.msra.mxu0 %v3817
    %4054 = vmatpush.msra.mxu0 %v3813
    %4055 = vmatpush.msra.mxu0 %v3809
    %4056 = vmatpush.msra.mxu0 %v3805
    %4057 = vmatpush.msra.mxu0 %v3801
    %4058 = vmatpush.msra.mxu0 %v3797
    %4059 = vmatpush.msra.mxu0 %v3793
    %4060 = vmatpush.msra.mxu0 %v3789
    %4061 = vmatpush.msra.mxu0 %v3785
    %4062 = vmatpush.msra.mxu0 %v3781
    %4063 = vmatpush.msra.mxu0 %v3777
    %4064 = vmatpush.msra.mxu0 %v3773
    %4065 = vmatpush.msra.mxu0 %v3769
    %4066 = vmatpush.msra.mxu0 %v3765
    %4067 = vmatpush.msra.mxu0 %v3761
    %4068 = vmatmul.f32.gmra.mxu0 %v3756
    %v4069 = vpop.f32.mrf.mxu0
    %v4070 = vadd.f32 %v3990, %v4069
    %4071 = vdwg.mxu0
    %s4072 = scalar_lea.vmem [#allocation20], 4
    %v4073 = vld [vmem:[%s4072] sm:$0x3]
    %v4075 = vsel %vm3734, %v4073, 0
    %4077 = vmatpush.msra.mxu0 0.0
    %4078 = vmatpush.msra.mxu0 0.0
    %4079 = vmatpush.msra.mxu0 0.0
    %4080 = vmatpush.msra.mxu0 0.0
    %4081 = vmatpush.msra.mxu0 0.0
    %4082 = vmatpush.msra.mxu0 0.0
    %4083 = vmatpush.msra.mxu0 0.0
    %4084 = vmatpush.msra.mxu0 0.0
    %4085 = vmatpush.msra.mxu0 0.0
    %4086 = vmatpush.msra.mxu0 0.0
    %4087 = vmatpush.msra.mxu0 0.0
    %4088 = vmatpush.msra.mxu0 0.0
    %4089 = vmatpush.msra.mxu0 0.0
    %4090 = vmatpush.msra.mxu0 0.0
    %4091 = vmatpush.msra.mxu0 %v3732
    %4092 = vmatpush.msra.mxu0 %v3731
    %4093 = vmatmul.f32.gmra.mxu0 %v4075
    %v4094 = vpop.f32.mrf.mxu0
    %v4095 = vadd.f32 0.0, %v4094
    %4096 = vdwg.mxu0
    %s4097 = scalar_lea.vmem [#allocation22], 1024
    %v4098 = vld [vmem:[%s4097] sm:$0xff]
    %v4099 = vld [vmem:[%s4097 + $0x8] sm:$0xff]
    %v4100 = vld [vmem:[%s4097 + $0x10] sm:$0xff]
    %v4101 = vld [vmem:[%s4097 + $0x18] sm:$0xff]
    %v4102 = vld [vmem:[%s4097 + $0x20] sm:$0xff]
    %v4103 = vld [vmem:[%s4097 + $0x28] sm:$0xff]
    %v4104 = vld [vmem:[%s4097 + $0x30] sm:$0xff]
    %v4105 = vld [vmem:[%s4097 + $0x38] sm:$0xff]
    %v4106 = vld [vmem:[%s4097 + $0x40] sm:$0xff]
    %v4107 = vld [vmem:[%s4097 + $0x48] sm:$0xff]
    %v4108 = vld [vmem:[%s4097 + $0x50] sm:$0xff]
    %v4109 = vld [vmem:[%s4097 + $0x58] sm:$0xff]
    %v4110 = vld [vmem:[%s4097 + $0x60] sm:$0xff]
    %v4111 = vld [vmem:[%s4097 + $0x68] sm:$0xff]
    %v4112 = vld [vmem:[%s4097 + $0x70] sm:$0xff]
    %v4113 = vld [vmem:[%s4097 + $0x78] sm:$0xff]
    %v4114 = vld [vmem:[%s4097 + $0x80] sm:$0xff]
    %v4115 = vld [vmem:[%s4097 + $0x88] sm:$0xff]
    %v4116 = vld [vmem:[%s4097 + $0x90] sm:$0xff]
    %v4117 = vld [vmem:[%s4097 + $0x98] sm:$0xff]
    %v4118 = vld [vmem:[%s4097 + $0xa0] sm:$0xff]
    %v4119 = vld [vmem:[%s4097 + $0xa8] sm:$0xff]
    %v4120 = vld [vmem:[%s4097 + $0xb0] sm:$0xff]
    %v4121 = vld [vmem:[%s4097 + $0xb8] sm:$0xff]
    %v4122 = vld [vmem:[%s4097 + $0xc0] sm:$0xff]
    %v4123 = vld [vmem:[%s4097 + $0xc8] sm:$0xff]
    %v4124 = vld [vmem:[%s4097 + $0xd0] sm:$0xff]
    %v4125 = vld [vmem:[%s4097 + $0xd8] sm:$0xff]
    %v4126 = vld [vmem:[%s4097 + $0xe0] sm:$0xff]
    %v4127 = vld [vmem:[%s4097 + $0xe8] sm:$0xff]
    %v4128 = vld [vmem:[%s4097 + $0xf0] sm:$0xff]
    %v4129 = vld [vmem:[%s4097 + $0xf8] sm:$0xff]
    %v4130 = vld [vmem:[%s4097 + $0x100] sm:$0xff]
    %v4131 = vld [vmem:[%s4097 + $0x108] sm:$0xff]
    %v4132 = vld [vmem:[%s4097 + $0x110] sm:$0xff]
    %v4133 = vld [vmem:[%s4097 + $0x118] sm:$0xff]
    %v4134 = vld [vmem:[%s4097 + $0x120] sm:$0xff]
    %v4135 = vld [vmem:[%s4097 + $0x128] sm:$0xff]
    %v4136 = vld [vmem:[%s4097 + $0x130] sm:$0xff]
    %v4137 = vld [vmem:[%s4097 + $0x138] sm:$0xff]
    %v4138 = vld [vmem:[%s4097 + $0x140] sm:$0xff]
    %v4139 = vld [vmem:[%s4097 + $0x148] sm:$0xff]
    %v4140 = vld [vmem:[%s4097 + $0x150] sm:$0xff]
    %v4141 = vld [vmem:[%s4097 + $0x158] sm:$0xff]
    %v4142 = vld [vmem:[%s4097 + $0x160] sm:$0xff]
    %v4143 = vld [vmem:[%s4097 + $0x168] sm:$0xff]
    %v4144 = vld [vmem:[%s4097 + $0x170] sm:$0xff]
    %v4145 = vld [vmem:[%s4097 + $0x178] sm:$0xff]
    %v4146 = vld [vmem:[%s4097 + $0x180] sm:$0xff]
    %v4147 = vld [vmem:[%s4097 + $0x188] sm:$0xff]
    %v4148 = vld [vmem:[%s4097 + $0x190] sm:$0xff]
    %v4149 = vld [vmem:[%s4097 + $0x198] sm:$0xff]
    %v4150 = vld [vmem:[%s4097 + $0x1a0] sm:$0xff]
    %v4151 = vld [vmem:[%s4097 + $0x1a8] sm:$0xff]
    %v4152 = vld [vmem:[%s4097 + $0x1b0] sm:$0xff]
    %v4153 = vld [vmem:[%s4097 + $0x1b8] sm:$0xff]
    %v4154 = vld [vmem:[%s4097 + $0x1c0] sm:$0xff]
    %v4155 = vld [vmem:[%s4097 + $0x1c8] sm:$0xff]
    %v4156 = vld [vmem:[%s4097 + $0x1d0] sm:$0xff]
    %v4157 = vld [vmem:[%s4097 + $0x1d8] sm:$0xff]
    %v4158 = vld [vmem:[%s4097 + $0x1e0] sm:$0xff]
    %v4159 = vld [vmem:[%s4097 + $0x1e8] sm:$0xff]
    %v4160 = vld [vmem:[%s4097 + $0x1f0] sm:$0xff]
    %v4161 = vld [vmem:[%s4097 + $0x1f8] sm:$0xff]
    %4162 = vmatpush.msra.mxu0 %v4158
    %4163 = vmatpush.msra.mxu0 %v4154
    %4164 = vmatpush.msra.mxu0 %v4150
    %4165 = vmatpush.msra.mxu0 %v4146
    %4166 = vmatpush.msra.mxu0 %v4142
    %4167 = vmatpush.msra.mxu0 %v4138
    %4168 = vmatpush.msra.mxu0 %v4134
    %4169 = vmatpush.msra.mxu0 %v4130
    %4170 = vmatpush.msra.mxu0 %v4126
    %4171 = vmatpush.msra.mxu0 %v4122
    %4172 = vmatpush.msra.mxu0 %v4118
    %4173 = vmatpush.msra.mxu0 %v4114
    %4174 = vmatpush.msra.mxu0 %v4110
    %4175 = vmatpush.msra.mxu0 %v4106
    %4176 = vmatpush.msra.mxu0 %v4102
    %4177 = vmatpush.msra.mxu0 %v4098
    %4178 = vmatmul.f32.gmra.mxu0 %v4095
    %v4179 = vpop.f32.mrf.mxu0
    %v4180 = vadd.f32 0.0, %v4179
    %4181 = vdwg.mxu0
    %4182 = vmatpush.msra.mxu0 %v4159
    %4183 = vmatpush.msra.mxu0 %v4155
    %4184 = vmatpush.msra.mxu0 %v4151
    %4185 = vmatpush.msra.mxu0 %v4147
    %4186 = vmatpush.msra.mxu0 %v4143
    %4187 = vmatpush.msra.mxu0 %v4139
    %4188 = vmatpush.msra.mxu0 %v4135
    %4189 = vmatpush.msra.mxu0 %v4131
    %4190 = vmatpush.msra.mxu0 %v4127
    %4191 = vmatpush.msra.mxu0 %v4123
    %4192 = vmatpush.msra.mxu0 %v4119
    %4193 = vmatpush.msra.mxu0 %v4115
    %4194 = vmatpush.msra.mxu0 %v4111
    %4195 = vmatpush.msra.mxu0 %v4107
    %4196 = vmatpush.msra.mxu0 %v4103
    %4197 = vmatpush.msra.mxu0 %v4099
    %4198 = vmatmul.f32.gmra.mxu0 %v4095
    %v4199 = vpop.f32.mrf.mxu0
    %v4200 = vadd.f32 0.0, %v4199
    %4201 = vdwg.mxu0
    %4202 = vmatpush.msra.mxu0 %v4160
    %4203 = vmatpush.msra.mxu0 %v4156
    %4204 = vmatpush.msra.mxu0 %v4152
    %4205 = vmatpush.msra.mxu0 %v4148
    %4206 = vmatpush.msra.mxu0 %v4144
    %4207 = vmatpush.msra.mxu0 %v4140
    %4208 = vmatpush.msra.mxu0 %v4136
    %4209 = vmatpush.msra.mxu0 %v4132
    %4210 = vmatpush.msra.mxu0 %v4128
    %4211 = vmatpush.msra.mxu0 %v4124
    %4212 = vmatpush.msra.mxu0 %v4120
    %4213 = vmatpush.msra.mxu0 %v4116
    %4214 = vmatpush.msra.mxu0 %v4112
    %4215 = vmatpush.msra.mxu0 %v4108
    %4216 = vmatpush.msra.mxu0 %v4104
    %4217 = vmatpush.msra.mxu0 %v4100
    %4218 = vmatmul.f32.gmra.mxu0 %v4095
    %v4219 = vpop.f32.mrf.mxu0
    %v4220 = vadd.f32 0.0, %v4219
    %4221 = vdwg.mxu0
    %4222 = vmatpush.msra.mxu0 %v4161
    %4223 = vmatpush.msra.mxu0 %v4157
    %4224 = vmatpush.msra.mxu0 %v4153
    %4225 = vmatpush.msra.mxu0 %v4149
    %4226 = vmatpush.msra.mxu0 %v4145
    %4227 = vmatpush.msra.mxu0 %v4141
    %4228 = vmatpush.msra.mxu0 %v4137
    %4229 = vmatpush.msra.mxu0 %v4133
    %4230 = vmatpush.msra.mxu0 %v4129
    %4231 = vmatpush.msra.mxu0 %v4125
    %4232 = vmatpush.msra.mxu0 %v4121
    %4233 = vmatpush.msra.mxu0 %v4117
    %4234 = vmatpush.msra.mxu0 %v4113
    %4235 = vmatpush.msra.mxu0 %v4109
    %4236 = vmatpush.msra.mxu0 %v4105
    %4237 = vmatpush.msra.mxu0 %v4101
    %4238 = vmatmul.f32.gmra.mxu0 %v4095
    %v4239 = vpop.f32.mrf.mxu0
    %v4240 = vadd.f32 0.0, %v4239
    %4241 = vdwg.mxu0
    %v4242 = vadd.f32 %v4010, %v4180
    %v4243 = vadd.f32 %v4030, %v4200
    %v4244 = vadd.f32 %v4050, %v4220
    %v4245 = vadd.f32 %v4070, %v4240
    %s4246 = scalar_lea.vmem [#allocation20], 6
    %v4247 = vld [vmem:[%s4246] sm:$0x3]
    %v4249 = vsel %vm3734, %v4247, 0
    %4251 = vmatpush.msra.mxu0 0.0
    %4252 = vmatpush.msra.mxu0 0.0
    %4253 = vmatpush.msra.mxu0 0.0
    %4254 = vmatpush.msra.mxu0 0.0
    %4255 = vmatpush.msra.mxu0 0.0
    %4256 = vmatpush.msra.mxu0 0.0
    %4257 = vmatpush.msra.mxu0 0.0
    %4258 = vmatpush.msra.mxu0 0.0
    %4259 = vmatpush.msra.mxu0 0.0
    %4260 = vmatpush.msra.mxu0 0.0
    %4261 = vmatpush.msra.mxu0 0.0
    %4262 = vmatpush.msra.mxu0 0.0
    %4263 = vmatpush.msra.mxu0 0.0
    %4264 = vmatpush.msra.mxu0 0.0
    %4265 = vmatpush.msra.mxu0 %v3732
    %4266 = vmatpush.msra.mxu0 %v3731
    %4267 = vmatmul.f32.gmra.mxu0 %v4249
    %v4268 = vpop.f32.mrf.mxu0
    %v4269 = vadd.f32 0.0, %v4268
    %4270 = vdwg.mxu0
    %s4271 = scalar_lea.vmem [#allocation22], 1536
    %v4272 = vld [vmem:[%s4271] sm:$0xff]
    %v4273 = vld [vmem:[%s4271 + $0x8] sm:$0xff]
    %v4274 = vld [vmem:[%s4271 + $0x10] sm:$0xff]
    %v4275 = vld [vmem:[%s4271 + $0x18] sm:$0xff]
    %v4276 = vld [vmem:[%s4271 + $0x20] sm:$0xff]
    %v4277 = vld [vmem:[%s4271 + $0x28] sm:$0xff]
    %v4278 = vld [vmem:[%s4271 + $0x30] sm:$0xff]
    %v4279 = vld [vmem:[%s4271 + $0x38] sm:$0xff]
    %v4280 = vld [vmem:[%s4271 + $0x40] sm:$0xff]
    %v4281 = vld [vmem:[%s4271 + $0x48] sm:$0xff]
    %v4282 = vld [vmem:[%s4271 + $0x50] sm:$0xff]
    %v4283 = vld [vmem:[%s4271 + $0x58] sm:$0xff]
    %v4284 = vld [vmem:[%s4271 + $0x60] sm:$0xff]
    %v4285 = vld [vmem:[%s4271 + $0x68] sm:$0xff]
    %v4286 = vld [vmem:[%s4271 + $0x70] sm:$0xff]
    %v4287 = vld [vmem:[%s4271 + $0x78] sm:$0xff]
    %v4288 = vld [vmem:[%s4271 + $0x80] sm:$0xff]
    %v4289 = vld [vmem:[%s4271 + $0x88] sm:$0xff]
    %v4290 = vld [vmem:[%s4271 + $0x90] sm:$0xff]
    %v4291 = vld [vmem:[%s4271 + $0x98] sm:$0xff]
    %v4292 = vld [vmem:[%s4271 + $0xa0] sm:$0xff]
    %v4293 = vld [vmem:[%s4271 + $0xa8] sm:$0xff]
    %v4294 = vld [vmem:[%s4271 + $0xb0] sm:$0xff]
    %v4295 = vld [vmem:[%s4271 + $0xb8] sm:$0xff]
    %v4296 = vld [vmem:[%s4271 + $0xc0] sm:$0xff]
    %v4297 = vld [vmem:[%s4271 + $0xc8] sm:$0xff]
    %v4298 = vld [vmem:[%s4271 + $0xd0] sm:$0xff]
    %v4299 = vld [vmem:[%s4271 + $0xd8] sm:$0xff]
    %v4300 = vld [vmem:[%s4271 + $0xe0] sm:$0xff]
    %v4301 = vld [vmem:[%s4271 + $0xe8] sm:$0xff]
    %v4302 = vld [vmem:[%s4271 + $0xf0] sm:$0xff]
    %v4303 = vld [vmem:[%s4271 + $0xf8] sm:$0xff]
    %v4304 = vld [vmem:[%s4271 + $0x100] sm:$0xff]
    %v4305 = vld [vmem:[%s4271 + $0x108] sm:$0xff]
    %v4306 = vld [vmem:[%s4271 + $0x110] sm:$0xff]
    %v4307 = vld [vmem:[%s4271 + $0x118] sm:$0xff]
    %v4308 = vld [vmem:[%s4271 + $0x120] sm:$0xff]
    %v4309 = vld [vmem:[%s4271 + $0x128] sm:$0xff]
    %v4310 = vld [vmem:[%s4271 + $0x130] sm:$0xff]
    %v4311 = vld [vmem:[%s4271 + $0x138] sm:$0xff]
    %v4312 = vld [vmem:[%s4271 + $0x140] sm:$0xff]
    %v4313 = vld [vmem:[%s4271 + $0x148] sm:$0xff]
    %v4314 = vld [vmem:[%s4271 + $0x150] sm:$0xff]
    %v4315 = vld [vmem:[%s4271 + $0x158] sm:$0xff]
    %v4316 = vld [vmem:[%s4271 + $0x160] sm:$0xff]
    %v4317 = vld [vmem:[%s4271 + $0x168] sm:$0xff]
    %v4318 = vld [vmem:[%s4271 + $0x170] sm:$0xff]
    %v4319 = vld [vmem:[%s4271 + $0x178] sm:$0xff]
    %v4320 = vld [vmem:[%s4271 + $0x180] sm:$0xff]
    %v4321 = vld [vmem:[%s4271 + $0x188] sm:$0xff]
    %v4322 = vld [vmem:[%s4271 + $0x190] sm:$0xff]
    %v4323 = vld [vmem:[%s4271 + $0x198] sm:$0xff]
    %v4324 = vld [vmem:[%s4271 + $0x1a0] sm:$0xff]
    %v4325 = vld [vmem:[%s4271 + $0x1a8] sm:$0xff]
    %v4326 = vld [vmem:[%s4271 + $0x1b0] sm:$0xff]
    %v4327 = vld [vmem:[%s4271 + $0x1b8] sm:$0xff]
    %v4328 = vld [vmem:[%s4271 + $0x1c0] sm:$0xff]
    %v4329 = vld [vmem:[%s4271 + $0x1c8] sm:$0xff]
    %v4330 = vld [vmem:[%s4271 + $0x1d0] sm:$0xff]
    %v4331 = vld [vmem:[%s4271 + $0x1d8] sm:$0xff]
    %v4332 = vld [vmem:[%s4271 + $0x1e0] sm:$0xff]
    %v4333 = vld [vmem:[%s4271 + $0x1e8] sm:$0xff]
    %v4334 = vld [vmem:[%s4271 + $0x1f0] sm:$0xff]
    %v4335 = vld [vmem:[%s4271 + $0x1f8] sm:$0xff]
    %4336 = vmatpush.msra.mxu0 %v4332
    %4337 = vmatpush.msra.mxu0 %v4328
    %4338 = vmatpush.msra.mxu0 %v4324
    %4339 = vmatpush.msra.mxu0 %v4320
    %4340 = vmatpush.msra.mxu0 %v4316
    %4341 = vmatpush.msra.mxu0 %v4312
    %4342 = vmatpush.msra.mxu0 %v4308
    %4343 = vmatpush.msra.mxu0 %v4304
    %4344 = vmatpush.msra.mxu0 %v4300
    %4345 = vmatpush.msra.mxu0 %v4296
    %4346 = vmatpush.msra.mxu0 %v4292
    %4347 = vmatpush.msra.mxu0 %v4288
    %4348 = vmatpush.msra.mxu0 %v4284
    %4349 = vmatpush.msra.mxu0 %v4280
    %4350 = vmatpush.msra.mxu0 %v4276
    %4351 = vmatpush.msra.mxu0 %v4272
    %4352 = vmatmul.f32.gmra.mxu0 %v4269
    %v4353 = vpop.f32.mrf.mxu0
    %v4354 = vadd.f32 0.0, %v4353
    %4355 = vdwg.mxu0
    %4356 = vmatpush.msra.mxu0 %v4333
    %4357 = vmatpush.msra.mxu0 %v4329
    %4358 = vmatpush.msra.mxu0 %v4325
    %4359 = vmatpush.msra.mxu0 %v4321
    %4360 = vmatpush.msra.mxu0 %v4317
    %4361 = vmatpush.msra.mxu0 %v4313
    %4362 = vmatpush.msra.mxu0 %v4309
    %4363 = vmatpush.msra.mxu0 %v4305
    %4364 = vmatpush.msra.mxu0 %v4301
    %4365 = vmatpush.msra.mxu0 %v4297
    %4366 = vmatpush.msra.mxu0 %v4293
    %4367 = vmatpush.msra.mxu0 %v4289
    %4368 = vmatpush.msra.mxu0 %v4285
    %4369 = vmatpush.msra.mxu0 %v4281
    %4370 = vmatpush.msra.mxu0 %v4277
    %4371 = vmatpush.msra.mxu0 %v4273
    %4372 = vmatmul.f32.gmra.mxu0 %v4269
    %v4373 = vpop.f32.mrf.mxu0
    %v4374 = vadd.f32 0.0, %v4373
    %4375 = vdwg.mxu0
    %4376 = vmatpush.msra.mxu0 %v4334
    %4377 = vmatpush.msra.mxu0 %v4330
    %4378 = vmatpush.msra.mxu0 %v4326
    %4379 = vmatpush.msra.mxu0 %v4322
    %4380 = vmatpush.msra.mxu0 %v4318
    %4381 = vmatpush.msra.mxu0 %v4314
    %4382 = vmatpush.msra.mxu0 %v4310
    %4383 = vmatpush.msra.mxu0 %v4306
    %4384 = vmatpush.msra.mxu0 %v4302
    %4385 = vmatpush.msra.mxu0 %v4298
    %4386 = vmatpush.msra.mxu0 %v4294
    %4387 = vmatpush.msra.mxu0 %v4290
    %4388 = vmatpush.msra.mxu0 %v4286
    %4389 = vmatpush.msra.mxu0 %v4282
    %4390 = vmatpush.msra.mxu0 %v4278
    %4391 = vmatpush.msra.mxu0 %v4274
    %4392 = vmatmul.f32.gmra.mxu0 %v4269
    %v4393 = vpop.f32.mrf.mxu0
    %v4394 = vadd.f32 0.0, %v4393
    %4395 = vdwg.mxu0
    %4396 = vmatpush.msra.mxu0 %v4335
    %4397 = vmatpush.msra.mxu0 %v4331
    %4398 = vmatpush.msra.mxu0 %v4327
    %4399 = vmatpush.msra.mxu0 %v4323
    %4400 = vmatpush.msra.mxu0 %v4319
    %4401 = vmatpush.msra.mxu0 %v4315
    %4402 = vmatpush.msra.mxu0 %v4311
    %4403 = vmatpush.msra.mxu0 %v4307
    %4404 = vmatpush.msra.mxu0 %v4303
    %4405 = vmatpush.msra.mxu0 %v4299
    %4406 = vmatpush.msra.mxu0 %v4295
    %4407 = vmatpush.msra.mxu0 %v4291
    %4408 = vmatpush.msra.mxu0 %v4287
    %4409 = vmatpush.msra.mxu0 %v4283
    %4410 = vmatpush.msra.mxu0 %v4279
    %4411 = vmatpush.msra.mxu0 %v4275
    %4412 = vmatmul.f32.gmra.mxu0 %v4269
    %v4413 = vpop.f32.mrf.mxu0
    %v4414 = vadd.f32 0.0, %v4413
    %4415 = vdwg.mxu0
    %v4416 = vadd.f32 %v4242, %v4354
    %v4417 = vadd.f32 %v4243, %v4374
    %v4418 = vadd.f32 %v4244, %v4394
    %v4419 = vadd.f32 %v4245, %v4414
    %s4420 = scalar_lea.vmem [#allocation20], 8
    %v4421 = vld [vmem:[%s4420] sm:$0x3]
    %v4423 = vsel %vm3734, %v4421, 0
    %4425 = vmatpush.msra.mxu0 0.0
    %4426 = vmatpush.msra.mxu0 0.0
    %4427 = vmatpush.msra.mxu0 0.0
    %4428 = vmatpush.msra.mxu0 0.0
    %4429 = vmatpush.msra.mxu0 0.0
    %4430 = vmatpush.msra.mxu0 0.0
    %4431 = vmatpush.msra.mxu0 0.0
    %4432 = vmatpush.msra.mxu0 0.0
    %4433 = vmatpush.msra.mxu0 0.0
    %4434 = vmatpush.msra.mxu0 0.0
    %4435 = vmatpush.msra.mxu0 0.0
    %4436 = vmatpush.msra.mxu0 0.0
    %4437 = vmatpush.msra.mxu0 0.0
    %4438 = vmatpush.msra.mxu0 0.0
    %4439 = vmatpush.msra.mxu0 %v3732
    %4440 = vmatpush.msra.mxu0 %v3731
    %4441 = vmatmul.f32.gmra.mxu0 %v4423
    %v4442 = vpop.f32.mrf.mxu0
    %v4443 = vadd.f32 0.0, %v4442
    %4444 = vdwg.mxu0
    %s4445 = scalar_lea.vmem [#allocation22], 2048
    %v4446 = vld [vmem:[%s4445] sm:$0xff]
    %v4447 = vld [vmem:[%s4445 + $0x8] sm:$0xff]
    %v4448 = vld [vmem:[%s4445 + $0x10] sm:$0xff]
    %v4449 = vld [vmem:[%s4445 + $0x18] sm:$0xff]
    %v4450 = vld [vmem:[%s4445 + $0x20] sm:$0xff]
    %v4451 = vld [vmem:[%s4445 + $0x28] sm:$0xff]
    %v4452 = vld [vmem:[%s4445 + $0x30] sm:$0xff]
    %v4453 = vld [vmem:[%s4445 + $0x38] sm:$0xff]
    %v4454 = vld [vmem:[%s4445 + $0x40] sm:$0xff]
    %v4455 = vld [vmem:[%s4445 + $0x48] sm:$0xff]
    %v4456 = vld [vmem:[%s4445 + $0x50] sm:$0xff]
    %v4457 = vld [vmem:[%s4445 + $0x58] sm:$0xff]
    %v4458 = vld [vmem:[%s4445 + $0x60] sm:$0xff]
    %v4459 = vld [vmem:[%s4445 + $0x68] sm:$0xff]
    %v4460 = vld [vmem:[%s4445 + $0x70] sm:$0xff]
    %v4461 = vld [vmem:[%s4445 + $0x78] sm:$0xff]
    %v4462 = vld [vmem:[%s4445 + $0x80] sm:$0xff]
    %v4463 = vld [vmem:[%s4445 + $0x88] sm:$0xff]
    %v4464 = vld [vmem:[%s4445 + $0x90] sm:$0xff]
    %v4465 = vld [vmem:[%s4445 + $0x98] sm:$0xff]
    %v4466 = vld [vmem:[%s4445 + $0xa0] sm:$0xff]
    %v4467 = vld [vmem:[%s4445 + $0xa8] sm:$0xff]
    %v4468 = vld [vmem:[%s4445 + $0xb0] sm:$0xff]
    %v4469 = vld [vmem:[%s4445 + $0xb8] sm:$0xff]
    %v4470 = vld [vmem:[%s4445 + $0xc0] sm:$0xff]
    %v4471 = vld [vmem:[%s4445 + $0xc8] sm:$0xff]
    %v4472 = vld [vmem:[%s4445 + $0xd0] sm:$0xff]
    %v4473 = vld [vmem:[%s4445 + $0xd8] sm:$0xff]
    %v4474 = vld [vmem:[%s4445 + $0xe0] sm:$0xff]
    %v4475 = vld [vmem:[%s4445 + $0xe8] sm:$0xff]
    %v4476 = vld [vmem:[%s4445 + $0xf0] sm:$0xff]
    %v4477 = vld [vmem:[%s4445 + $0xf8] sm:$0xff]
    %v4478 = vld [vmem:[%s4445 + $0x100] sm:$0xff]
    %v4479 = vld [vmem:[%s4445 + $0x108] sm:$0xff]
    %v4480 = vld [vmem:[%s4445 + $0x110] sm:$0xff]
    %v4481 = vld [vmem:[%s4445 + $0x118] sm:$0xff]
    %v4482 = vld [vmem:[%s4445 + $0x120] sm:$0xff]
    %v4483 = vld [vmem:[%s4445 + $0x128] sm:$0xff]
    %v4484 = vld [vmem:[%s4445 + $0x130] sm:$0xff]
    %v4485 = vld [vmem:[%s4445 + $0x138] sm:$0xff]
    %v4486 = vld [vmem:[%s4445 + $0x140] sm:$0xff]
    %v4487 = vld [vmem:[%s4445 + $0x148] sm:$0xff]
    %v4488 = vld [vmem:[%s4445 + $0x150] sm:$0xff]
    %v4489 = vld [vmem:[%s4445 + $0x158] sm:$0xff]
    %v4490 = vld [vmem:[%s4445 + $0x160] sm:$0xff]
    %v4491 = vld [vmem:[%s4445 + $0x168] sm:$0xff]
    %v4492 = vld [vmem:[%s4445 + $0x170] sm:$0xff]
    %v4493 = vld [vmem:[%s4445 + $0x178] sm:$0xff]
    %v4494 = vld [vmem:[%s4445 + $0x180] sm:$0xff]
    %v4495 = vld [vmem:[%s4445 + $0x188] sm:$0xff]
    %v4496 = vld [vmem:[%s4445 + $0x190] sm:$0xff]
    %v4497 = vld [vmem:[%s4445 + $0x198] sm:$0xff]
    %v4498 = vld [vmem:[%s4445 + $0x1a0] sm:$0xff]
    %v4499 = vld [vmem:[%s4445 + $0x1a8] sm:$0xff]
    %v4500 = vld [vmem:[%s4445 + $0x1b0] sm:$0xff]
    %v4501 = vld [vmem:[%s4445 + $0x1b8] sm:$0xff]
    %v4502 = vld [vmem:[%s4445 + $0x1c0] sm:$0xff]
    %v4503 = vld [vmem:[%s4445 + $0x1c8] sm:$0xff]
    %v4504 = vld [vmem:[%s4445 + $0x1d0] sm:$0xff]
    %v4505 = vld [vmem:[%s4445 + $0x1d8] sm:$0xff]
    %v4506 = vld [vmem:[%s4445 + $0x1e0] sm:$0xff]
    %v4507 = vld [vmem:[%s4445 + $0x1e8] sm:$0xff]
    %v4508 = vld [vmem:[%s4445 + $0x1f0] sm:$0xff]
    %v4509 = vld [vmem:[%s4445 + $0x1f8] sm:$0xff]
    %4510 = vmatpush.msra.mxu0 %v4506
    %4511 = vmatpush.msra.mxu0 %v4502
    %4512 = vmatpush.msra.mxu0 %v4498
    %4513 = vmatpush.msra.mxu0 %v4494
    %4514 = vmatpush.msra.mxu0 %v4490
    %4515 = vmatpush.msra.mxu0 %v4486
    %4516 = vmatpush.msra.mxu0 %v4482
    %4517 = vmatpush.msra.mxu0 %v4478
    %4518 = vmatpush.msra.mxu0 %v4474
    %4519 = vmatpush.msra.mxu0 %v4470
    %4520 = vmatpush.msra.mxu0 %v4466
    %4521 = vmatpush.msra.mxu0 %v4462
    %4522 = vmatpush.msra.mxu0 %v4458
    %4523 = vmatpush.msra.mxu0 %v4454
    %4524 = vmatpush.msra.mxu0 %v4450
    %4525 = vmatpush.msra.mxu0 %v4446
    %4526 = vmatmul.f32.gmra.mxu0 %v4443
    %v4527 = vpop.f32.mrf.mxu0
    %v4528 = vadd.f32 0.0, %v4527
    %4529 = vdwg.mxu0
    %4530 = vmatpush.msra.mxu0 %v4507
    %4531 = vmatpush.msra.mxu0 %v4503
    %4532 = vmatpush.msra.mxu0 %v4499
    %4533 = vmatpush.msra.mxu0 %v4495
    %4534 = vmatpush.msra.mxu0 %v4491
    %4535 = vmatpush.msra.mxu0 %v4487
    %4536 = vmatpush.msra.mxu0 %v4483
    %4537 = vmatpush.msra.mxu0 %v4479
    %4538 = vmatpush.msra.mxu0 %v4475
    %4539 = vmatpush.msra.mxu0 %v4471
    %4540 = vmatpush.msra.mxu0 %v4467
    %4541 = vmatpush.msra.mxu0 %v4463
    %4542 = vmatpush.msra.mxu0 %v4459
    %4543 = vmatpush.msra.mxu0 %v4455
    %4544 = vmatpush.msra.mxu0 %v4451
    %4545 = vmatpush.msra.mxu0 %v4447
    %4546 = vmatmul.f32.gmra.mxu0 %v4443
    %v4547 = vpop.f32.mrf.mxu0
    %v4548 = vadd.f32 0.0, %v4547
    %4549 = vdwg.mxu0
    %4550 = vmatpush.msra.mxu0 %v4508
    %4551 = vmatpush.msra.mxu0 %v4504
    %4552 = vmatpush.msra.mxu0 %v4500
    %4553 = vmatpush.msra.mxu0 %v4496
    %4554 = vmatpush.msra.mxu0 %v4492
    %4555 = vmatpush.msra.mxu0 %v4488
    %4556 = vmatpush.msra.mxu0 %v4484
    %4557 = vmatpush.msra.mxu0 %v4480
    %4558 = vmatpush.msra.mxu0 %v4476
    %4559 = vmatpush.msra.mxu0 %v4472
    %4560 = vmatpush.msra.mxu0 %v4468
    %4561 = vmatpush.msra.mxu0 %v4464
    %4562 = vmatpush.msra.mxu0 %v4460
    %4563 = vmatpush.msra.mxu0 %v4456
    %4564 = vmatpush.msra.mxu0 %v4452
    %4565 = vmatpush.msra.mxu0 %v4448
    %4566 = vmatmul.f32.gmra.mxu0 %v4443
    %v4567 = vpop.f32.mrf.mxu0
    %v4568 = vadd.f32 0.0, %v4567
    %4569 = vdwg.mxu0
    %4570 = vmatpush.msra.mxu0 %v4509
    %4571 = vmatpush.msra.mxu0 %v4505
    %4572 = vmatpush.msra.mxu0 %v4501
    %4573 = vmatpush.msra.mxu0 %v4497
    %4574 = vmatpush.msra.mxu0 %v4493
    %4575 = vmatpush.msra.mxu0 %v4489
    %4576 = vmatpush.msra.mxu0 %v4485
    %4577 = vmatpush.msra.mxu0 %v4481
    %4578 = vmatpush.msra.mxu0 %v4477
    %4579 = vmatpush.msra.mxu0 %v4473
    %4580 = vmatpush.msra.mxu0 %v4469
    %4581 = vmatpush.msra.mxu0 %v4465
    %4582 = vmatpush.msra.mxu0 %v4461
    %4583 = vmatpush.msra.mxu0 %v4457
    %4584 = vmatpush.msra.mxu0 %v4453
    %4585 = vmatpush.msra.mxu0 %v4449
    %4586 = vmatmul.f32.gmra.mxu0 %v4443
    %v4587 = vpop.f32.mrf.mxu0
    %v4588 = vadd.f32 0.0, %v4587
    %4589 = vdwg.mxu0
    %v4590 = vadd.f32 %v4416, %v4528
    %v4591 = vadd.f32 %v4417, %v4548
    %v4592 = vadd.f32 %v4418, %v4568
    %v4593 = vadd.f32 %v4419, %v4588
    %s4594 = scalar_lea.vmem [#allocation20], 10
    %v4595 = vld [vmem:[%s4594] sm:$0x3]
    %v4597 = vsel %vm3734, %v4595, 0
    %4599 = vmatpush.msra.mxu0 0.0
    %4600 = vmatpush.msra.mxu0 0.0
    %4601 = vmatpush.msra.mxu0 0.0
    %4602 = vmatpush.msra.mxu0 0.0
    %4603 = vmatpush.msra.mxu0 0.0
    %4604 = vmatpush.msra.mxu0 0.0
    %4605 = vmatpush.msra.mxu0 0.0
    %4606 = vmatpush.msra.mxu0 0.0
    %4607 = vmatpush.msra.mxu0 0.0
    %4608 = vmatpush.msra.mxu0 0.0
    %4609 = vmatpush.msra.mxu0 0.0
    %4610 = vmatpush.msra.mxu0 0.0
    %4611 = vmatpush.msra.mxu0 0.0
    %4612 = vmatpush.msra.mxu0 0.0
    %4613 = vmatpush.msra.mxu0 %v3732
    %4614 = vmatpush.msra.mxu0 %v3731
    %4615 = vmatmul.f32.gmra.mxu0 %v4597
    %v4616 = vpop.f32.mrf.mxu0
    %v4617 = vadd.f32 0.0, %v4616
    %4618 = vdwg.mxu0
    %s4619 = scalar_lea.vmem [#allocation22], 2560
    %v4620 = vld [vmem:[%s4619] sm:$0xff]
    %v4621 = vld [vmem:[%s4619 + $0x8] sm:$0xff]
    %v4622 = vld [vmem:[%s4619 + $0x10] sm:$0xff]
    %v4623 = vld [vmem:[%s4619 + $0x18] sm:$0xff]
    %v4624 = vld [vmem:[%s4619 + $0x20] sm:$0xff]
    %v4625 = vld [vmem:[%s4619 + $0x28] sm:$0xff]
    %v4626 = vld [vmem:[%s4619 + $0x30] sm:$0xff]
    %v4627 = vld [vmem:[%s4619 + $0x38] sm:$0xff]
    %v4628 = vld [vmem:[%s4619 + $0x40] sm:$0xff]
    %v4629 = vld [vmem:[%s4619 + $0x48] sm:$0xff]
    %v4630 = vld [vmem:[%s4619 + $0x50] sm:$0xff]
    %v4631 = vld [vmem:[%s4619 + $0x58] sm:$0xff]
    %v4632 = vld [vmem:[%s4619 + $0x60] sm:$0xff]
    %v4633 = vld [vmem:[%s4619 + $0x68] sm:$0xff]
    %v4634 = vld [vmem:[%s4619 + $0x70] sm:$0xff]
    %v4635 = vld [vmem:[%s4619 + $0x78] sm:$0xff]
    %v4636 = vld [vmem:[%s4619 + $0x80] sm:$0xff]
    %v4637 = vld [vmem:[%s4619 + $0x88] sm:$0xff]
    %v4638 = vld [vmem:[%s4619 + $0x90] sm:$0xff]
    %v4639 = vld [vmem:[%s4619 + $0x98] sm:$0xff]
    %v4640 = vld [vmem:[%s4619 + $0xa0] sm:$0xff]
    %v4641 = vld [vmem:[%s4619 + $0xa8] sm:$0xff]
    %v4642 = vld [vmem:[%s4619 + $0xb0] sm:$0xff]
    %v4643 = vld [vmem:[%s4619 + $0xb8] sm:$0xff]
    %v4644 = vld [vmem:[%s4619 + $0xc0] sm:$0xff]
    %v4645 = vld [vmem:[%s4619 + $0xc8] sm:$0xff]
    %v4646 = vld [vmem:[%s4619 + $0xd0] sm:$0xff]
    %v4647 = vld [vmem:[%s4619 + $0xd8] sm:$0xff]
    %v4648 = vld [vmem:[%s4619 + $0xe0] sm:$0xff]
    %v4649 = vld [vmem:[%s4619 + $0xe8] sm:$0xff]
    %v4650 = vld [vmem:[%s4619 + $0xf0] sm:$0xff]
    %v4651 = vld [vmem:[%s4619 + $0xf8] sm:$0xff]
    %v4652 = vld [vmem:[%s4619 + $0x100] sm:$0xff]
    %v4653 = vld [vmem:[%s4619 + $0x108] sm:$0xff]
    %v4654 = vld [vmem:[%s4619 + $0x110] sm:$0xff]
    %v4655 = vld [vmem:[%s4619 + $0x118] sm:$0xff]
    %v4656 = vld [vmem:[%s4619 + $0x120] sm:$0xff]
    %v4657 = vld [vmem:[%s4619 + $0x128] sm:$0xff]
    %v4658 = vld [vmem:[%s4619 + $0x130] sm:$0xff]
    %v4659 = vld [vmem:[%s4619 + $0x138] sm:$0xff]
    %v4660 = vld [vmem:[%s4619 + $0x140] sm:$0xff]
    %v4661 = vld [vmem:[%s4619 + $0x148] sm:$0xff]
    %v4662 = vld [vmem:[%s4619 + $0x150] sm:$0xff]
    %v4663 = vld [vmem:[%s4619 + $0x158] sm:$0xff]
    %v4664 = vld [vmem:[%s4619 + $0x160] sm:$0xff]
    %v4665 = vld [vmem:[%s4619 + $0x168] sm:$0xff]
    %v4666 = vld [vmem:[%s4619 + $0x170] sm:$0xff]
    %v4667 = vld [vmem:[%s4619 + $0x178] sm:$0xff]
    %v4668 = vld [vmem:[%s4619 + $0x180] sm:$0xff]
    %v4669 = vld [vmem:[%s4619 + $0x188] sm:$0xff]
    %v4670 = vld [vmem:[%s4619 + $0x190] sm:$0xff]
    %v4671 = vld [vmem:[%s4619 + $0x198] sm:$0xff]
    %v4672 = vld [vmem:[%s4619 + $0x1a0] sm:$0xff]
    %v4673 = vld [vmem:[%s4619 + $0x1a8] sm:$0xff]
    %v4674 = vld [vmem:[%s4619 + $0x1b0] sm:$0xff]
    %v4675 = vld [vmem:[%s4619 + $0x1b8] sm:$0xff]
    %v4676 = vld [vmem:[%s4619 + $0x1c0] sm:$0xff]
    %v4677 = vld [vmem:[%s4619 + $0x1c8] sm:$0xff]
    %v4678 = vld [vmem:[%s4619 + $0x1d0] sm:$0xff]
    %v4679 = vld [vmem:[%s4619 + $0x1d8] sm:$0xff]
    %v4680 = vld [vmem:[%s4619 + $0x1e0] sm:$0xff]
    %v4681 = vld [vmem:[%s4619 + $0x1e8] sm:$0xff]
    %v4682 = vld [vmem:[%s4619 + $0x1f0] sm:$0xff]
    %v4683 = vld [vmem:[%s4619 + $0x1f8] sm:$0xff]
    %4684 = vmatpush.msra.mxu0 %v4680
    %4685 = vmatpush.msra.mxu0 %v4676
    %4686 = vmatpush.msra.mxu0 %v4672
    %4687 = vmatpush.msra.mxu0 %v4668
    %4688 = vmatpush.msra.mxu0 %v4664
    %4689 = vmatpush.msra.mxu0 %v4660
    %4690 = vmatpush.msra.mxu0 %v4656
    %4691 = vmatpush.msra.mxu0 %v4652
    %4692 = vmatpush.msra.mxu0 %v4648
    %4693 = vmatpush.msra.mxu0 %v4644
    %4694 = vmatpush.msra.mxu0 %v4640
    %4695 = vmatpush.msra.mxu0 %v4636
    %4696 = vmatpush.msra.mxu0 %v4632
    %4697 = vmatpush.msra.mxu0 %v4628
    %4698 = vmatpush.msra.mxu0 %v4624
    %4699 = vmatpush.msra.mxu0 %v4620
    %4700 = vmatmul.f32.gmra.mxu0 %v4617
    %v4701 = vpop.f32.mrf.mxu0
    %v4702 = vadd.f32 0.0, %v4701
    %4703 = vdwg.mxu0
    %4704 = vmatpush.msra.mxu0 %v4681
    %4705 = vmatpush.msra.mxu0 %v4677
    %4706 = vmatpush.msra.mxu0 %v4673
    %4707 = vmatpush.msra.mxu0 %v4669
    %4708 = vmatpush.msra.mxu0 %v4665
    %4709 = vmatpush.msra.mxu0 %v4661
    %4710 = vmatpush.msra.mxu0 %v4657
    %4711 = vmatpush.msra.mxu0 %v4653
    %4712 = vmatpush.msra.mxu0 %v4649
    %4713 = vmatpush.msra.mxu0 %v4645
    %4714 = vmatpush.msra.mxu0 %v4641
    %4715 = vmatpush.msra.mxu0 %v4637
    %4716 = vmatpush.msra.mxu0 %v4633
    %4717 = vmatpush.msra.mxu0 %v4629
    %4718 = vmatpush.msra.mxu0 %v4625
    %4719 = vmatpush.msra.mxu0 %v4621
    %4720 = vmatmul.f32.gmra.mxu0 %v4617
    %v4721 = vpop.f32.mrf.mxu0
    %v4722 = vadd.f32 0.0, %v4721
    %4723 = vdwg.mxu0
    %4724 = vmatpush.msra.mxu0 %v4682
    %4725 = vmatpush.msra.mxu0 %v4678
    %4726 = vmatpush.msra.mxu0 %v4674
    %4727 = vmatpush.msra.mxu0 %v4670
    %4728 = vmatpush.msra.mxu0 %v4666
    %4729 = vmatpush.msra.mxu0 %v4662
    %4730 = vmatpush.msra.mxu0 %v4658
    %4731 = vmatpush.msra.mxu0 %v4654
    %4732 = vmatpush.msra.mxu0 %v4650
    %4733 = vmatpush.msra.mxu0 %v4646
    %4734 = vmatpush.msra.mxu0 %v4642
    %4735 = vmatpush.msra.mxu0 %v4638
    %4736 = vmatpush.msra.mxu0 %v4634
    %4737 = vmatpush.msra.mxu0 %v4630
    %4738 = vmatpush.msra.mxu0 %v4626
    %4739 = vmatpush.msra.mxu0 %v4622
    %4740 = vmatmul.f32.gmra.mxu0 %v4617
    %v4741 = vpop.f32.mrf.mxu0
    %v4742 = vadd.f32 0.0, %v4741
    %4743 = vdwg.mxu0
    %4744 = vmatpush.msra.mxu0 %v4683
    %4745 = vmatpush.msra.mxu0 %v4679
    %4746 = vmatpush.msra.mxu0 %v4675
    %4747 = vmatpush.msra.mxu0 %v4671
    %4748 = vmatpush.msra.mxu0 %v4667
    %4749 = vmatpush.msra.mxu0 %v4663
    %4750 = vmatpush.msra.mxu0 %v4659
    %4751 = vmatpush.msra.mxu0 %v4655
    %4752 = vmatpush.msra.mxu0 %v4651
    %4753 = vmatpush.msra.mxu0 %v4647
    %4754 = vmatpush.msra.mxu0 %v4643
    %4755 = vmatpush.msra.mxu0 %v4639
    %4756 = vmatpush.msra.mxu0 %v4635
    %4757 = vmatpush.msra.mxu0 %v4631
    %4758 = vmatpush.msra.mxu0 %v4627
    %4759 = vmatpush.msra.mxu0 %v4623
    %4760 = vmatmul.f32.gmra.mxu0 %v4617
    %v4761 = vpop.f32.mrf.mxu0
    %v4762 = vadd.f32 0.0, %v4761
    %4763 = vdwg.mxu0
    %v4764 = vadd.f32 %v4590, %v4702
    %v4765 = vadd.f32 %v4591, %v4722
    %v4766 = vadd.f32 %v4592, %v4742
    %v4767 = vadd.f32 %v4593, %v4762
    %s4768 = scalar_lea.vmem [#allocation20], 12
    %v4769 = vld [vmem:[%s4768] sm:$0x3]
    %v4771 = vsel %vm3734, %v4769, 0
    %4773 = vmatpush.msra.mxu0 0.0
    %4774 = vmatpush.msra.mxu0 0.0
    %4775 = vmatpush.msra.mxu0 0.0
    %4776 = vmatpush.msra.mxu0 0.0
    %4777 = vmatpush.msra.mxu0 0.0
    %4778 = vmatpush.msra.mxu0 0.0
    %4779 = vmatpush.msra.mxu0 0.0
    %4780 = vmatpush.msra.mxu0 0.0
    %4781 = vmatpush.msra.mxu0 0.0
    %4782 = vmatpush.msra.mxu0 0.0
    %4783 = vmatpush.msra.mxu0 0.0
    %4784 = vmatpush.msra.mxu0 0.0
    %4785 = vmatpush.msra.mxu0 0.0
    %4786 = vmatpush.msra.mxu0 0.0
    %4787 = vmatpush.msra.mxu0 %v3732
    %4788 = vmatpush.msra.mxu0 %v3731
    %4789 = vmatmul.f32.gmra.mxu0 %v4771
    %v4790 = vpop.f32.mrf.mxu0
    %v4791 = vadd.f32 0.0, %v4790
    %4792 = vdwg.mxu0
    %s4793 = scalar_lea.vmem [#allocation22], 3072
    %v4794 = vld [vmem:[%s4793] sm:$0xff]
    %v4795 = vld [vmem:[%s4793 + $0x8] sm:$0xff]
    %v4796 = vld [vmem:[%s4793 + $0x10] sm:$0xff]
    %v4797 = vld [vmem:[%s4793 + $0x18] sm:$0xff]
    %v4798 = vld [vmem:[%s4793 + $0x20] sm:$0xff]
    %v4799 = vld [vmem:[%s4793 + $0x28] sm:$0xff]
    %v4800 = vld [vmem:[%s4793 + $0x30] sm:$0xff]
    %v4801 = vld [vmem:[%s4793 + $0x38] sm:$0xff]
    %v4802 = vld [vmem:[%s4793 + $0x40] sm:$0xff]
    %v4803 = vld [vmem:[%s4793 + $0x48] sm:$0xff]
    %v4804 = vld [vmem:[%s4793 + $0x50] sm:$0xff]
    %v4805 = vld [vmem:[%s4793 + $0x58] sm:$0xff]
    %v4806 = vld [vmem:[%s4793 + $0x60] sm:$0xff]
    %v4807 = vld [vmem:[%s4793 + $0x68] sm:$0xff]
    %v4808 = vld [vmem:[%s4793 + $0x70] sm:$0xff]
    %v4809 = vld [vmem:[%s4793 + $0x78] sm:$0xff]
    %v4810 = vld [vmem:[%s4793 + $0x80] sm:$0xff]
    %v4811 = vld [vmem:[%s4793 + $0x88] sm:$0xff]
    %v4812 = vld [vmem:[%s4793 + $0x90] sm:$0xff]
    %v4813 = vld [vmem:[%s4793 + $0x98] sm:$0xff]
    %v4814 = vld [vmem:[%s4793 + $0xa0] sm:$0xff]
    %v4815 = vld [vmem:[%s4793 + $0xa8] sm:$0xff]
    %v4816 = vld [vmem:[%s4793 + $0xb0] sm:$0xff]
    %v4817 = vld [vmem:[%s4793 + $0xb8] sm:$0xff]
    %v4818 = vld [vmem:[%s4793 + $0xc0] sm:$0xff]
    %v4819 = vld [vmem:[%s4793 + $0xc8] sm:$0xff]
    %v4820 = vld [vmem:[%s4793 + $0xd0] sm:$0xff]
    %v4821 = vld [vmem:[%s4793 + $0xd8] sm:$0xff]
    %v4822 = vld [vmem:[%s4793 + $0xe0] sm:$0xff]
    %v4823 = vld [vmem:[%s4793 + $0xe8] sm:$0xff]
    %v4824 = vld [vmem:[%s4793 + $0xf0] sm:$0xff]
    %v4825 = vld [vmem:[%s4793 + $0xf8] sm:$0xff]
    %v4826 = vld [vmem:[%s4793 + $0x100] sm:$0xff]
    %v4827 = vld [vmem:[%s4793 + $0x108] sm:$0xff]
    %v4828 = vld [vmem:[%s4793 + $0x110] sm:$0xff]
    %v4829 = vld [vmem:[%s4793 + $0x118] sm:$0xff]
    %v4830 = vld [vmem:[%s4793 + $0x120] sm:$0xff]
    %v4831 = vld [vmem:[%s4793 + $0x128] sm:$0xff]
    %v4832 = vld [vmem:[%s4793 + $0x130] sm:$0xff]
    %v4833 = vld [vmem:[%s4793 + $0x138] sm:$0xff]
    %v4834 = vld [vmem:[%s4793 + $0x140] sm:$0xff]
    %v4835 = vld [vmem:[%s4793 + $0x148] sm:$0xff]
    %v4836 = vld [vmem:[%s4793 + $0x150] sm:$0xff]
    %v4837 = vld [vmem:[%s4793 + $0x158] sm:$0xff]
    %v4838 = vld [vmem:[%s4793 + $0x160] sm:$0xff]
    %v4839 = vld [vmem:[%s4793 + $0x168] sm:$0xff]
    %v4840 = vld [vmem:[%s4793 + $0x170] sm:$0xff]
    %v4841 = vld [vmem:[%s4793 + $0x178] sm:$0xff]
    %v4842 = vld [vmem:[%s4793 + $0x180] sm:$0xff]
    %v4843 = vld [vmem:[%s4793 + $0x188] sm:$0xff]
    %v4844 = vld [vmem:[%s4793 + $0x190] sm:$0xff]
    %v4845 = vld [vmem:[%s4793 + $0x198] sm:$0xff]
    %v4846 = vld [vmem:[%s4793 + $0x1a0] sm:$0xff]
    %v4847 = vld [vmem:[%s4793 + $0x1a8] sm:$0xff]
    %v4848 = vld [vmem:[%s4793 + $0x1b0] sm:$0xff]
    %v4849 = vld [vmem:[%s4793 + $0x1b8] sm:$0xff]
    %v4850 = vld [vmem:[%s4793 + $0x1c0] sm:$0xff]
    %v4851 = vld [vmem:[%s4793 + $0x1c8] sm:$0xff]
    %v4852 = vld [vmem:[%s4793 + $0x1d0] sm:$0xff]
    %v4853 = vld [vmem:[%s4793 + $0x1d8] sm:$0xff]
    %v4854 = vld [vmem:[%s4793 + $0x1e0] sm:$0xff]
    %v4855 = vld [vmem:[%s4793 + $0x1e8] sm:$0xff]
    %v4856 = vld [vmem:[%s4793 + $0x1f0] sm:$0xff]
    %v4857 = vld [vmem:[%s4793 + $0x1f8] sm:$0xff]
    %4858 = vmatpush.msra.mxu0 %v4854
    %4859 = vmatpush.msra.mxu0 %v4850
    %4860 = vmatpush.msra.mxu0 %v4846
    %4861 = vmatpush.msra.mxu0 %v4842
    %4862 = vmatpush.msra.mxu0 %v4838
    %4863 = vmatpush.msra.mxu0 %v4834
    %4864 = vmatpush.msra.mxu0 %v4830
    %4865 = vmatpush.msra.mxu0 %v4826
    %4866 = vmatpush.msra.mxu0 %v4822
    %4867 = vmatpush.msra.mxu0 %v4818
    %4868 = vmatpush.msra.mxu0 %v4814
    %4869 = vmatpush.msra.mxu0 %v4810
    %4870 = vmatpush.msra.mxu0 %v4806
    %4871 = vmatpush.msra.mxu0 %v4802
    %4872 = vmatpush.msra.mxu0 %v4798
    %4873 = vmatpush.msra.mxu0 %v4794
    %4874 = vmatmul.f32.gmra.mxu0 %v4791
    %v4875 = vpop.f32.mrf.mxu0
    %v4876 = vadd.f32 0.0, %v4875
    %4877 = vdwg.mxu0
    %4878 = vmatpush.msra.mxu0 %v4855
    %4879 = vmatpush.msra.mxu0 %v4851
    %4880 = vmatpush.msra.mxu0 %v4847
    %4881 = vmatpush.msra.mxu0 %v4843
    %4882 = vmatpush.msra.mxu0 %v4839
    %4883 = vmatpush.msra.mxu0 %v4835
    %4884 = vmatpush.msra.mxu0 %v4831
    %4885 = vmatpush.msra.mxu0 %v4827
    %4886 = vmatpush.msra.mxu0 %v4823
    %4887 = vmatpush.msra.mxu0 %v4819
    %4888 = vmatpush.msra.mxu0 %v4815
    %4889 = vmatpush.msra.mxu0 %v4811
    %4890 = vmatpush.msra.mxu0 %v4807
    %4891 = vmatpush.msra.mxu0 %v4803
    %4892 = vmatpush.msra.mxu0 %v4799
    %4893 = vmatpush.msra.mxu0 %v4795
    %4894 = vmatmul.f32.gmra.mxu0 %v4791
    %v4895 = vpop.f32.mrf.mxu0
    %v4896 = vadd.f32 0.0, %v4895
    %4897 = vdwg.mxu0
    %4898 = vmatpush.msra.mxu0 %v4856
    %4899 = vmatpush.msra.mxu0 %v4852
    %4900 = vmatpush.msra.mxu0 %v4848
    %4901 = vmatpush.msra.mxu0 %v4844
    %4902 = vmatpush.msra.mxu0 %v4840
    %4903 = vmatpush.msra.mxu0 %v4836
    %4904 = vmatpush.msra.mxu0 %v4832
    %4905 = vmatpush.msra.mxu0 %v4828
    %4906 = vmatpush.msra.mxu0 %v4824
    %4907 = vmatpush.msra.mxu0 %v4820
    %4908 = vmatpush.msra.mxu0 %v4816
    %4909 = vmatpush.msra.mxu0 %v4812
    %4910 = vmatpush.msra.mxu0 %v4808
    %4911 = vmatpush.msra.mxu0 %v4804
    %4912 = vmatpush.msra.mxu0 %v4800
    %4913 = vmatpush.msra.mxu0 %v4796
    %4914 = vmatmul.f32.gmra.mxu0 %v4791
    %v4915 = vpop.f32.mrf.mxu0
    %v4916 = vadd.f32 0.0, %v4915
    %4917 = vdwg.mxu0
    %4918 = vmatpush.msra.mxu0 %v4857
    %4919 = vmatpush.msra.mxu0 %v4853
    %4920 = vmatpush.msra.mxu0 %v4849
    %4921 = vmatpush.msra.mxu0 %v4845
    %4922 = vmatpush.msra.mxu0 %v4841
    %4923 = vmatpush.msra.mxu0 %v4837
    %4924 = vmatpush.msra.mxu0 %v4833
    %4925 = vmatpush.msra.mxu0 %v4829
    %4926 = vmatpush.msra.mxu0 %v4825
    %4927 = vmatpush.msra.mxu0 %v4821
    %4928 = vmatpush.msra.mxu0 %v4817
    %4929 = vmatpush.msra.mxu0 %v4813
    %4930 = vmatpush.msra.mxu0 %v4809
    %4931 = vmatpush.msra.mxu0 %v4805
    %4932 = vmatpush.msra.mxu0 %v4801
    %4933 = vmatpush.msra.mxu0 %v4797
    %4934 = vmatmul.f32.gmra.mxu0 %v4791
    %v4935 = vpop.f32.mrf.mxu0
    %v4936 = vadd.f32 0.0, %v4935
    %4937 = vdwg.mxu0
    %v4938 = vadd.f32 %v4764, %v4876
    %v4939 = vadd.f32 %v4765, %v4896
    %v4940 = vadd.f32 %v4766, %v4916
    %v4941 = vadd.f32 %v4767, %v4936
    %s4942 = scalar_lea.vmem [#allocation20], 14
    %v4943 = vld [vmem:[%s4942] sm:$0x3]
    %v4945 = vsel %vm3734, %v4943, 0
    %4947 = vmatpush.msra.mxu0 0.0
    %4948 = vmatpush.msra.mxu0 0.0
    %4949 = vmatpush.msra.mxu0 0.0
    %4950 = vmatpush.msra.mxu0 0.0
    %4951 = vmatpush.msra.mxu0 0.0
    %4952 = vmatpush.msra.mxu0 0.0
    %4953 = vmatpush.msra.mxu0 0.0
    %4954 = vmatpush.msra.mxu0 0.0
    %4955 = vmatpush.msra.mxu0 0.0
    %4956 = vmatpush.msra.mxu0 0.0
    %4957 = vmatpush.msra.mxu0 0.0
    %4958 = vmatpush.msra.mxu0 0.0
    %4959 = vmatpush.msra.mxu0 0.0
    %4960 = vmatpush.msra.mxu0 0.0
    %4961 = vmatpush.msra.mxu0 %v3732
    %4962 = vmatpush.msra.mxu0 %v3731
    %4963 = vmatmul.f32.gmra.mxu0 %v4945
    %v4964 = vpop.f32.mrf.mxu0
    %v4965 = vadd.f32 0.0, %v4964
    %4966 = vdwg.mxu0
    %s4967 = scalar_lea.vmem [#allocation22], 3584
    %v4968 = vld [vmem:[%s4967] sm:$0xff]
    %v4969 = vld [vmem:[%s4967 + $0x8] sm:$0xff]
    %v4970 = vld [vmem:[%s4967 + $0x10] sm:$0xff]
    %v4971 = vld [vmem:[%s4967 + $0x18] sm:$0xff]
    %v4972 = vld [vmem:[%s4967 + $0x20] sm:$0xff]
    %v4973 = vld [vmem:[%s4967 + $0x28] sm:$0xff]
    %v4974 = vld [vmem:[%s4967 + $0x30] sm:$0xff]
    %v4975 = vld [vmem:[%s4967 + $0x38] sm:$0xff]
    %v4976 = vld [vmem:[%s4967 + $0x40] sm:$0xff]
    %v4977 = vld [vmem:[%s4967 + $0x48] sm:$0xff]
    %v4978 = vld [vmem:[%s4967 + $0x50] sm:$0xff]
    %v4979 = vld [vmem:[%s4967 + $0x58] sm:$0xff]
    %v4980 = vld [vmem:[%s4967 + $0x60] sm:$0xff]
    %v4981 = vld [vmem:[%s4967 + $0x68] sm:$0xff]
    %v4982 = vld [vmem:[%s4967 + $0x70] sm:$0xff]
    %v4983 = vld [vmem:[%s4967 + $0x78] sm:$0xff]
    %v4984 = vld [vmem:[%s4967 + $0x80] sm:$0xff]
    %v4985 = vld [vmem:[%s4967 + $0x88] sm:$0xff]
    %v4986 = vld [vmem:[%s4967 + $0x90] sm:$0xff]
    %v4987 = vld [vmem:[%s4967 + $0x98] sm:$0xff]
    %v4988 = vld [vmem:[%s4967 + $0xa0] sm:$0xff]
    %v4989 = vld [vmem:[%s4967 + $0xa8] sm:$0xff]
    %v4990 = vld [vmem:[%s4967 + $0xb0] sm:$0xff]
    %v4991 = vld [vmem:[%s4967 + $0xb8] sm:$0xff]
    %v4992 = vld [vmem:[%s4967 + $0xc0] sm:$0xff]
    %v4993 = vld [vmem:[%s4967 + $0xc8] sm:$0xff]
    %v4994 = vld [vmem:[%s4967 + $0xd0] sm:$0xff]
    %v4995 = vld [vmem:[%s4967 + $0xd8] sm:$0xff]
    %v4996 = vld [vmem:[%s4967 + $0xe0] sm:$0xff]
    %v4997 = vld [vmem:[%s4967 + $0xe8] sm:$0xff]
    %v4998 = vld [vmem:[%s4967 + $0xf0] sm:$0xff]
    %v4999 = vld [vmem:[%s4967 + $0xf8] sm:$0xff]
    %v5000 = vld [vmem:[%s4967 + $0x100] sm:$0xff]
    %v5001 = vld [vmem:[%s4967 + $0x108] sm:$0xff]
    %v5002 = vld [vmem:[%s4967 + $0x110] sm:$0xff]
    %v5003 = vld [vmem:[%s4967 + $0x118] sm:$0xff]
    %v5004 = vld [vmem:[%s4967 + $0x120] sm:$0xff]
    %v5005 = vld [vmem:[%s4967 + $0x128] sm:$0xff]
    %v5006 = vld [vmem:[%s4967 + $0x130] sm:$0xff]
    %v5007 = vld [vmem:[%s4967 + $0x138] sm:$0xff]
    %v5008 = vld [vmem:[%s4967 + $0x140] sm:$0xff]
    %v5009 = vld [vmem:[%s4967 + $0x148] sm:$0xff]
    %v5010 = vld [vmem:[%s4967 + $0x150] sm:$0xff]
    %v5011 = vld [vmem:[%s4967 + $0x158] sm:$0xff]
    %v5012 = vld [vmem:[%s4967 + $0x160] sm:$0xff]
    %v5013 = vld [vmem:[%s4967 + $0x168] sm:$0xff]
    %v5014 = vld [vmem:[%s4967 + $0x170] sm:$0xff]
    %v5015 = vld [vmem:[%s4967 + $0x178] sm:$0xff]
    %v5016 = vld [vmem:[%s4967 + $0x180] sm:$0xff]
    %v5017 = vld [vmem:[%s4967 + $0x188] sm:$0xff]
    %v5018 = vld [vmem:[%s4967 + $0x190] sm:$0xff]
    %v5019 = vld [vmem:[%s4967 + $0x198] sm:$0xff]
    %v5020 = vld [vmem:[%s4967 + $0x1a0] sm:$0xff]
    %v5021 = vld [vmem:[%s4967 + $0x1a8] sm:$0xff]
    %v5022 = vld [vmem:[%s4967 + $0x1b0] sm:$0xff]
    %v5023 = vld [vmem:[%s4967 + $0x1b8] sm:$0xff]
    %v5024 = vld [vmem:[%s4967 + $0x1c0] sm:$0xff]
    %v5025 = vld [vmem:[%s4967 + $0x1c8] sm:$0xff]
    %v5026 = vld [vmem:[%s4967 + $0x1d0] sm:$0xff]
    %v5027 = vld [vmem:[%s4967 + $0x1d8] sm:$0xff]
    %v5028 = vld [vmem:[%s4967 + $0x1e0] sm:$0xff]
    %v5029 = vld [vmem:[%s4967 + $0x1e8] sm:$0xff]
    %v5030 = vld [vmem:[%s4967 + $0x1f0] sm:$0xff]
    %v5031 = vld [vmem:[%s4967 + $0x1f8] sm:$0xff]
    %5032 = vmatpush.msra.mxu0 %v5028
    %5033 = vmatpush.msra.mxu0 %v5024
    %5034 = vmatpush.msra.mxu0 %v5020
    %5035 = vmatpush.msra.mxu0 %v5016
    %5036 = vmatpush.msra.mxu0 %v5012
    %5037 = vmatpush.msra.mxu0 %v5008
    %5038 = vmatpush.msra.mxu0 %v5004
    %5039 = vmatpush.msra.mxu0 %v5000
    %5040 = vmatpush.msra.mxu0 %v4996
    %5041 = vmatpush.msra.mxu0 %v4992
    %5042 = vmatpush.msra.mxu0 %v4988
    %5043 = vmatpush.msra.mxu0 %v4984
    %5044 = vmatpush.msra.mxu0 %v4980
    %5045 = vmatpush.msra.mxu0 %v4976
    %5046 = vmatpush.msra.mxu0 %v4972
    %5047 = vmatpush.msra.mxu0 %v4968
    %5048 = vmatmul.f32.gmra.mxu0 %v4965
    %v5049 = vpop.f32.mrf.mxu0
    %v5050 = vadd.f32 0.0, %v5049
    %5051 = vdwg.mxu0
    %5052 = vmatpush.msra.mxu0 %v5029
    %5053 = vmatpush.msra.mxu0 %v5025
    %5054 = vmatpush.msra.mxu0 %v5021
    %5055 = vmatpush.msra.mxu0 %v5017
    %5056 = vmatpush.msra.mxu0 %v5013
    %5057 = vmatpush.msra.mxu0 %v5009
    %5058 = vmatpush.msra.mxu0 %v5005
    %5059 = vmatpush.msra.mxu0 %v5001
    %5060 = vmatpush.msra.mxu0 %v4997
    %5061 = vmatpush.msra.mxu0 %v4993
    %5062 = vmatpush.msra.mxu0 %v4989
    %5063 = vmatpush.msra.mxu0 %v4985
    %5064 = vmatpush.msra.mxu0 %v4981
    %5065 = vmatpush.msra.mxu0 %v4977
    %5066 = vmatpush.msra.mxu0 %v4973
    %5067 = vmatpush.msra.mxu0 %v4969
    %5068 = vmatmul.f32.gmra.mxu0 %v4965
    %v5069 = vpop.f32.mrf.mxu0
    %v5070 = vadd.f32 0.0, %v5069
    %5071 = vdwg.mxu0
    %5072 = vmatpush.msra.mxu0 %v5030
    %5073 = vmatpush.msra.mxu0 %v5026
    %5074 = vmatpush.msra.mxu0 %v5022
    %5075 = vmatpush.msra.mxu0 %v5018
    %5076 = vmatpush.msra.mxu0 %v5014
    %5077 = vmatpush.msra.mxu0 %v5010
    %5078 = vmatpush.msra.mxu0 %v5006
    %5079 = vmatpush.msra.mxu0 %v5002
    %5080 = vmatpush.msra.mxu0 %v4998
    %5081 = vmatpush.msra.mxu0 %v4994
    %5082 = vmatpush.msra.mxu0 %v4990
    %5083 = vmatpush.msra.mxu0 %v4986
    %5084 = vmatpush.msra.mxu0 %v4982
    %5085 = vmatpush.msra.mxu0 %v4978
    %5086 = vmatpush.msra.mxu0 %v4974
    %5087 = vmatpush.msra.mxu0 %v4970
    %5088 = vmatmul.f32.gmra.mxu0 %v4965
    %v5089 = vpop.f32.mrf.mxu0
    %v5090 = vadd.f32 0.0, %v5089
    %5091 = vdwg.mxu0
    %5092 = vmatpush.msra.mxu0 %v5031
    %5093 = vmatpush.msra.mxu0 %v5027
    %5094 = vmatpush.msra.mxu0 %v5023
    %5095 = vmatpush.msra.mxu0 %v5019
    %5096 = vmatpush.msra.mxu0 %v5015
    %5097 = vmatpush.msra.mxu0 %v5011
    %5098 = vmatpush.msra.mxu0 %v5007
    %5099 = vmatpush.msra.mxu0 %v5003
    %5100 = vmatpush.msra.mxu0 %v4999
    %5101 = vmatpush.msra.mxu0 %v4995
    %5102 = vmatpush.msra.mxu0 %v4991
    %5103 = vmatpush.msra.mxu0 %v4987
    %5104 = vmatpush.msra.mxu0 %v4983
    %5105 = vmatpush.msra.mxu0 %v4979
    %5106 = vmatpush.msra.mxu0 %v4975
    %5107 = vmatpush.msra.mxu0 %v4971
    %5108 = vmatmul.f32.gmra.mxu0 %v4965
    %v5109 = vpop.f32.mrf.mxu0
    %v5110 = vadd.f32 0.0, %v5109
    %5111 = vdwg.mxu0
    %v5112 = vadd.f32 %v4938, %v5050
    %v5113 = vadd.f32 %v4939, %v5070
    %v5114 = vadd.f32 %v4940, %v5090
    %v5115 = vadd.f32 %v4941, %v5110
    %v5116 = vld [vmem:[#allocation23] sm:$0xf]
    %v5118 = vperm.slane %v5116, 0
    %v5119 = vperm.slane %v5116, 1
    %v5120 = vperm.slane %v5116, 2
    %v5121 = vperm.slane %v5116, 3
    %v5126 = vadd.f32 %v5112, %v5118
    %v5127 = vadd.f32 %v5113, %v5119
    %v5128 = vadd.f32 %v5114, %v5120
    %v5129 = vadd.f32 %v5115, %v5121
    %vm5130 = vcmp.ge.f32.partialorder %v5126, 0.0
    %vm5131 = vcmp.ge.f32.partialorder %v5127, 0.0
    %vm5132 = vcmp.ge.f32.partialorder %v5128, 0.0
    %vm5133 = vcmp.ge.f32.partialorder %v5129, 0.0
    %v5134 = vmul.f32 %v5126, 0.01
    %v5135 = vmul.f32 %v5127, 0.01
    %v5136 = vmul.f32 %v5128, 0.01
    %v5137 = vmul.f32 %v5129, 0.01
    %v5138 = vsel %vm5130, %v5126, %v5134
    %v5139 = vsel %vm5131, %v5127, %v5135
    %v5140 = vsel %vm5132, %v5128, %v5136
    %v5141 = vsel %vm5133, %v5129, %v5137
    %v5142 = vld [vmem:[#allocation25] sm:$0xff]
    %v5143 = vld [vmem:[#allocation25 + $0x8] sm:$0xff]
    %v5144 = vld [vmem:[#allocation25 + $0x10] sm:$0xff]
    %v5145 = vld [vmem:[#allocation25 + $0x18] sm:$0xff]
    %v5146 = vld [vmem:[#allocation25 + $0x20] sm:$0xff]
    %v5147 = vld [vmem:[#allocation25 + $0x28] sm:$0xff]
    %v5148 = vld [vmem:[#allocation25 + $0x30] sm:$0xff]
    %v5149 = vld [vmem:[#allocation25 + $0x38] sm:$0xff]
    %v5150 = vld [vmem:[#allocation25 + $0x40] sm:$0xff]
    %v5151 = vld [vmem:[#allocation25 + $0x48] sm:$0xff]
    %v5152 = vld [vmem:[#allocation25 + $0x50] sm:$0xff]
    %v5153 = vld [vmem:[#allocation25 + $0x58] sm:$0xff]
    %v5154 = vld [vmem:[#allocation25 + $0x60] sm:$0xff]
    %v5155 = vld [vmem:[#allocation25 + $0x68] sm:$0xff]
    %v5156 = vld [vmem:[#allocation25 + $0x70] sm:$0xff]
    %v5157 = vld [vmem:[#allocation25 + $0x78] sm:$0xff]
    %v5158 = vld [vmem:[#allocation25 + $0x80] sm:$0xff]
    %v5159 = vld [vmem:[#allocation25 + $0x88] sm:$0xff]
    %v5160 = vld [vmem:[#allocation25 + $0x90] sm:$0xff]
    %v5161 = vld [vmem:[#allocation25 + $0x98] sm:$0xff]
    %v5162 = vld [vmem:[#allocation25 + $0xa0] sm:$0xff]
    %v5163 = vld [vmem:[#allocation25 + $0xa8] sm:$0xff]
    %v5164 = vld [vmem:[#allocation25 + $0xb0] sm:$0xff]
    %v5165 = vld [vmem:[#allocation25 + $0xb8] sm:$0xff]
    %v5166 = vld [vmem:[#allocation25 + $0xc0] sm:$0xff]
    %v5167 = vld [vmem:[#allocation25 + $0xc8] sm:$0xff]
    %v5168 = vld [vmem:[#allocation25 + $0xd0] sm:$0xff]
    %v5169 = vld [vmem:[#allocation25 + $0xd8] sm:$0xff]
    %v5170 = vld [vmem:[#allocation25 + $0xe0] sm:$0xff]
    %v5171 = vld [vmem:[#allocation25 + $0xe8] sm:$0xff]
    %v5172 = vld [vmem:[#allocation25 + $0xf0] sm:$0xff]
    %v5173 = vld [vmem:[#allocation25 + $0xf8] sm:$0xff]
    %v5174 = vld [vmem:[#allocation25 + $0x100] sm:$0xff]
    %v5175 = vld [vmem:[#allocation25 + $0x108] sm:$0xff]
    %v5176 = vld [vmem:[#allocation25 + $0x110] sm:$0xff]
    %v5177 = vld [vmem:[#allocation25 + $0x118] sm:$0xff]
    %v5178 = vld [vmem:[#allocation25 + $0x120] sm:$0xff]
    %v5179 = vld [vmem:[#allocation25 + $0x128] sm:$0xff]
    %v5180 = vld [vmem:[#allocation25 + $0x130] sm:$0xff]
    %v5181 = vld [vmem:[#allocation25 + $0x138] sm:$0xff]
    %v5182 = vld [vmem:[#allocation25 + $0x140] sm:$0xff]
    %v5183 = vld [vmem:[#allocation25 + $0x148] sm:$0xff]
    %v5184 = vld [vmem:[#allocation25 + $0x150] sm:$0xff]
    %v5185 = vld [vmem:[#allocation25 + $0x158] sm:$0xff]
    %v5186 = vld [vmem:[#allocation25 + $0x160] sm:$0xff]
    %v5187 = vld [vmem:[#allocation25 + $0x168] sm:$0xff]
    %v5188 = vld [vmem:[#allocation25 + $0x170] sm:$0xff]
    %v5189 = vld [vmem:[#allocation25 + $0x178] sm:$0xff]
    %v5190 = vld [vmem:[#allocation25 + $0x180] sm:$0xff]
    %v5191 = vld [vmem:[#allocation25 + $0x188] sm:$0xff]
    %v5192 = vld [vmem:[#allocation25 + $0x190] sm:$0xff]
    %v5193 = vld [vmem:[#allocation25 + $0x198] sm:$0xff]
    %v5194 = vld [vmem:[#allocation25 + $0x1a0] sm:$0xff]
    %v5195 = vld [vmem:[#allocation25 + $0x1a8] sm:$0xff]
    %v5196 = vld [vmem:[#allocation25 + $0x1b0] sm:$0xff]
    %v5197 = vld [vmem:[#allocation25 + $0x1b8] sm:$0xff]
    %v5198 = vld [vmem:[#allocation25 + $0x1c0] sm:$0xff]
    %v5199 = vld [vmem:[#allocation25 + $0x1c8] sm:$0xff]
    %v5200 = vld [vmem:[#allocation25 + $0x1d0] sm:$0xff]
    %v5201 = vld [vmem:[#allocation25 + $0x1d8] sm:$0xff]
    %v5202 = vld [vmem:[#allocation25 + $0x1e0] sm:$0xff]
    %v5203 = vld [vmem:[#allocation25 + $0x1e8] sm:$0xff]
    %v5204 = vld [vmem:[#allocation25 + $0x1f0] sm:$0xff]
    %v5205 = vld [vmem:[#allocation25 + $0x1f8] sm:$0xff]
    %v5206 = vld [vmem:[#allocation25 + $0x200] sm:$0xff]
    %v5207 = vld [vmem:[#allocation25 + $0x208] sm:$0xff]
    %v5208 = vld [vmem:[#allocation25 + $0x210] sm:$0xff]
    %v5209 = vld [vmem:[#allocation25 + $0x218] sm:$0xff]
    %v5210 = vld [vmem:[#allocation25 + $0x220] sm:$0xff]
    %v5211 = vld [vmem:[#allocation25 + $0x228] sm:$0xff]
    %v5212 = vld [vmem:[#allocation25 + $0x230] sm:$0xff]
    %v5213 = vld [vmem:[#allocation25 + $0x238] sm:$0xff]
    %v5214 = vld [vmem:[#allocation25 + $0x240] sm:$0xff]
    %v5215 = vld [vmem:[#allocation25 + $0x248] sm:$0xff]
    %v5216 = vld [vmem:[#allocation25 + $0x250] sm:$0xff]
    %v5217 = vld [vmem:[#allocation25 + $0x258] sm:$0xff]
    %v5218 = vld [vmem:[#allocation25 + $0x260] sm:$0xff]
    %v5219 = vld [vmem:[#allocation25 + $0x268] sm:$0xff]
    %v5220 = vld [vmem:[#allocation25 + $0x270] sm:$0xff]
    %v5221 = vld [vmem:[#allocation25 + $0x278] sm:$0xff]
    %v5222 = vld [vmem:[#allocation25 + $0x280] sm:$0xff]
    %v5223 = vld [vmem:[#allocation25 + $0x288] sm:$0xff]
    %v5224 = vld [vmem:[#allocation25 + $0x290] sm:$0xff]
    %v5225 = vld [vmem:[#allocation25 + $0x298] sm:$0xff]
    %v5226 = vld [vmem:[#allocation25 + $0x2a0] sm:$0xff]
    %v5227 = vld [vmem:[#allocation25 + $0x2a8] sm:$0xff]
    %v5228 = vld [vmem:[#allocation25 + $0x2b0] sm:$0xff]
    %v5229 = vld [vmem:[#allocation25 + $0x2b8] sm:$0xff]
    %v5230 = vld [vmem:[#allocation25 + $0x2c0] sm:$0xff]
    %v5231 = vld [vmem:[#allocation25 + $0x2c8] sm:$0xff]
    %v5232 = vld [vmem:[#allocation25 + $0x2d0] sm:$0xff]
    %v5233 = vld [vmem:[#allocation25 + $0x2d8] sm:$0xff]
    %v5234 = vld [vmem:[#allocation25 + $0x2e0] sm:$0xff]
    %v5235 = vld [vmem:[#allocation25 + $0x2e8] sm:$0xff]
    %v5236 = vld [vmem:[#allocation25 + $0x2f0] sm:$0xff]
    %v5237 = vld [vmem:[#allocation25 + $0x2f8] sm:$0xff]
    %v5238 = vld [vmem:[#allocation25 + $0x300] sm:$0xff]
    %v5239 = vld [vmem:[#allocation25 + $0x308] sm:$0xff]
    %v5240 = vld [vmem:[#allocation25 + $0x310] sm:$0xff]
    %v5241 = vld [vmem:[#allocation25 + $0x318] sm:$0xff]
    %v5242 = vld [vmem:[#allocation25 + $0x320] sm:$0xff]
    %v5243 = vld [vmem:[#allocation25 + $0x328] sm:$0xff]
    %v5244 = vld [vmem:[#allocation25 + $0x330] sm:$0xff]
    %v5245 = vld [vmem:[#allocation25 + $0x338] sm:$0xff]
    %v5246 = vld [vmem:[#allocation25 + $0x340] sm:$0xff]
    %v5247 = vld [vmem:[#allocation25 + $0x348] sm:$0xff]
    %v5248 = vld [vmem:[#allocation25 + $0x350] sm:$0xff]
    %v5249 = vld [vmem:[#allocation25 + $0x358] sm:$0xff]
    %v5250 = vld [vmem:[#allocation25 + $0x360] sm:$0xff]
    %v5251 = vld [vmem:[#allocation25 + $0x368] sm:$0xff]
    %v5252 = vld [vmem:[#allocation25 + $0x370] sm:$0xff]
    %v5253 = vld [vmem:[#allocation25 + $0x378] sm:$0xff]
    %v5254 = vld [vmem:[#allocation25 + $0x380] sm:$0xff]
    %v5255 = vld [vmem:[#allocation25 + $0x388] sm:$0xff]
    %v5256 = vld [vmem:[#allocation25 + $0x390] sm:$0xff]
    %v5257 = vld [vmem:[#allocation25 + $0x398] sm:$0xff]
    %v5258 = vld [vmem:[#allocation25 + $0x3a0] sm:$0xff]
    %v5259 = vld [vmem:[#allocation25 + $0x3a8] sm:$0xff]
    %v5260 = vld [vmem:[#allocation25 + $0x3b0] sm:$0xff]
    %v5261 = vld [vmem:[#allocation25 + $0x3b8] sm:$0xff]
    %v5262 = vld [vmem:[#allocation25 + $0x3c0] sm:$0xff]
    %v5263 = vld [vmem:[#allocation25 + $0x3c8] sm:$0xff]
    %v5264 = vld [vmem:[#allocation25 + $0x3d0] sm:$0xff]
    %v5265 = vld [vmem:[#allocation25 + $0x3d8] sm:$0xff]
    %v5266 = vld [vmem:[#allocation25 + $0x3e0] sm:$0xff]
    %v5267 = vld [vmem:[#allocation25 + $0x3e8] sm:$0xff]
    %v5268 = vld [vmem:[#allocation25 + $0x3f0] sm:$0xff]
    %v5269 = vld [vmem:[#allocation25 + $0x3f8] sm:$0xff]
    %v5270 = vld [vmem:[#allocation26] sm:$0x3]
    %v5272 = vperm.slane %v5270, 0
    %v5273 = vperm.slane %v5270, 1
    %5276 = vmatpush.msra.mxu0 %v5172
    %5277 = vmatpush.msra.mxu0 %v5170
    %5278 = vmatpush.msra.mxu0 %v5168
    %5279 = vmatpush.msra.mxu0 %v5166
    %5280 = vmatpush.msra.mxu0 %v5164
    %5281 = vmatpush.msra.mxu0 %v5162
    %5282 = vmatpush.msra.mxu0 %v5160
    %5283 = vmatpush.msra.mxu0 %v5158
    %5284 = vmatpush.msra.mxu0 %v5156
    %5285 = vmatpush.msra.mxu0 %v5154
    %5286 = vmatpush.msra.mxu0 %v5152
    %5287 = vmatpush.msra.mxu0 %v5150
    %5288 = vmatpush.msra.mxu0 %v5148
    %5289 = vmatpush.msra.mxu0 %v5146
    %5290 = vmatpush.msra.mxu0 %v5144
    %5291 = vmatpush.msra.mxu0 %v5142
    %5292 = vmatmul.f32.gmra.mxu0 %v5138
    %v5293 = vpop.f32.mrf.mxu0
    %v5294 = vadd.f32 %v5272, %v5293
    %5295 = vdwg.mxu0
    %5296 = vmatpush.msra.mxu0 %v5204
    %5297 = vmatpush.msra.mxu0 %v5202
    %5298 = vmatpush.msra.mxu0 %v5200
    %5299 = vmatpush.msra.mxu0 %v5198
    %5300 = vmatpush.msra.mxu0 %v5196
    %5301 = vmatpush.msra.mxu0 %v5194
    %5302 = vmatpush.msra.mxu0 %v5192
    %5303 = vmatpush.msra.mxu0 %v5190
    %5304 = vmatpush.msra.mxu0 %v5188
    %5305 = vmatpush.msra.mxu0 %v5186
    %5306 = vmatpush.msra.mxu0 %v5184
    %5307 = vmatpush.msra.mxu0 %v5182
    %5308 = vmatpush.msra.mxu0 %v5180
    %5309 = vmatpush.msra.mxu0 %v5178
    %5310 = vmatpush.msra.mxu0 %v5176
    %5311 = vmatpush.msra.mxu0 %v5174
    %5312 = vmatmul.f32.gmra.mxu0 %v5139
    %v5313 = vpop.f32.mrf.mxu0
    %v5314 = vadd.f32 %v5294, %v5313
    %5315 = vdwg.mxu0
    %5316 = vmatpush.msra.mxu0 %v5236
    %5317 = vmatpush.msra.mxu0 %v5234
    %5318 = vmatpush.msra.mxu0 %v5232
    %5319 = vmatpush.msra.mxu0 %v5230
    %5320 = vmatpush.msra.mxu0 %v5228
    %5321 = vmatpush.msra.mxu0 %v5226
    %5322 = vmatpush.msra.mxu0 %v5224
    %5323 = vmatpush.msra.mxu0 %v5222
    %5324 = vmatpush.msra.mxu0 %v5220
    %5325 = vmatpush.msra.mxu0 %v5218
    %5326 = vmatpush.msra.mxu0 %v5216
    %5327 = vmatpush.msra.mxu0 %v5214
    %5328 = vmatpush.msra.mxu0 %v5212
    %5329 = vmatpush.msra.mxu0 %v5210
    %5330 = vmatpush.msra.mxu0 %v5208
    %5331 = vmatpush.msra.mxu0 %v5206
    %5332 = vmatmul.f32.gmra.mxu0 %v5140
    %v5333 = vpop.f32.mrf.mxu0
    %v5334 = vadd.f32 %v5314, %v5333
    %5335 = vdwg.mxu0
    %5336 = vmatpush.msra.mxu0 %v5268
    %5337 = vmatpush.msra.mxu0 %v5266
    %5338 = vmatpush.msra.mxu0 %v5264
    %5339 = vmatpush.msra.mxu0 %v5262
    %5340 = vmatpush.msra.mxu0 %v5260
    %5341 = vmatpush.msra.mxu0 %v5258
    %5342 = vmatpush.msra.mxu0 %v5256
    %5343 = vmatpush.msra.mxu0 %v5254
    %5344 = vmatpush.msra.mxu0 %v5252
    %5345 = vmatpush.msra.mxu0 %v5250
    %5346 = vmatpush.msra.mxu0 %v5248
    %5347 = vmatpush.msra.mxu0 %v5246
    %5348 = vmatpush.msra.mxu0 %v5244
    %5349 = vmatpush.msra.mxu0 %v5242
    %5350 = vmatpush.msra.mxu0 %v5240
    %5351 = vmatpush.msra.mxu0 %v5238
    %5352 = vmatmul.f32.gmra.mxu0 %v5141
    %v5353 = vpop.f32.mrf.mxu0
    %v5354 = vadd.f32 %v5334, %v5353
    %5355 = vdwg.mxu0
    %5356 = vmatpush.msra.mxu0 %v5173
    %5357 = vmatpush.msra.mxu0 %v5171
    %5358 = vmatpush.msra.mxu0 %v5169
    %5359 = vmatpush.msra.mxu0 %v5167
    %5360 = vmatpush.msra.mxu0 %v5165
    %5361 = vmatpush.msra.mxu0 %v5163
    %5362 = vmatpush.msra.mxu0 %v5161
    %5363 = vmatpush.msra.mxu0 %v5159
    %5364 = vmatpush.msra.mxu0 %v5157
    %5365 = vmatpush.msra.mxu0 %v5155
    %5366 = vmatpush.msra.mxu0 %v5153
    %5367 = vmatpush.msra.mxu0 %v5151
    %5368 = vmatpush.msra.mxu0 %v5149
    %5369 = vmatpush.msra.mxu0 %v5147
    %5370 = vmatpush.msra.mxu0 %v5145
    %5371 = vmatpush.msra.mxu0 %v5143
    %5372 = vmatmul.f32.gmra.mxu0 %v5138
    %v5373 = vpop.f32.mrf.mxu0
    %v5374 = vadd.f32 %v5273, %v5373
    %5375 = vdwg.mxu0
    %5376 = vmatpush.msra.mxu0 %v5205
    %5377 = vmatpush.msra.mxu0 %v5203
    %5378 = vmatpush.msra.mxu0 %v5201
    %5379 = vmatpush.msra.mxu0 %v5199
    %5380 = vmatpush.msra.mxu0 %v5197
    %5381 = vmatpush.msra.mxu0 %v5195
    %5382 = vmatpush.msra.mxu0 %v5193
    %5383 = vmatpush.msra.mxu0 %v5191
    %5384 = vmatpush.msra.mxu0 %v5189
    %5385 = vmatpush.msra.mxu0 %v5187
    %5386 = vmatpush.msra.mxu0 %v5185
    %5387 = vmatpush.msra.mxu0 %v5183
    %5388 = vmatpush.msra.mxu0 %v5181
    %5389 = vmatpush.msra.mxu0 %v5179
    %5390 = vmatpush.msra.mxu0 %v5177
    %5391 = vmatpush.msra.mxu0 %v5175
    %5392 = vmatmul.f32.gmra.mxu0 %v5139
    %v5393 = vpop.f32.mrf.mxu0
    %v5394 = vadd.f32 %v5374, %v5393
    %5395 = vdwg.mxu0
    %5396 = vmatpush.msra.mxu0 %v5237
    %5397 = vmatpush.msra.mxu0 %v5235
    %5398 = vmatpush.msra.mxu0 %v5233
    %5399 = vmatpush.msra.mxu0 %v5231
    %5400 = vmatpush.msra.mxu0 %v5229
    %5401 = vmatpush.msra.mxu0 %v5227
    %5402 = vmatpush.msra.mxu0 %v5225
    %5403 = vmatpush.msra.mxu0 %v5223
    %5404 = vmatpush.msra.mxu0 %v5221
    %5405 = vmatpush.msra.mxu0 %v5219
    %5406 = vmatpush.msra.mxu0 %v5217
    %5407 = vmatpush.msra.mxu0 %v5215
    %5408 = vmatpush.msra.mxu0 %v5213
    %5409 = vmatpush.msra.mxu0 %v5211
    %5410 = vmatpush.msra.mxu0 %v5209
    %5411 = vmatpush.msra.mxu0 %v5207
    %5412 = vmatmul.f32.gmra.mxu0 %v5140
    %v5413 = vpop.f32.mrf.mxu0
    %v5414 = vadd.f32 %v5394, %v5413
    %5415 = vdwg.mxu0
    %5416 = vmatpush.msra.mxu0 %v5269
    %5417 = vmatpush.msra.mxu0 %v5267
    %5418 = vmatpush.msra.mxu0 %v5265
    %5419 = vmatpush.msra.mxu0 %v5263
    %5420 = vmatpush.msra.mxu0 %v5261
    %5421 = vmatpush.msra.mxu0 %v5259
    %5422 = vmatpush.msra.mxu0 %v5257
    %5423 = vmatpush.msra.mxu0 %v5255
    %5424 = vmatpush.msra.mxu0 %v5253
    %5425 = vmatpush.msra.mxu0 %v5251
    %5426 = vmatpush.msra.mxu0 %v5249
    %5427 = vmatpush.msra.mxu0 %v5247
    %5428 = vmatpush.msra.mxu0 %v5245
    %5429 = vmatpush.msra.mxu0 %v5243
    %5430 = vmatpush.msra.mxu0 %v5241
    %5431 = vmatpush.msra.mxu0 %v5239
    %5432 = vmatmul.f32.gmra.mxu0 %v5141
    %v5433 = vpop.f32.mrf.mxu0
    %v5434 = vadd.f32 %v5414, %v5433
    %5435 = vdwg.mxu0
    %vm5436 = vcmp.ge.f32.partialorder %v5354, 0.0
    %vm5437 = vcmp.ge.f32.partialorder %v5434, 0.0
    %v5438 = vmul.f32 %v5354, 0.01
    %v5439 = vmul.f32 %v5434, 0.01
    %v5440 = vsel %vm5436, %v5354, %v5438
    %v5441 = vsel %vm5437, %v5434, %v5439
    %v5442 = vld [vmem:[#allocation28] sm:$0xff]
    %v5443 = vld [vmem:[#allocation28 + $0x8] sm:$0xff]
    %v5444 = vld [vmem:[#allocation28 + $0x10] sm:$0xff]
    %v5445 = vld [vmem:[#allocation28 + $0x18] sm:$0xff]
    %v5446 = vld [vmem:[#allocation28 + $0x20] sm:$0xff]
    %v5447 = vld [vmem:[#allocation28 + $0x28] sm:$0xff]
    %v5448 = vld [vmem:[#allocation28 + $0x30] sm:$0xff]
    %v5449 = vld [vmem:[#allocation28 + $0x38] sm:$0xff]
    %v5450 = vld [vmem:[#allocation28 + $0x40] sm:$0xff]
    %v5451 = vld [vmem:[#allocation28 + $0x48] sm:$0xff]
    %v5452 = vld [vmem:[#allocation28 + $0x50] sm:$0xff]
    %v5453 = vld [vmem:[#allocation28 + $0x58] sm:$0xff]
    %v5454 = vld [vmem:[#allocation28 + $0x60] sm:$0xff]
    %v5455 = vld [vmem:[#allocation28 + $0x68] sm:$0xff]
    %v5456 = vld [vmem:[#allocation28 + $0x70] sm:$0xff]
    %v5457 = vld [vmem:[#allocation28 + $0x78] sm:$0xff]
    %v5458 = vld [vmem:[#allocation28 + $0x80] sm:$0xff]
    %v5459 = vld [vmem:[#allocation28 + $0x88] sm:$0xff]
    %v5460 = vld [vmem:[#allocation28 + $0x90] sm:$0xff]
    %v5461 = vld [vmem:[#allocation28 + $0x98] sm:$0xff]
    %v5462 = vld [vmem:[#allocation28 + $0xa0] sm:$0xff]
    %v5463 = vld [vmem:[#allocation28 + $0xa8] sm:$0xff]
    %v5464 = vld [vmem:[#allocation28 + $0xb0] sm:$0xff]
    %v5465 = vld [vmem:[#allocation28 + $0xb8] sm:$0xff]
    %v5466 = vld [vmem:[#allocation28 + $0xc0] sm:$0xff]
    %v5467 = vld [vmem:[#allocation28 + $0xc8] sm:$0xff]
    %v5468 = vld [vmem:[#allocation28 + $0xd0] sm:$0xff]
    %v5469 = vld [vmem:[#allocation28 + $0xd8] sm:$0xff]
    %v5470 = vld [vmem:[#allocation28 + $0xe0] sm:$0xff]
    %v5471 = vld [vmem:[#allocation28 + $0xe8] sm:$0xff]
    %v5472 = vld [vmem:[#allocation28 + $0xf0] sm:$0xff]
    %v5473 = vld [vmem:[#allocation28 + $0xf8] sm:$0xff]
    %v5474 = vld [vmem:[#allocation29] sm:$0x1]
    %v5476 = vperm.slane %v5474, 0
    %5478 = vmatpush.msra.mxu0 %v5457
    %5479 = vmatpush.msra.mxu0 %v5456
    %5480 = vmatpush.msra.mxu0 %v5455
    %5481 = vmatpush.msra.mxu0 %v5454
    %5482 = vmatpush.msra.mxu0 %v5453
    %5483 = vmatpush.msra.mxu0 %v5452
    %5484 = vmatpush.msra.mxu0 %v5451
    %5485 = vmatpush.msra.mxu0 %v5450
    %5486 = vmatpush.msra.mxu0 %v5449
    %5487 = vmatpush.msra.mxu0 %v5448
    %5488 = vmatpush.msra.mxu0 %v5447
    %5489 = vmatpush.msra.mxu0 %v5446
    %5490 = vmatpush.msra.mxu0 %v5445
    %5491 = vmatpush.msra.mxu0 %v5444
    %5492 = vmatpush.msra.mxu0 %v5443
    %5493 = vmatpush.msra.mxu0 %v5442
    %5494 = vmatmul.f32.gmra.mxu0 %v5440
    %v5495 = vpop.f32.mrf.mxu0
    %v5496 = vadd.f32 %v5476, %v5495
    %5497 = vdwg.mxu0
    %5498 = vmatpush.msra.mxu0 %v5473
    %5499 = vmatpush.msra.mxu0 %v5472
    %5500 = vmatpush.msra.mxu0 %v5471
    %5501 = vmatpush.msra.mxu0 %v5470
    %5502 = vmatpush.msra.mxu0 %v5469
    %5503 = vmatpush.msra.mxu0 %v5468
    %5504 = vmatpush.msra.mxu0 %v5467
    %5505 = vmatpush.msra.mxu0 %v5466
    %5506 = vmatpush.msra.mxu0 %v5465
    %5507 = vmatpush.msra.mxu0 %v5464
    %5508 = vmatpush.msra.mxu0 %v5463
    %5509 = vmatpush.msra.mxu0 %v5462
    %5510 = vmatpush.msra.mxu0 %v5461
    %5511 = vmatpush.msra.mxu0 %v5460
    %5512 = vmatpush.msra.mxu0 %v5459
    %5513 = vmatpush.msra.mxu0 %v5458
    %5514 = vmatmul.f32.gmra.mxu0 %v5441
    %v5515 = vpop.f32.mrf.mxu0
    %v5516 = vadd.f32 %v5496, %v5515
    %5517 = vdwg.mxu0
    %vm5518 = vcmp.ge.f32.partialorder %v5516, 0.0
    %v5519 = vmul.f32 %v5516, 0.01
    %v5520 = vsel %vm5518, %v5516, %v5519
    %v5521 = vld [vmem:[%s19] sm:$0xff]
    %v5522 = vld [vmem:[%s19 + $0x8] sm:$0xff]
    %v5523 = vld [vmem:[%s19 + $0x10] sm:$0xff]
    %v5524 = vld [vmem:[%s19 + $0x18] sm:$0xff]
    %v5525 = vld [vmem:[%s19 + $0x20] sm:$0xff]
    %v5526 = vld [vmem:[%s19 + $0x28] sm:$0xff]
    %v5527 = vld [vmem:[%s19 + $0x30] sm:$0xff]
    %v5528 = vld [vmem:[%s19 + $0x38] sm:$0xff]
    %v5529 = vld [vmem:[%s19 + $0x40] sm:$0xff]
    %v5530 = vld [vmem:[%s19 + $0x48] sm:$0xff]
    %v5531 = vld [vmem:[%s19 + $0x50] sm:$0xff]
    %v5532 = vld [vmem:[%s19 + $0x58] sm:$0xff]
    %v5533 = vld [vmem:[%s19 + $0x60] sm:$0xff]
    %v5534 = vld [vmem:[%s19 + $0x68] sm:$0xff]
    %v5535 = vld [vmem:[%s19 + $0x70] sm:$0xff]
    %v5536 = vld [vmem:[%s19 + $0x78] sm:$0xff]
    %v5537 = vld [vmem:[#allocation2] sm:$0x1]
    %v5539 = vperm.slane %v5537, 0
    %5541 = vmatpush.msra.mxu0 %v5536
    %5542 = vmatpush.msra.mxu0 %v5535
    %5543 = vmatpush.msra.mxu0 %v5534
    %5544 = vmatpush.msra.mxu0 %v5533
    %5545 = vmatpush.msra.mxu0 %v5532
    %5546 = vmatpush.msra.mxu0 %v5531
    %5547 = vmatpush.msra.mxu0 %v5530
    %5548 = vmatpush.msra.mxu0 %v5529
    %5549 = vmatpush.msra.mxu0 %v5528
    %5550 = vmatpush.msra.mxu0 %v5527
    %5551 = vmatpush.msra.mxu0 %v5526
    %5552 = vmatpush.msra.mxu0 %v5525
    %5553 = vmatpush.msra.mxu0 %v5524
    %5554 = vmatpush.msra.mxu0 %v5523
    %5555 = vmatpush.msra.mxu0 %v5522
    %5556 = vmatpush.msra.mxu0 %v5521
    %5557 = vmatmul.f32.gmra.mxu0 %v5520
    %v5558 = vpop.f32.mrf.mxu0
    %v5559 = vadd.f32 %v5539, %v5558
    %5560 = vdwg.mxu0
    %vm5561 = vcmask 1024
    %5562 = vst.msk [vmem:[%s21] sm:$0x3] %vm5561, %v5559
    // Predicated region
    $region158: #{pitch_classifier_forward.1} parent=1 // pred_check
      _
    $region159: #{pitch_classifier_forward.1} parent=1 // pred_check_branch
      %5564 = sbr.rel (0) target = $region161
    $region160: #{pitch_classifier_forward.1} parent=1 // pred_region
      _
    $region161: #{pitch_classifier_forward.1} parent=1 // pred_fallthru
      _
    // Predicated region
    $region162: #{pitch_classifier_forward.1} parent=1 // pred_check
      _
    $region163: #{pitch_classifier_forward.1} parent=1 // pred_check_branch
      %5566 = sbr.rel (0) target = $region165
    $region164: #{pitch_classifier_forward.1} parent=1 // pred_region
      _
    $region165: #{pitch_classifier_forward.1} parent=1 // pred_fallthru
      _
    %5567 = vsyncpa [#allocation4], 1
    %5568 = vsyncpa [#allocation6], 1
    %5569 = vsyncpa [#allocation9], 1
    %5570 = vsyncpa [#allocation12], 1
    %5571 = vsyncpa [#allocation15], 1
    %5572 = vsyncpa [#allocation18], 1
    %5573 = vsyncpa [#allocation21], 1
    %5574 = vsyncpa [#allocation24], 1
    %5575 = vsyncpa [#allocation27], 1
    %5576 = vsyncpa [#allocation30], 1

</llo_original>
